<compile_context>
chip_gen: v5e
topology: v5e:2x2
jax: 0.10.0
libtpu: 0.0.40
codegen_flags: <defaults>
</compile_context>

<pallas_src>
import functools

import jax
import jax.numpy as jnp
from jax.experimental import pallas as pl
from jax.experimental.pallas import tpu as pltpu

_VMEM = pl.BlockSpec(memory_space=pltpu.MemorySpace.VMEM)

_W = 34                 # tile-id axis (conv width)
_HGT = 4                # conv height
_HW = _W * _HGT         # 136 valid spatial positions per batch element
_HW_PAD = 256           # lane-aligned padded positions per batch element
_HID = 64               # GRU hidden size (fixed by the module)
_GW = 256               # packed GRU gate width: r|z|n at stride 64, zero pad to 256
_VOCAB = 35             # embedding vocabulary


# --------------------------------- fused kernel ---------------------------------
def _fused_forward_kernel(
        # data
        mlp_ref, xl_ref, xc_ref, xr_ref, ml_ref, mr_ref, ids_ref, seloh_ref, mask_ref,
        # mlp branch weights
        mw1, mb1, mw2, mb2,
        # cnn branch weights
        c1w, c1b, c2w, c2b, cfw, cfb,
        # rnn branch weights
        ihtab, bih, whh, bhh, rfw, rfb,
        # fusion head weights
        fw1m, fw1c, fw1r, fb1, fw2, fb2, fw3, fb3,
        # output
        out_ref,
        *, n_seq, seq_len):
    f32 = jnp.float32
    dot = functools.partial(jnp.dot, preferred_element_type=f32)
    B = mlp_ref.shape[0]
    n, S = n_seq, seq_len
    nS = n * S
    H = _HID
    C2 = c2b.shape[0]

    # ---- MLP branch: Linear(dim_mlp,256) -> ReLU -> Linear(256,128) ----
    h = jnp.maximum(dot(mlp_ref[...], mw1[...]) + mb1[...], 0.0)
    mlp_out = dot(h, mw2[...]) + mb2[...]                            # (B, 128)

    # ---- CNN branch (channel-major: channels x flattened positions) ----
    w1 = c1w[...]
    b1 = c1b[...]
    # conv1 (1->8, 1x3, pad (0,1)) evaluated at w-1 / w / w+1 from the shifted
    # taps prepared in the wrapper; boundary masks emulate the zero padding of
    # relu(conv1) that conv2 would see.
    h1_l = jnp.maximum(dot(w1, xl_ref[...]) + b1, 0.0) * ml_ref[...]
    h1_c = jnp.maximum(dot(w1, xc_ref[...]) + b1, 0.0)
    h1_r = jnp.maximum(dot(w1, xr_ref[...]) + b1, 0.0) * mr_ref[...]
    # conv2 (8->16, 1x3) as three (16,8)@(8,B*256) matmuls
    h2 = dot(c2w[0], h1_l) + dot(c2w[1], h1_c) + dot(c2w[2], h1_r) + c2b[...]
    h2 = jnp.maximum(h2, 0.0)                                        # (16, B*HW_PAD)

    # Flatten + Linear(16*4*34, 128): per output-channel contraction against the
    # un-padded (16, 136, 128) weight.  Static sublane slice -> aligned lane
    # slices per batch -> sublane concat -> one (B,136)@(136,128) matmul per
    # channel.  No one-hot extraction matmuls, no rowsel assembly, and the
    # padded positions (lanes 136..255) are never read.
    cnn_out = jnp.zeros((B, 128), f32)
    for c in range(C2):
        row = h2[c:c + 1, :]                                         # (1, B*256)
        plane = jnp.concatenate(
            [row[:, b * _HW_PAD:(b + 1) * _HW_PAD] for b in range(B)], axis=0)
        cnn_out = cnn_out + dot(plane[:, 0:_HW], cfw[c])             # (B, 128)
    cnn_out = cnn_out + cfb[...]

    # ---- RNN branch ----
    # Embedding folded into the GRU input-gate table at init:
    #   gx = onehot(ids) @ (embed @ W_ih^T packed) + b_ih      (one matmul)
    ids = ids_ref[...]                                               # (B*nS, 1) int32
    onehot = (jax.lax.broadcasted_iota(jnp.int32, (B * nS, _VOCAB), 1) == ids).astype(f32)
    gx = dot(onehot, ihtab[...]) + bih[...]                          # (B*nS, 256)

    whh_v = whh[...]
    bhh_v = bhh[...]
    h_state = jnp.zeros((nS, H), f32)
    sel = []
    # Reference quirk: nn.GRU(batch_first=False) => recurrence over the *batch*
    # axis (B steps) with n*seq_len as the GRU batch.  Reproduced exactly.
    # TODO(synk): switch to lax.fori_loop(..., unroll=True) + VMEM scratch if B grows large.
    for t in range(B):
        gx_t = gx[t * nS:(t + 1) * nS, :]                            # (nS, 256)
        gh = dot(h_state, whh_v) + bhh_v                             # (nS, 256)
        # r and z share one 128-lane sigmoid; z block is brought down with a
        # single lane rotation (XLU) instead of an unaligned slice.
        rz = jax.nn.sigmoid(gx_t[:, 0:2 * H] + gh[:, 0:2 * H])       # (nS, 128)
        r = rz[:, 0:H]
        z = pltpu.roll(rz, H, 1)[:, 0:H]
        ng = jnp.tanh(gx_t[:, 2 * H:3 * H] + r * gh[:, 2 * H:3 * H])
        h_state = (1.0 - z) * ng + z * h_state                       # (nS, H)
        # torch.gather(dim=2) of the last valid step of every history sequence,
        # as ONE (n, nS) one-hot matmul per step (matrix precomputed in wrapper).
        sel.append(dot(seloh_ref[t], h_state))                       # (n, H)

    # rnn_fc: Linear(64*4, 128), split over the n history sequences; rows for
    # each sequence are assembled with a sublane concat (no rowsel chain).
    rfc_out = jnp.zeros((B, 128), f32)
    for j in range(n):
        rows_j = jnp.concatenate([sel[t][j:j + 1, :] for t in range(B)], axis=0)  # (B, H)
        rfc_out = rfc_out + dot(rows_j, rfw[j])
    rfc_out = rfc_out + rfb[...]

    # ---- fusion head + label mask ----
    fused = (dot(mlp_out, fw1m[...]) + dot(cnn_out, fw1c[...]) +
             dot(rfc_out, fw1r[...]) + fb1[...])
    hf = jnp.maximum(fused, 0.0)
    hf = jnp.maximum(dot(hf, fw2[...]) + fb2[...], 0.0)
    logits = dot(hf, fw3[...]) + fb3[...]                            # (B, num_class)
    out_ref[...] = jnp.where(mask_ref[...] != 0, logits, -1000000.0)


# ------------------------------ parameter construction ------------------------------
def _uniform(key, shape, bound):
    return jax.random.uniform(key, shape, jnp.float32, -bound, bound)


def _pack_gate_w(w_torch, H, width):
    """(3H, fan_in) torch [r; z; n] -> (fan_in, width), gate g at columns [g*H, (g+1)*H)."""
    out = jnp.zeros((w_torch.shape[1], width), jnp.float32)
    for g in range(3):
        out = out.at[:, g * H:(g + 1) * H].set(w_torch[g * H:(g + 1) * H, :].T)
    return out


def _pack_gate_b(b_torch, H, width):
    out = jnp.zeros((1, width), jnp.float32)
    for g in range(3):
        out = out.at[0, g * H:(g + 1) * H].set(b_torch[g * H:(g + 1) * H])
    return out


def init_params(key, num_class, dim_mlp, dim_rnn):
    ks = iter(jax.random.split(key, 32))
    p = {}
    H = _HID
    # nn.Embedding(35, dim_rnn)
    embed = jax.random.normal(next(ks), (_VOCAB, dim_rnn), jnp.float32)
    # mlp_branch
    b = 1.0 / dim_mlp ** 0.5
    p["mlp_w1"] = _uniform(next(ks), (dim_mlp, 256), b)
    p["mlp_b1"] = _uniform(next(ks), (1, 256), b)
    b = 1.0 / 256 ** 0.5
    p["mlp_w2"] = _uniform(next(ks), (256, 128), b)
    p["mlp_b2"] = _uniform(next(ks), (1, 128), b)
    # cnn_branch: Conv2d(1,8,(1,3)) / Conv2d(8,16,(1,3)) / Linear(16*4*34, 128)
    b = 1.0 / 3 ** 0.5
    p["conv1_w"] = _uniform(next(ks), (8, 1, 1, 3), b).reshape(8, 3)               # (oc, k)
    p["conv1_b"] = _uniform(next(ks), (8,), b).reshape(8, 1)
    b = 1.0 / 24 ** 0.5
    p["conv2_w"] = _uniform(next(ks), (16, 8, 1, 3), b).reshape(16, 8, 3).transpose(2, 0, 1)  # (k, oc, ic)
    p["conv2_b"] = _uniform(next(ks), (16,), b).reshape(16, 1)
    b = 1.0 / (16 * _HW) ** 0.5
    wfc = _uniform(next(ks), (128, 16 * _HW), b)               # torch col: c*136 + h*34 + w
    p["cnn_fc_w"] = wfc.reshape(128, 16, _HW).transpose(1, 2, 0)                   # (16, 136, 128) — NOT padded
    p["cnn_fc_b"] = _uniform(next(ks), (1, 128), b)
    # GRU(dim_rnn, 64), torch gate order [r; z; n], packed at stride H=64;
    # embedding folded into the input-gate table.
    b = 1.0 / H ** 0.5
    wih = _pack_gate_w(_uniform(next(ks), (3 * H, dim_rnn), b), H, _GW)            # (dim_rnn, 256)
    p["gru_ih_tab"] = jnp.dot(embed, wih)                                          # (35, 256)
    p["gru_whh"] = _pack_gate_w(_uniform(next(ks), (3 * H, H), b), H, _GW)         # (64, 256)
    p["gru_bih"] = _pack_gate_b(_uniform(next(ks), (3 * H,), b), H, _GW)
    p["gru_bhh"] = _pack_gate_b(_uniform(next(ks), (3 * H,), b), H, _GW)
    # rnn_fc: Linear(64*4, 128); torch col index = j*64 + hd
    b = 1.0 / (4 * H) ** 0.5
    p["rnn_fc_w"] = _uniform(next(ks), (128, 4 * H), b).reshape(128, 4, H).transpose(1, 2, 0)  # (4,64,128)
    p["rnn_fc_b"] = _uniform(next(ks), (1, 128), b)
    # fusion head; layer-1 weight pre-split into the mlp / cnn / rnn input blocks
    b = 1.0 / 384 ** 0.5
    p["fus_w1_mlp"] = _uniform(next(ks), (128, 256), b)
    p["fus_w1_cnn"] = _uniform(next(ks), (128, 256), b)
    p["fus_w1_rnn"] = _uniform(next(ks), (128, 256), b)
    p["fus_b1"] = _uniform(next(ks), (1, 256), b)
    b = 1.0 / 256 ** 0.5
    p["fus_w2"] = _uniform(next(ks), (256, 64), b)
    p["fus_b2"] = _uniform(next(ks), (1, 64), b)
    b = 1.0 / 64 ** 0.5
    p["fus_w3"] = _uniform(next(ks), (64, num_class), b)
    p["fus_b3"] = _uniform(next(ks), (1, num_class), b)
    return p


# -------------------------------------- forward --------------------------------------
def network_forward(p, mlp_features, cnn_features, rnn_features, rnn_seqs_len,
                    label_mask=None):
    B = mlp_features.shape[0]
    _, n, S = rnn_features.shape
    nS = n * S
    num_class = p["fus_b3"].shape[1]

    # conv input prep: 5 shifted (zero-padded) copies of the (B,4,34) board,
    # flattened onto the lane-aligned channel-major position axis used in-kernel.
    x = cnn_features.astype(jnp.float32)
    xp = jnp.pad(x, ((0, 0), (0, 0), (2, 2)))                                # (B,4,38)
    taps = jnp.stack([xp[:, :, j:j + _W] for j in range(5)], axis=0)         # (5,B,4,34)
    taps = taps.reshape(5, B, _HW)
    taps = jnp.pad(taps, ((0, 0), (0, 0), (0, _HW_PAD - _HW))).reshape(5, B * _HW_PAD)
    xl, xc, xr = taps[0:3], taps[1:4], taps[2:5]

    # masks emulating conv zero padding at the w==0 / w==33 board boundaries
    pos = jnp.arange(B * _HW_PAD, dtype=jnp.int32) % _HW_PAD
    wcol = pos % _W
    valid = pos < _HW
    ml = (valid & (wcol != 0)).astype(jnp.float32).reshape(1, -1)
    mr = (valid & (wcol != _W - 1)).astype(jnp.float32).reshape(1, -1)

    ids = rnn_features.astype(jnp.int32).reshape(B * nS, 1)

    # last-valid-step one-hot selection matrices (torch.gather with
    # clamp_min(len-1, 0); an empty sequence picks step 0, like the reference).
    idx = jnp.maximum(rnn_seqs_len.astype(jnp.int32) - 1, 0)                 # (B, n)
    tgt = jnp.arange(n, dtype=jnp.int32)[None, :] * S + idx                  # (B, n)
    sel_oh = (jnp.arange(nS, dtype=jnp.int32)[None, None, :]
              == tgt[:, :, None]).astype(jnp.float32)                        # (B, n, nS)

    if label_mask is None:
        mask = jnp.ones((B, num_class), jnp.int32)
    else:
        mask = label_mask.astype(jnp.int32)

    args = [
        mlp_features.astype(jnp.float32), xl, xc, xr, ml, mr, ids, sel_oh, mask,
        p["mlp_w1"], p["mlp_b1"], p["mlp_w2"], p["mlp_b2"],
        p["conv1_w"], p["conv1_b"], p["conv2_w"], p["conv2_b"], p["cnn_fc_w"], p["cnn_fc_b"],
        p["gru_ih_tab"], p["gru_bih"], p["gru_whh"], p["gru_bhh"],
        p["rnn_fc_w"], p["rnn_fc_b"],
        p["fus_w1_mlp"], p["fus_w1_cnn"], p["fus_w1_rnn"], p["fus_b1"],
        p["fus_w2"], p["fus_b2"], p["fus_w3"], p["fus_b3"],
    ]

    bytes_accessed = sum(int(a.size) * a.dtype.itemsize for a in args) + B * num_class * 4
    flops = 2 * (
        B * mlp_features.shape[1] * 256 + B * 256 * 128                     # mlp branch
        + 3 * (8 * 3 + 16 * 8) * B * _HW_PAD                                # convs
        + 16 * B * _HW * 128                                                # cnn fc
        + B * nS * _VOCAB * _GW + B * nS * _HID * _GW                       # GRU gates
        + B * n * nS * _HID + n * B * _HID * 128                            # gather + rnn_fc
        + B * (128 * 256 * 3 + 256 * 64 + 64 * num_class))                  # fusion head
    cost = pl.CostEstimate(flops=flops, transcendentals=B * nS * 3 * _HID,
                           bytes_accessed=bytes_accessed)

    return pl.pallas_call(
        functools.partial(_fused_forward_kernel, n_seq=n, seq_len=S),
        out_shape=jax.ShapeDtypeStruct((B, num_class), jnp.float32),
        in_specs=[_VMEM] * len(args),
        out_specs=_VMEM,
        cost_estimate=cost,
    )(*args)


if __name__ == "__main__":
    num_class, dim_mlp, dim_rnn = 48, 32, 16
    B, n, S = 2, 4, 8

    key = jax.random.PRNGKey(0)
    pkey, k1, k2, k3, k4 = jax.random.split(key, 5)
    params = init_params(pkey, num_class, dim_mlp, dim_rnn)

    mlp_features = jax.random.normal(k1, (B, dim_mlp), jnp.float32)
    cnn_features = (jax.random.uniform(k2, (B, 4, 34)) < 0.3).astype(jnp.float32)
    rnn_features = jax.random.randint(k3, (B, n, S), 0, 35, jnp.int32)
    rnn_seqs_len = jax.random.randint(k4, (B, n), 0, S + 1, jnp.int32)

    fwd = jax.jit(functools.partial(network_forward, params))
    out = jax.block_until_ready(fwd(mlp_features, cnn_features, rnn_features, rnn_seqs_len))
    assert out.shape == (B, num_class) and out.dtype == jnp.float32
    print("KERNEL_OK")
</pallas_src>

<mosaic_0001>
module attributes {stable_mosaic.version = 11 : i64} {
  func.func @_fused_forward_kernel(%arg0: memref<2x32xf32, #tpu.memory_space<vmem>>, %arg1: memref<3x512xf32, #tpu.memory_space<vmem>>, %arg2: memref<3x512xf32, #tpu.memory_space<vmem>>, %arg3: memref<3x512xf32, #tpu.memory_space<vmem>>, %arg4: memref<1x512xf32, #tpu.memory_space<vmem>>, %arg5: memref<1x512xf32, #tpu.memory_space<vmem>>, %arg6: memref<64x1xi32, #tpu.memory_space<vmem>>, %arg7: memref<2x4x32xf32, #tpu.memory_space<vmem>>, %arg8: memref<2x48xi32, #tpu.memory_space<vmem>>, %arg9: memref<32x256xf32, #tpu.memory_space<vmem>>, %arg10: memref<1x256xf32, #tpu.memory_space<vmem>>, %arg11: memref<256x128xf32, #tpu.memory_space<vmem>>, %arg12: memref<1x128xf32, #tpu.memory_space<vmem>>, %arg13: memref<8x3xf32, #tpu.memory_space<vmem>>, %arg14: memref<8x1xf32, #tpu.memory_space<vmem>>, %arg15: memref<3x16x8xf32, #tpu.memory_space<vmem>>, %arg16: memref<16x1xf32, #tpu.memory_space<vmem>>, %arg17: memref<16x136x128xf32, #tpu.memory_space<vmem>>, %arg18: memref<1x128xf32, #tpu.memory_space<vmem>>, %arg19: memref<35x256xf32, #tpu.memory_space<vmem>>, %arg20: memref<1x256xf32, #tpu.memory_space<vmem>>, %arg21: memref<64x256xf32, #tpu.memory_space<vmem>>, %arg22: memref<1x256xf32, #tpu.memory_space<vmem>>, %arg23: memref<4x64x128xf32, #tpu.memory_space<vmem>>, %arg24: memref<1x128xf32, #tpu.memory_space<vmem>>, %arg25: memref<128x256xf32, #tpu.memory_space<vmem>>, %arg26: memref<128x256xf32, #tpu.memory_space<vmem>>, %arg27: memref<128x256xf32, #tpu.memory_space<vmem>>, %arg28: memref<1x256xf32, #tpu.memory_space<vmem>>, %arg29: memref<256x64xf32, #tpu.memory_space<vmem>>, %arg30: memref<1x64xf32, #tpu.memory_space<vmem>>, %arg31: memref<64x48xf32, #tpu.memory_space<vmem>>, %arg32: memref<1x48xf32, #tpu.memory_space<vmem>>, %arg33: memref<2x48xf32, #tpu.memory_space<vmem>>) attributes {dimension_semantics = [], scalar_prefetch = 0 : i64, scratch_operands = 0 : i64, tpu.core_type = #tpu.core_type<tc>} {
    %c0 = arith.constant 0 : index
    %c0_0 = arith.constant 0 : index
    %0 = vector.load %arg0[%c0, %c0_0] : memref<2x32xf32, #tpu.memory_space<vmem>>, vector<2x32xf32>
    %c0_1 = arith.constant 0 : index
    %c0_2 = arith.constant 0 : index
    %1 = vector.load %arg9[%c0_1, %c0_2] : memref<32x256xf32, #tpu.memory_space<vmem>>, vector<32x256xf32>
    %cst = arith.constant dense<0.000000e+00> : vector<2x256xf32>
    %2 = tpu.matmul %0, %1, %cst {dimension_numbers = #tpu.dot_dimension_numbers<[1], [0], [0], [1], [0, 0, 1, 1], [], []>} : vector<2x32xf32>, vector<32x256xf32>, vector<2x256xf32> -> vector<2x256xf32>
    %c0_3 = arith.constant 0 : index
    %c0_4 = arith.constant 0 : index
    %3 = vector.load %arg10[%c0_3, %c0_4] : memref<1x256xf32, #tpu.memory_space<vmem>>, vector<1x256xf32>
    %4 = vector.broadcast %3 : vector<1x256xf32> to vector<2x256xf32>
    %5 = arith.addf %2, %4 : vector<2x256xf32>
    %cst_5 = arith.constant 0.000000e+00 : f32
    %6 = vector.broadcast %cst_5 : f32 to vector<2x256xf32>
    %7 = arith.maximumf %5, %6 : vector<2x256xf32>
    %c0_6 = arith.constant 0 : index
    %c0_7 = arith.constant 0 : index
    %8 = vector.load %arg11[%c0_6, %c0_7] : memref<256x128xf32, #tpu.memory_space<vmem>>, vector<256x128xf32>
    %cst_8 = arith.constant dense<0.000000e+00> : vector<2x128xf32>
    %9 = tpu.matmul %7, %8, %cst_8 {dimension_numbers = #tpu.dot_dimension_numbers<[1], [0], [0], [1], [0, 0, 1, 1], [], []>} : vector<2x256xf32>, vector<256x128xf32>, vector<2x128xf32> -> vector<2x128xf32>
    %c0_9 = arith.constant 0 : index
    %c0_10 = arith.constant 0 : index
    %10 = vector.load %arg12[%c0_9, %c0_10] : memref<1x128xf32, #tpu.memory_space<vmem>>, vector<1x128xf32>
    %11 = vector.broadcast %10 : vector<1x128xf32> to vector<2x128xf32>
    %12 = arith.addf %9, %11 : vector<2x128xf32>
    %c0_11 = arith.constant 0 : index
    %c0_12 = arith.constant 0 : index
    %13 = vector.load %arg13[%c0_11, %c0_12] : memref<8x3xf32, #tpu.memory_space<vmem>>, vector<8x3xf32>
    %c0_13 = arith.constant 0 : index
    %c0_14 = arith.constant 0 : index
    %14 = vector.load %arg14[%c0_13, %c0_14] : memref<8x1xf32, #tpu.memory_space<vmem>>, vector<8x1xf32>
    %c0_15 = arith.constant 0 : index
    %c0_16 = arith.constant 0 : index
    %15 = vector.load %arg1[%c0_15, %c0_16] : memref<3x512xf32, #tpu.memory_space<vmem>>, vector<3x512xf32>
    %cst_17 = arith.constant dense<0.000000e+00> : vector<8x512xf32>
    %16 = tpu.matmul %13, %15, %cst_17 {dimension_numbers = #tpu.dot_dimension_numbers<[1], [0], [0], [1], [0, 0, 1, 1], [], []>} : vector<8x3xf32>, vector<3x512xf32>, vector<8x512xf32> -> vector<8x512xf32>
    %17 = vector.broadcast %14 : vector<8x1xf32> to vector<8x512xf32>
    %18 = arith.addf %16, %17 : vector<8x512xf32>
    %cst_18 = arith.constant 0.000000e+00 : f32
    %19 = vector.broadcast %cst_18 : f32 to vector<8x512xf32>
    %20 = arith.maximumf %18, %19 : vector<8x512xf32>
    %c0_19 = arith.constant 0 : index
    %c0_20 = arith.constant 0 : index
    %21 = vector.load %arg4[%c0_19, %c0_20] : memref<1x512xf32, #tpu.memory_space<vmem>>, vector<1x512xf32>
    %22 = vector.broadcast %21 : vector<1x512xf32> to vector<8x512xf32>
    %23 = arith.mulf %20, %22 : vector<8x512xf32>
    %c0_21 = arith.constant 0 : index
    %c0_22 = arith.constant 0 : index
    %24 = vector.load %arg2[%c0_21, %c0_22] : memref<3x512xf32, #tpu.memory_space<vmem>>, vector<3x512xf32>
    %cst_23 = arith.constant dense<0.000000e+00> : vector<8x512xf32>
    %25 = tpu.matmul %13, %24, %cst_23 {dimension_numbers = #tpu.dot_dimension_numbers<[1], [0], [0], [1], [0, 0, 1, 1], [], []>} : vector<8x3xf32>, vector<3x512xf32>, vector<8x512xf32> -> vector<8x512xf32>
    %26 = vector.broadcast %14 : vector<8x1xf32> to vector<8x512xf32>
    %27 = arith.addf %25, %26 : vector<8x512xf32>
    %cst_24 = arith.constant 0.000000e+00 : f32
    %28 = vector.broadcast %cst_24 : f32 to vector<8x512xf32>
    %29 = arith.maximumf %27, %28 : vector<8x512xf32>
    %c0_25 = arith.constant 0 : index
    %c0_26 = arith.constant 0 : index
    %30 = vector.load %arg3[%c0_25, %c0_26] : memref<3x512xf32, #tpu.memory_space<vmem>>, vector<3x512xf32>
    %cst_27 = arith.constant dense<0.000000e+00> : vector<8x512xf32>
    %31 = tpu.matmul %13, %30, %cst_27 {dimension_numbers = #tpu.dot_dimension_numbers<[1], [0], [0], [1], [0, 0, 1, 1], [], []>} : vector<8x3xf32>, vector<3x512xf32>, vector<8x512xf32> -> vector<8x512xf32>
    %32 = vector.broadcast %14 : vector<8x1xf32> to vector<8x512xf32>
    %33 = arith.addf %31, %32 : vector<8x512xf32>
    %cst_28 = arith.constant 0.000000e+00 : f32
    %34 = vector.broadcast %cst_28 : f32 to vector<8x512xf32>
    %35 = arith.maximumf %33, %34 : vector<8x512xf32>
    %c0_29 = arith.constant 0 : index
    %c0_30 = arith.constant 0 : index
    %36 = vector.load %arg5[%c0_29, %c0_30] : memref<1x512xf32, #tpu.memory_space<vmem>>, vector<1x512xf32>
    %37 = vector.broadcast %36 : vector<1x512xf32> to vector<8x512xf32>
    %38 = arith.mulf %35, %37 : vector<8x512xf32>
    %c0_31 = arith.constant 0 : index
    %c0_32 = arith.constant 0 : index
    %c0_33 = arith.constant 0 : index
    %39 = vector.load %arg15[%c0_31, %c0_32, %c0_33] : memref<3x16x8xf32, #tpu.memory_space<vmem>>, vector<1x16x8xf32>
    %40 = vector.shape_cast %39 : vector<1x16x8xf32> to vector<16x8xf32>
    %cst_34 = arith.constant dense<0.000000e+00> : vector<16x512xf32>
    %41 = tpu.matmul %40, %23, %cst_34 {dimension_numbers = #tpu.dot_dimension_numbers<[1], [0], [0], [1], [0, 0, 1, 1], [], []>} : vector<16x8xf32>, vector<8x512xf32>, vector<16x512xf32> -> vector<16x512xf32>
    %c1 = arith.constant 1 : index
    %c0_35 = arith.constant 0 : index
    %c0_36 = arith.constant 0 : index
    %42 = vector.load %arg15[%c1, %c0_35, %c0_36] : memref<3x16x8xf32, #tpu.memory_space<vmem>>, vector<1x16x8xf32>
    %43 = vector.shape_cast %42 : vector<1x16x8xf32> to vector<16x8xf32>
    %cst_37 = arith.constant dense<0.000000e+00> : vector<16x512xf32>
    %44 = tpu.matmul %43, %29, %cst_37 {dimension_numbers = #tpu.dot_dimension_numbers<[1], [0], [0], [1], [0, 0, 1, 1], [], []>} : vector<16x8xf32>, vector<8x512xf32>, vector<16x512xf32> -> vector<16x512xf32>
    %45 = arith.addf %41, %44 : vector<16x512xf32>
    %c2 = arith.constant 2 : index
    %c0_38 = arith.constant 0 : index
    %c0_39 = arith.constant 0 : index
    %46 = vector.load %arg15[%c2, %c0_38, %c0_39] : memref<3x16x8xf32, #tpu.memory_space<vmem>>, vector<1x16x8xf32>
    %47 = vector.shape_cast %46 : vector<1x16x8xf32> to vector<16x8xf32>
    %cst_40 = arith.constant dense<0.000000e+00> : vector<16x512xf32>
    %48 = tpu.matmul %47, %38, %cst_40 {dimension_numbers = #tpu.dot_dimension_numbers<[1], [0], [0], [1], [0, 0, 1, 1], [], []>} : vector<16x8xf32>, vector<8x512xf32>, vector<16x512xf32> -> vector<16x512xf32>
    %49 = arith.addf %45, %48 : vector<16x512xf32>
    %c0_41 = arith.constant 0 : index
    %c0_42 = arith.constant 0 : index
    %50 = vector.load %arg16[%c0_41, %c0_42] : memref<16x1xf32, #tpu.memory_space<vmem>>, vector<16x1xf32>
    %51 = vector.broadcast %50 : vector<16x1xf32> to vector<16x512xf32>
    %52 = arith.addf %49, %51 : vector<16x512xf32>
    %cst_43 = arith.constant 0.000000e+00 : f32
    %53 = vector.broadcast %cst_43 : f32 to vector<16x512xf32>
    %54 = arith.maximumf %52, %53 : vector<16x512xf32>
    %cst_44 = arith.constant 0.000000e+00 : f32
    %55 = vector.broadcast %cst_44 : f32 to vector<2x128xf32>
    %56 = vector.extract_strided_slice %54 {offsets = [0, 0], sizes = [1, 512], strides = [1, 1]} : vector<16x512xf32> to vector<1x512xf32>
    %57 = vector.extract_strided_slice %56 {offsets = [0, 0], sizes = [1, 256], strides = [1, 1]} : vector<1x512xf32> to vector<1x256xf32>
    %58 = vector.extract_strided_slice %56 {offsets = [0, 256], sizes = [1, 256], strides = [1, 1]} : vector<1x512xf32> to vector<1x256xf32>
    %59 = tpu.concatenate %57, %58 in 0 : vector<1x256xf32>, vector<1x256xf32> -> vector<2x256xf32>
    %60 = vector.extract_strided_slice %59 {offsets = [0, 0], sizes = [2, 136], strides = [1, 1]} : vector<2x256xf32> to vector<2x136xf32>
    %c0_45 = arith.constant 0 : index
    %c0_46 = arith.constant 0 : index
    %c0_47 = arith.constant 0 : index
    %61 = vector.load %arg17[%c0_45, %c0_46, %c0_47] : memref<16x136x128xf32, #tpu.memory_space<vmem>>, vector<1x136x128xf32>
    %62 = vector.shape_cast %61 : vector<1x136x128xf32> to vector<136x128xf32>
    %cst_48 = arith.constant dense<0.000000e+00> : vector<2x128xf32>
    %63 = tpu.matmul %60, %62, %cst_48 {dimension_numbers = #tpu.dot_dimension_numbers<[1], [0], [0], [1], [0, 0, 1, 1], [], []>} : vector<2x136xf32>, vector<136x128xf32>, vector<2x128xf32> -> vector<2x128xf32>
    %64 = arith.addf %55, %63 : vector<2x128xf32>
    %65 = vector.extract_strided_slice %54 {offsets = [1, 0], sizes = [1, 512], strides = [1, 1]} : vector<16x512xf32> to vector<1x512xf32>
    %66 = vector.extract_strided_slice %65 {offsets = [0, 0], sizes = [1, 256], strides = [1, 1]} : vector<1x512xf32> to vector<1x256xf32>
    %67 = vector.extract_strided_slice %65 {offsets = [0, 256], sizes = [1, 256], strides = [1, 1]} : vector<1x512xf32> to vector<1x256xf32>
    %68 = tpu.concatenate %66, %67 in 0 : vector<1x256xf32>, vector<1x256xf32> -> vector<2x256xf32>
    %69 = vector.extract_strided_slice %68 {offsets = [0, 0], sizes = [2, 136], strides = [1, 1]} : vector<2x256xf32> to vector<2x136xf32>
    %c1_49 = arith.constant 1 : index
    %c0_50 = arith.constant 0 : index
    %c0_51 = arith.constant 0 : index
    %70 = vector.load %arg17[%c1_49, %c0_50, %c0_51] : memref<16x136x128xf32, #tpu.memory_space<vmem>>, vector<1x136x128xf32>
    %71 = vector.shape_cast %70 : vector<1x136x128xf32> to vector<136x128xf32>
    %cst_52 = arith.constant dense<0.000000e+00> : vector<2x128xf32>
    %72 = tpu.matmul %69, %71, %cst_52 {dimension_numbers = #tpu.dot_dimension_numbers<[1], [0], [0], [1], [0, 0, 1, 1], [], []>} : vector<2x136xf32>, vector<136x128xf32>, vector<2x128xf32> -> vector<2x128xf32>
    %73 = arith.addf %64, %72 : vector<2x128xf32>
    %74 = vector.extract_strided_slice %54 {offsets = [2, 0], sizes = [1, 512], strides = [1, 1]} : vector<16x512xf32> to vector<1x512xf32>
    %75 = vector.extract_strided_slice %74 {offsets = [0, 0], sizes = [1, 256], strides = [1, 1]} : vector<1x512xf32> to vector<1x256xf32>
    %76 = vector.extract_strided_slice %74 {offsets = [0, 256], sizes = [1, 256], strides = [1, 1]} : vector<1x512xf32> to vector<1x256xf32>
    %77 = tpu.concatenate %75, %76 in 0 : vector<1x256xf32>, vector<1x256xf32> -> vector<2x256xf32>
    %78 = vector.extract_strided_slice %77 {offsets = [0, 0], sizes = [2, 136], strides = [1, 1]} : vector<2x256xf32> to vector<2x136xf32>
    %c2_53 = arith.constant 2 : index
    %c0_54 = arith.constant 0 : index
    %c0_55 = arith.constant 0 : index
    %79 = vector.load %arg17[%c2_53, %c0_54, %c0_55] : memref<16x136x128xf32, #tpu.memory_space<vmem>>, vector<1x136x128xf32>
    %80 = vector.shape_cast %79 : vector<1x136x128xf32> to vector<136x128xf32>
    %cst_56 = arith.constant dense<0.000000e+00> : vector<2x128xf32>
    %81 = tpu.matmul %78, %80, %cst_56 {dimension_numbers = #tpu.dot_dimension_numbers<[1], [0], [0], [1], [0, 0, 1, 1], [], []>} : vector<2x136xf32>, vector<136x128xf32>, vector<2x128xf32> -> vector<2x128xf32>
    %82 = arith.addf %73, %81 : vector<2x128xf32>
    %83 = vector.extract_strided_slice %54 {offsets = [3, 0], sizes = [1, 512], strides = [1, 1]} : vector<16x512xf32> to vector<1x512xf32>
    %84 = vector.extract_strided_slice %83 {offsets = [0, 0], sizes = [1, 256], strides = [1, 1]} : vector<1x512xf32> to vector<1x256xf32>
    %85 = vector.extract_strided_slice %83 {offsets = [0, 256], sizes = [1, 256], strides = [1, 1]} : vector<1x512xf32> to vector<1x256xf32>
    %86 = tpu.concatenate %84, %85 in 0 : vector<1x256xf32>, vector<1x256xf32> -> vector<2x256xf32>
    %87 = vector.extract_strided_slice %86 {offsets = [0, 0], sizes = [2, 136], strides = [1, 1]} : vector<2x256xf32> to vector<2x136xf32>
    %c3 = arith.constant 3 : index
    %c0_57 = arith.constant 0 : index
    %c0_58 = arith.constant 0 : index
    %88 = vector.load %arg17[%c3, %c0_57, %c0_58] : memref<16x136x128xf32, #tpu.memory_space<vmem>>, vector<1x136x128xf32>
    %89 = vector.shape_cast %88 : vector<1x136x128xf32> to vector<136x128xf32>
    %cst_59 = arith.constant dense<0.000000e+00> : vector<2x128xf32>
    %90 = tpu.matmul %87, %89, %cst_59 {dimension_numbers = #tpu.dot_dimension_numbers<[1], [0], [0], [1], [0, 0, 1, 1], [], []>} : vector<2x136xf32>, vector<136x128xf32>, vector<2x128xf32> -> vector<2x128xf32>
    %91 = arith.addf %82, %90 : vector<2x128xf32>
    %92 = vector.extract_strided_slice %54 {offsets = [4, 0], sizes = [1, 512], strides = [1, 1]} : vector<16x512xf32> to vector<1x512xf32>
    %93 = vector.extract_strided_slice %92 {offsets = [0, 0], sizes = [1, 256], strides = [1, 1]} : vector<1x512xf32> to vector<1x256xf32>
    %94 = vector.extract_strided_slice %92 {offsets = [0, 256], sizes = [1, 256], strides = [1, 1]} : vector<1x512xf32> to vector<1x256xf32>
    %95 = tpu.concatenate %93, %94 in 0 : vector<1x256xf32>, vector<1x256xf32> -> vector<2x256xf32>
    %96 = vector.extract_strided_slice %95 {offsets = [0, 0], sizes = [2, 136], strides = [1, 1]} : vector<2x256xf32> to vector<2x136xf32>
    %c4 = arith.constant 4 : index
    %c0_60 = arith.constant 0 : index
    %c0_61 = arith.constant 0 : index
    %97 = vector.load %arg17[%c4, %c0_60, %c0_61] : memref<16x136x128xf32, #tpu.memory_space<vmem>>, vector<1x136x128xf32>
    %98 = vector.shape_cast %97 : vector<1x136x128xf32> to vector<136x128xf32>
    %cst_62 = arith.constant dense<0.000000e+00> : vector<2x128xf32>
    %99 = tpu.matmul %96, %98, %cst_62 {dimension_numbers = #tpu.dot_dimension_numbers<[1], [0], [0], [1], [0, 0, 1, 1], [], []>} : vector<2x136xf32>, vector<136x128xf32>, vector<2x128xf32> -> vector<2x128xf32>
    %100 = arith.addf %91, %99 : vector<2x128xf32>
    %101 = vector.extract_strided_slice %54 {offsets = [5, 0], sizes = [1, 512], strides = [1, 1]} : vector<16x512xf32> to vector<1x512xf32>
    %102 = vector.extract_strided_slice %101 {offsets = [0, 0], sizes = [1, 256], strides = [1, 1]} : vector<1x512xf32> to vector<1x256xf32>
    %103 = vector.extract_strided_slice %101 {offsets = [0, 256], sizes = [1, 256], strides = [1, 1]} : vector<1x512xf32> to vector<1x256xf32>
    %104 = tpu.concatenate %102, %103 in 0 : vector<1x256xf32>, vector<1x256xf32> -> vector<2x256xf32>
    %105 = vector.extract_strided_slice %104 {offsets = [0, 0], sizes = [2, 136], strides = [1, 1]} : vector<2x256xf32> to vector<2x136xf32>
    %c5 = arith.constant 5 : index
    %c0_63 = arith.constant 0 : index
    %c0_64 = arith.constant 0 : index
    %106 = vector.load %arg17[%c5, %c0_63, %c0_64] : memref<16x136x128xf32, #tpu.memory_space<vmem>>, vector<1x136x128xf32>
    %107 = vector.shape_cast %106 : vector<1x136x128xf32> to vector<136x128xf32>
    %cst_65 = arith.constant dense<0.000000e+00> : vector<2x128xf32>
    %108 = tpu.matmul %105, %107, %cst_65 {dimension_numbers = #tpu.dot_dimension_numbers<[1], [0], [0], [1], [0, 0, 1, 1], [], []>} : vector<2x136xf32>, vector<136x128xf32>, vector<2x128xf32> -> vector<2x128xf32>
    %109 = arith.addf %100, %108 : vector<2x128xf32>
    %110 = vector.extract_strided_slice %54 {offsets = [6, 0], sizes = [1, 512], strides = [1, 1]} : vector<16x512xf32> to vector<1x512xf32>
    %111 = vector.extract_strided_slice %110 {offsets = [0, 0], sizes = [1, 256], strides = [1, 1]} : vector<1x512xf32> to vector<1x256xf32>
    %112 = vector.extract_strided_slice %110 {offsets = [0, 256], sizes = [1, 256], strides = [1, 1]} : vector<1x512xf32> to vector<1x256xf32>
    %113 = tpu.concatenate %111, %112 in 0 : vector<1x256xf32>, vector<1x256xf32> -> vector<2x256xf32>
    %114 = vector.extract_strided_slice %113 {offsets = [0, 0], sizes = [2, 136], strides = [1, 1]} : vector<2x256xf32> to vector<2x136xf32>
    %c6 = arith.constant 6 : index
    %c0_66 = arith.constant 0 : index
    %c0_67 = arith.constant 0 : index
    %115 = vector.load %arg17[%c6, %c0_66, %c0_67] : memref<16x136x128xf32, #tpu.memory_space<vmem>>, vector<1x136x128xf32>
    %116 = vector.shape_cast %115 : vector<1x136x128xf32> to vector<136x128xf32>
    %cst_68 = arith.constant dense<0.000000e+00> : vector<2x128xf32>
    %117 = tpu.matmul %114, %116, %cst_68 {dimension_numbers = #tpu.dot_dimension_numbers<[1], [0], [0], [1], [0, 0, 1, 1], [], []>} : vector<2x136xf32>, vector<136x128xf32>, vector<2x128xf32> -> vector<2x128xf32>
    %118 = arith.addf %109, %117 : vector<2x128xf32>
    %119 = vector.extract_strided_slice %54 {offsets = [7, 0], sizes = [1, 512], strides = [1, 1]} : vector<16x512xf32> to vector<1x512xf32>
    %120 = vector.extract_strided_slice %119 {offsets = [0, 0], sizes = [1, 256], strides = [1, 1]} : vector<1x512xf32> to vector<1x256xf32>
    %121 = vector.extract_strided_slice %119 {offsets = [0, 256], sizes = [1, 256], strides = [1, 1]} : vector<1x512xf32> to vector<1x256xf32>
    %122 = tpu.concatenate %120, %121 in 0 : vector<1x256xf32>, vector<1x256xf32> -> vector<2x256xf32>
    %123 = vector.extract_strided_slice %122 {offsets = [0, 0], sizes = [2, 136], strides = [1, 1]} : vector<2x256xf32> to vector<2x136xf32>
    %c7 = arith.constant 7 : index
    %c0_69 = arith.constant 0 : index
    %c0_70 = arith.constant 0 : index
    %124 = vector.load %arg17[%c7, %c0_69, %c0_70] : memref<16x136x128xf32, #tpu.memory_space<vmem>>, vector<1x136x128xf32>
    %125 = vector.shape_cast %124 : vector<1x136x128xf32> to vector<136x128xf32>
    %cst_71 = arith.constant dense<0.000000e+00> : vector<2x128xf32>
    %126 = tpu.matmul %123, %125, %cst_71 {dimension_numbers = #tpu.dot_dimension_numbers<[1], [0], [0], [1], [0, 0, 1, 1], [], []>} : vector<2x136xf32>, vector<136x128xf32>, vector<2x128xf32> -> vector<2x128xf32>
    %127 = arith.addf %118, %126 : vector<2x128xf32>
    %128 = vector.extract_strided_slice %54 {offsets = [8, 0], sizes = [1, 512], strides = [1, 1]} : vector<16x512xf32> to vector<1x512xf32>
    %129 = vector.extract_strided_slice %128 {offsets = [0, 0], sizes = [1, 256], strides = [1, 1]} : vector<1x512xf32> to vector<1x256xf32>
    %130 = vector.extract_strided_slice %128 {offsets = [0, 256], sizes = [1, 256], strides = [1, 1]} : vector<1x512xf32> to vector<1x256xf32>
    %131 = tpu.concatenate %129, %130 in 0 : vector<1x256xf32>, vector<1x256xf32> -> vector<2x256xf32>
    %132 = vector.extract_strided_slice %131 {offsets = [0, 0], sizes = [2, 136], strides = [1, 1]} : vector<2x256xf32> to vector<2x136xf32>
    %c8 = arith.constant 8 : index
    %c0_72 = arith.constant 0 : index
    %c0_73 = arith.constant 0 : index
    %133 = vector.load %arg17[%c8, %c0_72, %c0_73] : memref<16x136x128xf32, #tpu.memory_space<vmem>>, vector<1x136x128xf32>
    %134 = vector.shape_cast %133 : vector<1x136x128xf32> to vector<136x128xf32>
    %cst_74 = arith.constant dense<0.000000e+00> : vector<2x128xf32>
    %135 = tpu.matmul %132, %134, %cst_74 {dimension_numbers = #tpu.dot_dimension_numbers<[1], [0], [0], [1], [0, 0, 1, 1], [], []>} : vector<2x136xf32>, vector<136x128xf32>, vector<2x128xf32> -> vector<2x128xf32>
    %136 = arith.addf %127, %135 : vector<2x128xf32>
    %137 = vector.extract_strided_slice %54 {offsets = [9, 0], sizes = [1, 512], strides = [1, 1]} : vector<16x512xf32> to vector<1x512xf32>
    %138 = vector.extract_strided_slice %137 {offsets = [0, 0], sizes = [1, 256], strides = [1, 1]} : vector<1x512xf32> to vector<1x256xf32>
    %139 = vector.extract_strided_slice %137 {offsets = [0, 256], sizes = [1, 256], strides = [1, 1]} : vector<1x512xf32> to vector<1x256xf32>
    %140 = tpu.concatenate %138, %139 in 0 : vector<1x256xf32>, vector<1x256xf32> -> vector<2x256xf32>
    %141 = vector.extract_strided_slice %140 {offsets = [0, 0], sizes = [2, 136], strides = [1, 1]} : vector<2x256xf32> to vector<2x136xf32>
    %c9 = arith.constant 9 : index
    %c0_75 = arith.constant 0 : index
    %c0_76 = arith.constant 0 : index
    %142 = vector.load %arg17[%c9, %c0_75, %c0_76] : memref<16x136x128xf32, #tpu.memory_space<vmem>>, vector<1x136x128xf32>
    %143 = vector.shape_cast %142 : vector<1x136x128xf32> to vector<136x128xf32>
    %cst_77 = arith.constant dense<0.000000e+00> : vector<2x128xf32>
    %144 = tpu.matmul %141, %143, %cst_77 {dimension_numbers = #tpu.dot_dimension_numbers<[1], [0], [0], [1], [0, 0, 1, 1], [], []>} : vector<2x136xf32>, vector<136x128xf32>, vector<2x128xf32> -> vector<2x128xf32>
    %145 = arith.addf %136, %144 : vector<2x128xf32>
    %146 = vector.extract_strided_slice %54 {offsets = [10, 0], sizes = [1, 512], strides = [1, 1]} : vector<16x512xf32> to vector<1x512xf32>
    %147 = vector.extract_strided_slice %146 {offsets = [0, 0], sizes = [1, 256], strides = [1, 1]} : vector<1x512xf32> to vector<1x256xf32>
    %148 = vector.extract_strided_slice %146 {offsets = [0, 256], sizes = [1, 256], strides = [1, 1]} : vector<1x512xf32> to vector<1x256xf32>
    %149 = tpu.concatenate %147, %148 in 0 : vector<1x256xf32>, vector<1x256xf32> -> vector<2x256xf32>
    %150 = vector.extract_strided_slice %149 {offsets = [0, 0], sizes = [2, 136], strides = [1, 1]} : vector<2x256xf32> to vector<2x136xf32>
    %c10 = arith.constant 10 : index
    %c0_78 = arith.constant 0 : index
    %c0_79 = arith.constant 0 : index
    %151 = vector.load %arg17[%c10, %c0_78, %c0_79] : memref<16x136x128xf32, #tpu.memory_space<vmem>>, vector<1x136x128xf32>
    %152 = vector.shape_cast %151 : vector<1x136x128xf32> to vector<136x128xf32>
    %cst_80 = arith.constant dense<0.000000e+00> : vector<2x128xf32>
    %153 = tpu.matmul %150, %152, %cst_80 {dimension_numbers = #tpu.dot_dimension_numbers<[1], [0], [0], [1], [0, 0, 1, 1], [], []>} : vector<2x136xf32>, vector<136x128xf32>, vector<2x128xf32> -> vector<2x128xf32>
    %154 = arith.addf %145, %153 : vector<2x128xf32>
    %155 = vector.extract_strided_slice %54 {offsets = [11, 0], sizes = [1, 512], strides = [1, 1]} : vector<16x512xf32> to vector<1x512xf32>
    %156 = vector.extract_strided_slice %155 {offsets = [0, 0], sizes = [1, 256], strides = [1, 1]} : vector<1x512xf32> to vector<1x256xf32>
    %157 = vector.extract_strided_slice %155 {offsets = [0, 256], sizes = [1, 256], strides = [1, 1]} : vector<1x512xf32> to vector<1x256xf32>
    %158 = tpu.concatenate %156, %157 in 0 : vector<1x256xf32>, vector<1x256xf32> -> vector<2x256xf32>
    %159 = vector.extract_strided_slice %158 {offsets = [0, 0], sizes = [2, 136], strides = [1, 1]} : vector<2x256xf32> to vector<2x136xf32>
    %c11 = arith.constant 11 : index
    %c0_81 = arith.constant 0 : index
    %c0_82 = arith.constant 0 : index
    %160 = vector.load %arg17[%c11, %c0_81, %c0_82] : memref<16x136x128xf32, #tpu.memory_space<vmem>>, vector<1x136x128xf32>
    %161 = vector.shape_cast %160 : vector<1x136x128xf32> to vector<136x128xf32>
    %cst_83 = arith.constant dense<0.000000e+00> : vector<2x128xf32>
    %162 = tpu.matmul %159, %161, %cst_83 {dimension_numbers = #tpu.dot_dimension_numbers<[1], [0], [0], [1], [0, 0, 1, 1], [], []>} : vector<2x136xf32>, vector<136x128xf32>, vector<2x128xf32> -> vector<2x128xf32>
    %163 = arith.addf %154, %162 : vector<2x128xf32>
    %164 = vector.extract_strided_slice %54 {offsets = [12, 0], sizes = [1, 512], strides = [1, 1]} : vector<16x512xf32> to vector<1x512xf32>
    %165 = vector.extract_strided_slice %164 {offsets = [0, 0], sizes = [1, 256], strides = [1, 1]} : vector<1x512xf32> to vector<1x256xf32>
    %166 = vector.extract_strided_slice %164 {offsets = [0, 256], sizes = [1, 256], strides = [1, 1]} : vector<1x512xf32> to vector<1x256xf32>
    %167 = tpu.concatenate %165, %166 in 0 : vector<1x256xf32>, vector<1x256xf32> -> vector<2x256xf32>
    %168 = vector.extract_strided_slice %167 {offsets = [0, 0], sizes = [2, 136], strides = [1, 1]} : vector<2x256xf32> to vector<2x136xf32>
    %c12 = arith.constant 12 : index
    %c0_84 = arith.constant 0 : index
    %c0_85 = arith.constant 0 : index
    %169 = vector.load %arg17[%c12, %c0_84, %c0_85] : memref<16x136x128xf32, #tpu.memory_space<vmem>>, vector<1x136x128xf32>
    %170 = vector.shape_cast %169 : vector<1x136x128xf32> to vector<136x128xf32>
    %cst_86 = arith.constant dense<0.000000e+00> : vector<2x128xf32>
    %171 = tpu.matmul %168, %170, %cst_86 {dimension_numbers = #tpu.dot_dimension_numbers<[1], [0], [0], [1], [0, 0, 1, 1], [], []>} : vector<2x136xf32>, vector<136x128xf32>, vector<2x128xf32> -> vector<2x128xf32>
    %172 = arith.addf %163, %171 : vector<2x128xf32>
    %173 = vector.extract_strided_slice %54 {offsets = [13, 0], sizes = [1, 512], strides = [1, 1]} : vector<16x512xf32> to vector<1x512xf32>
    %174 = vector.extract_strided_slice %173 {offsets = [0, 0], sizes = [1, 256], strides = [1, 1]} : vector<1x512xf32> to vector<1x256xf32>
    %175 = vector.extract_strided_slice %173 {offsets = [0, 256], sizes = [1, 256], strides = [1, 1]} : vector<1x512xf32> to vector<1x256xf32>
    %176 = tpu.concatenate %174, %175 in 0 : vector<1x256xf32>, vector<1x256xf32> -> vector<2x256xf32>
    %177 = vector.extract_strided_slice %176 {offsets = [0, 0], sizes = [2, 136], strides = [1, 1]} : vector<2x256xf32> to vector<2x136xf32>
    %c13 = arith.constant 13 : index
    %c0_87 = arith.constant 0 : index
    %c0_88 = arith.constant 0 : index
    %178 = vector.load %arg17[%c13, %c0_87, %c0_88] : memref<16x136x128xf32, #tpu.memory_space<vmem>>, vector<1x136x128xf32>
    %179 = vector.shape_cast %178 : vector<1x136x128xf32> to vector<136x128xf32>
    %cst_89 = arith.constant dense<0.000000e+00> : vector<2x128xf32>
    %180 = tpu.matmul %177, %179, %cst_89 {dimension_numbers = #tpu.dot_dimension_numbers<[1], [0], [0], [1], [0, 0, 1, 1], [], []>} : vector<2x136xf32>, vector<136x128xf32>, vector<2x128xf32> -> vector<2x128xf32>
    %181 = arith.addf %172, %180 : vector<2x128xf32>
    %182 = vector.extract_strided_slice %54 {offsets = [14, 0], sizes = [1, 512], strides = [1, 1]} : vector<16x512xf32> to vector<1x512xf32>
    %183 = vector.extract_strided_slice %182 {offsets = [0, 0], sizes = [1, 256], strides = [1, 1]} : vector<1x512xf32> to vector<1x256xf32>
    %184 = vector.extract_strided_slice %182 {offsets = [0, 256], sizes = [1, 256], strides = [1, 1]} : vector<1x512xf32> to vector<1x256xf32>
    %185 = tpu.concatenate %183, %184 in 0 : vector<1x256xf32>, vector<1x256xf32> -> vector<2x256xf32>
    %186 = vector.extract_strided_slice %185 {offsets = [0, 0], sizes = [2, 136], strides = [1, 1]} : vector<2x256xf32> to vector<2x136xf32>
    %c14 = arith.constant 14 : index
    %c0_90 = arith.constant 0 : index
    %c0_91 = arith.constant 0 : index
    %187 = vector.load %arg17[%c14, %c0_90, %c0_91] : memref<16x136x128xf32, #tpu.memory_space<vmem>>, vector<1x136x128xf32>
    %188 = vector.shape_cast %187 : vector<1x136x128xf32> to vector<136x128xf32>
    %cst_92 = arith.constant dense<0.000000e+00> : vector<2x128xf32>
    %189 = tpu.matmul %186, %188, %cst_92 {dimension_numbers = #tpu.dot_dimension_numbers<[1], [0], [0], [1], [0, 0, 1, 1], [], []>} : vector<2x136xf32>, vector<136x128xf32>, vector<2x128xf32> -> vector<2x128xf32>
    %190 = arith.addf %181, %189 : vector<2x128xf32>
    %191 = vector.extract_strided_slice %54 {offsets = [15, 0], sizes = [1, 512], strides = [1, 1]} : vector<16x512xf32> to vector<1x512xf32>
    %192 = vector.extract_strided_slice %191 {offsets = [0, 0], sizes = [1, 256], strides = [1, 1]} : vector<1x512xf32> to vector<1x256xf32>
    %193 = vector.extract_strided_slice %191 {offsets = [0, 256], sizes = [1, 256], strides = [1, 1]} : vector<1x512xf32> to vector<1x256xf32>
    %194 = tpu.concatenate %192, %193 in 0 : vector<1x256xf32>, vector<1x256xf32> -> vector<2x256xf32>
    %195 = vector.extract_strided_slice %194 {offsets = [0, 0], sizes = [2, 136], strides = [1, 1]} : vector<2x256xf32> to vector<2x136xf32>
    %c15 = arith.constant 15 : index
    %c0_93 = arith.constant 0 : index
    %c0_94 = arith.constant 0 : index
    %196 = vector.load %arg17[%c15, %c0_93, %c0_94] : memref<16x136x128xf32, #tpu.memory_space<vmem>>, vector<1x136x128xf32>
    %197 = vector.shape_cast %196 : vector<1x136x128xf32> to vector<136x128xf32>
    %cst_95 = arith.constant dense<0.000000e+00> : vector<2x128xf32>
    %198 = tpu.matmul %195, %197, %cst_95 {dimension_numbers = #tpu.dot_dimension_numbers<[1], [0], [0], [1], [0, 0, 1, 1], [], []>} : vector<2x136xf32>, vector<136x128xf32>, vector<2x128xf32> -> vector<2x128xf32>
    %199 = arith.addf %190, %198 : vector<2x128xf32>
    %c0_96 = arith.constant 0 : index
    %c0_97 = arith.constant 0 : index
    %200 = vector.load %arg18[%c0_96, %c0_97] : memref<1x128xf32, #tpu.memory_space<vmem>>, vector<1x128xf32>
    %201 = vector.broadcast %200 : vector<1x128xf32> to vector<2x128xf32>
    %202 = arith.addf %199, %201 : vector<2x128xf32>
    %c0_98 = arith.constant 0 : index
    %c0_99 = arith.constant 0 : index
    %203 = vector.load %arg6[%c0_98, %c0_99] : memref<64x1xi32, #tpu.memory_space<vmem>>, vector<64x1xi32>
    %204 = tpu.iota {dimensions = array<i32: 1>} : vector<64x35xi32>
    %205 = vector.broadcast %203 : vector<64x1xi32> to vector<64x35xi32>
    %206 = arith.cmpi eq, %204, %205 : vector<64x35xi32>
    %207 = arith.extui %206 : vector<64x35xi1> to vector<64x35xi32>
    %208 = arith.sitofp %207 : vector<64x35xi32> to vector<64x35xf32>
    %c0_100 = arith.constant 0 : index
    %c0_101 = arith.constant 0 : index
    %209 = vector.load %arg19[%c0_100, %c0_101] : memref<35x256xf32, #tpu.memory_space<vmem>>, vector<35x256xf32>
    %cst_102 = arith.constant dense<0.000000e+00> : vector<64x256xf32>
    %210 = tpu.matmul %208, %209, %cst_102 {dimension_numbers = #tpu.dot_dimension_numbers<[1], [0], [0], [1], [0, 0, 1, 1], [], []>} : vector<64x35xf32>, vector<35x256xf32>, vector<64x256xf32> -> vector<64x256xf32>
    %c0_103 = arith.constant 0 : index
    %c0_104 = arith.constant 0 : index
    %211 = vector.load %arg20[%c0_103, %c0_104] : memref<1x256xf32, #tpu.memory_space<vmem>>, vector<1x256xf32>
    %212 = vector.broadcast %211 : vector<1x256xf32> to vector<64x256xf32>
    %213 = arith.addf %210, %212 : vector<64x256xf32>
    %c0_105 = arith.constant 0 : index
    %c0_106 = arith.constant 0 : index
    %214 = vector.load %arg21[%c0_105, %c0_106] : memref<64x256xf32, #tpu.memory_space<vmem>>, vector<64x256xf32>
    %c0_107 = arith.constant 0 : index
    %c0_108 = arith.constant 0 : index
    %215 = vector.load %arg22[%c0_107, %c0_108] : memref<1x256xf32, #tpu.memory_space<vmem>>, vector<1x256xf32>
    %cst_109 = arith.constant 0.000000e+00 : f32
    %216 = vector.broadcast %cst_109 : f32 to vector<32x64xf32>
    %217 = vector.extract_strided_slice %213 {offsets = [0, 0], sizes = [32, 256], strides = [1, 1]} : vector<64x256xf32> to vector<32x256xf32>
    %cst_110 = arith.constant dense<0.000000e+00> : vector<32x256xf32>
    %218 = tpu.matmul %216, %214, %cst_110 {dimension_numbers = #tpu.dot_dimension_numbers<[1], [0], [0], [1], [0, 0, 1, 1], [], []>} : vector<32x64xf32>, vector<64x256xf32>, vector<32x256xf32> -> vector<32x256xf32>
    %219 = vector.broadcast %215 : vector<1x256xf32> to vector<32x256xf32>
    %220 = arith.addf %218, %219 : vector<32x256xf32>
    %221 = vector.extract_strided_slice %217 {offsets = [0, 0], sizes = [32, 128], strides = [1, 1]} : vector<32x256xf32> to vector<32x128xf32>
    %222 = vector.extract_strided_slice %220 {offsets = [0, 0], sizes = [32, 128], strides = [1, 1]} : vector<32x256xf32> to vector<32x128xf32>
    %223 = arith.addf %221, %222 : vector<32x128xf32>
    %224 = arith.negf %223 : vector<32x128xf32>
    %225 = math.exp %224 : vector<32x128xf32>
    %cst_111 = arith.constant 1.000000e+00 : f32
    %226 = vector.broadcast %cst_111 : f32 to vector<32x128xf32>
    %227 = arith.addf %226, %225 : vector<32x128xf32>
    %228 = arith.divf %226, %227 : vector<32x128xf32>
    %229 = vector.extract_strided_slice %228 {offsets = [0, 0], sizes = [32, 64], strides = [1, 1]} : vector<32x128xf32> to vector<32x64xf32>
    %c64_i32 = arith.constant 64 : i32
    %230 = tpu.dynamic_rotate %228 by %c64_i32 dim 1 : vector<32x128xf32>, i32 -> vector<32x128xf32>
    %231 = vector.extract_strided_slice %230 {offsets = [0, 0], sizes = [32, 64], strides = [1, 1]} : vector<32x128xf32> to vector<32x64xf32>
    %232 = vector.extract_strided_slice %217 {offsets = [0, 128], sizes = [32, 64], strides = [1, 1]} : vector<32x256xf32> to vector<32x64xf32>
    %233 = vector.extract_strided_slice %220 {offsets = [0, 128], sizes = [32, 64], strides = [1, 1]} : vector<32x256xf32> to vector<32x64xf32>
    %234 = arith.mulf %229, %233 : vector<32x64xf32>
    %235 = arith.addf %232, %234 : vector<32x64xf32>
    %236 = math.tanh %235 : vector<32x64xf32>
    %cst_112 = arith.constant 1.000000e+00 : f32
    %237 = vector.broadcast %cst_112 : f32 to vector<32x64xf32>
    %238 = arith.subf %237, %231 : vector<32x64xf32>
    %239 = arith.mulf %238, %236 : vector<32x64xf32>
    %240 = arith.mulf %231, %216 : vector<32x64xf32>
    %241 = arith.addf %239, %240 : vector<32x64xf32>
    %c0_113 = arith.constant 0 : index
    %c0_114 = arith.constant 0 : index
    %c0_115 = arith.constant 0 : index
    %242 = vector.load %arg7[%c0_113, %c0_114, %c0_115] : memref<2x4x32xf32, #tpu.memory_space<vmem>>, vector<1x4x32xf32>
    %243 = vector.shape_cast %242 : vector<1x4x32xf32> to vector<4x32xf32>
    %cst_116 = arith.constant dense<0.000000e+00> : vector<4x64xf32>
    %244 = tpu.matmul %243, %241, %cst_116 {dimension_numbers = #tpu.dot_dimension_numbers<[1], [0], [0], [1], [0, 0, 1, 1], [], []>} : vector<4x32xf32>, vector<32x64xf32>, vector<4x64xf32> -> vector<4x64xf32>
    %245 = vector.extract_strided_slice %213 {offsets = [32, 0], sizes = [32, 256], strides = [1, 1]} : vector<64x256xf32> to vector<32x256xf32>
    %cst_117 = arith.constant dense<0.000000e+00> : vector<32x256xf32>
    %246 = tpu.matmul %241, %214, %cst_117 {dimension_numbers = #tpu.dot_dimension_numbers<[1], [0], [0], [1], [0, 0, 1, 1], [], []>} : vector<32x64xf32>, vector<64x256xf32>, vector<32x256xf32> -> vector<32x256xf32>
    %247 = vector.broadcast %215 : vector<1x256xf32> to vector<32x256xf32>
    %248 = arith.addf %246, %247 : vector<32x256xf32>
    %249 = vector.extract_strided_slice %245 {offsets = [0, 0], sizes = [32, 128], strides = [1, 1]} : vector<32x256xf32> to vector<32x128xf32>
    %250 = vector.extract_strided_slice %248 {offsets = [0, 0], sizes = [32, 128], strides = [1, 1]} : vector<32x256xf32> to vector<32x128xf32>
    %251 = arith.addf %249, %250 : vector<32x128xf32>
    %252 = arith.negf %251 : vector<32x128xf32>
    %253 = math.exp %252 : vector<32x128xf32>
    %cst_118 = arith.constant 1.000000e+00 : f32
    %254 = vector.broadcast %cst_118 : f32 to vector<32x128xf32>
    %255 = arith.addf %254, %253 : vector<32x128xf32>
    %256 = arith.divf %254, %255 : vector<32x128xf32>
    %257 = vector.extract_strided_slice %256 {offsets = [0, 0], sizes = [32, 64], strides = [1, 1]} : vector<32x128xf32> to vector<32x64xf32>
    %c64_i32_119 = arith.constant 64 : i32
    %258 = tpu.dynamic_rotate %256 by %c64_i32_119 dim 1 : vector<32x128xf32>, i32 -> vector<32x128xf32>
    %259 = vector.extract_strided_slice %258 {offsets = [0, 0], sizes = [32, 64], strides = [1, 1]} : vector<32x128xf32> to vector<32x64xf32>
    %260 = vector.extract_strided_slice %245 {offsets = [0, 128], sizes = [32, 64], strides = [1, 1]} : vector<32x256xf32> to vector<32x64xf32>
    %261 = vector.extract_strided_slice %248 {offsets = [0, 128], sizes = [32, 64], strides = [1, 1]} : vector<32x256xf32> to vector<32x64xf32>
    %262 = arith.mulf %257, %261 : vector<32x64xf32>
    %263 = arith.addf %260, %262 : vector<32x64xf32>
    %264 = math.tanh %263 : vector<32x64xf32>
    %cst_120 = arith.constant 1.000000e+00 : f32
    %265 = vector.broadcast %cst_120 : f32 to vector<32x64xf32>
    %266 = arith.subf %265, %259 : vector<32x64xf32>
    %267 = arith.mulf %266, %264 : vector<32x64xf32>
    %268 = arith.mulf %259, %241 : vector<32x64xf32>
    %269 = arith.addf %267, %268 : vector<32x64xf32>
    %c1_121 = arith.constant 1 : index
    %c0_122 = arith.constant 0 : index
    %c0_123 = arith.constant 0 : index
    %270 = vector.load %arg7[%c1_121, %c0_122, %c0_123] : memref<2x4x32xf32, #tpu.memory_space<vmem>>, vector<1x4x32xf32>
    %271 = vector.shape_cast %270 : vector<1x4x32xf32> to vector<4x32xf32>
    %cst_124 = arith.constant dense<0.000000e+00> : vector<4x64xf32>
    %272 = tpu.matmul %271, %269, %cst_124 {dimension_numbers = #tpu.dot_dimension_numbers<[1], [0], [0], [1], [0, 0, 1, 1], [], []>} : vector<4x32xf32>, vector<32x64xf32>, vector<4x64xf32> -> vector<4x64xf32>
    %cst_125 = arith.constant 0.000000e+00 : f32
    %273 = vector.broadcast %cst_125 : f32 to vector<2x128xf32>
    %274 = vector.extract_strided_slice %244 {offsets = [0, 0], sizes = [1, 64], strides = [1, 1]} : vector<4x64xf32> to vector<1x64xf32>
    %275 = vector.extract_strided_slice %272 {offsets = [0, 0], sizes = [1, 64], strides = [1, 1]} : vector<4x64xf32> to vector<1x64xf32>
    %276 = tpu.concatenate %274, %275 in 0 : vector<1x64xf32>, vector<1x64xf32> -> vector<2x64xf32>
    %c0_126 = arith.constant 0 : index
    %c0_127 = arith.constant 0 : index
    %c0_128 = arith.constant 0 : index
    %277 = vector.load %arg23[%c0_126, %c0_127, %c0_128] : memref<4x64x128xf32, #tpu.memory_space<vmem>>, vector<1x64x128xf32>
    %278 = vector.shape_cast %277 : vector<1x64x128xf32> to vector<64x128xf32>
    %cst_129 = arith.constant dense<0.000000e+00> : vector<2x128xf32>
    %279 = tpu.matmul %276, %278, %cst_129 {dimension_numbers = #tpu.dot_dimension_numbers<[1], [0], [0], [1], [0, 0, 1, 1], [], []>} : vector<2x64xf32>, vector<64x128xf32>, vector<2x128xf32> -> vector<2x128xf32>
    %280 = arith.addf %273, %279 : vector<2x128xf32>
    %281 = vector.extract_strided_slice %244 {offsets = [1, 0], sizes = [1, 64], strides = [1, 1]} : vector<4x64xf32> to vector<1x64xf32>
    %282 = vector.extract_strided_slice %272 {offsets = [1, 0], sizes = [1, 64], strides = [1, 1]} : vector<4x64xf32> to vector<1x64xf32>
    %283 = tpu.concatenate %281, %282 in 0 : vector<1x64xf32>, vector<1x64xf32> -> vector<2x64xf32>
    %c1_130 = arith.constant 1 : index
    %c0_131 = arith.constant 0 : index
    %c0_132 = arith.constant 0 : index
    %284 = vector.load %arg23[%c1_130, %c0_131, %c0_132] : memref<4x64x128xf32, #tpu.memory_space<vmem>>, vector<1x64x128xf32>
    %285 = vector.shape_cast %284 : vector<1x64x128xf32> to vector<64x128xf32>
    %cst_133 = arith.constant dense<0.000000e+00> : vector<2x128xf32>
    %286 = tpu.matmul %283, %285, %cst_133 {dimension_numbers = #tpu.dot_dimension_numbers<[1], [0], [0], [1], [0, 0, 1, 1], [], []>} : vector<2x64xf32>, vector<64x128xf32>, vector<2x128xf32> -> vector<2x128xf32>
    %287 = arith.addf %280, %286 : vector<2x128xf32>
    %288 = vector.extract_strided_slice %244 {offsets = [2, 0], sizes = [1, 64], strides = [1, 1]} : vector<4x64xf32> to vector<1x64xf32>
    %289 = vector.extract_strided_slice %272 {offsets = [2, 0], sizes = [1, 64], strides = [1, 1]} : vector<4x64xf32> to vector<1x64xf32>
    %290 = tpu.concatenate %288, %289 in 0 : vector<1x64xf32>, vector<1x64xf32> -> vector<2x64xf32>
    %c2_134 = arith.constant 2 : index
    %c0_135 = arith.constant 0 : index
    %c0_136 = arith.constant 0 : index
    %291 = vector.load %arg23[%c2_134, %c0_135, %c0_136] : memref<4x64x128xf32, #tpu.memory_space<vmem>>, vector<1x64x128xf32>
    %292 = vector.shape_cast %291 : vector<1x64x128xf32> to vector<64x128xf32>
    %cst_137 = arith.constant dense<0.000000e+00> : vector<2x128xf32>
    %293 = tpu.matmul %290, %292, %cst_137 {dimension_numbers = #tpu.dot_dimension_numbers<[1], [0], [0], [1], [0, 0, 1, 1], [], []>} : vector<2x64xf32>, vector<64x128xf32>, vector<2x128xf32> -> vector<2x128xf32>
    %294 = arith.addf %287, %293 : vector<2x128xf32>
    %295 = vector.extract_strided_slice %244 {offsets = [3, 0], sizes = [1, 64], strides = [1, 1]} : vector<4x64xf32> to vector<1x64xf32>
    %296 = vector.extract_strided_slice %272 {offsets = [3, 0], sizes = [1, 64], strides = [1, 1]} : vector<4x64xf32> to vector<1x64xf32>
    %297 = tpu.concatenate %295, %296 in 0 : vector<1x64xf32>, vector<1x64xf32> -> vector<2x64xf32>
    %c3_138 = arith.constant 3 : index
    %c0_139 = arith.constant 0 : index
    %c0_140 = arith.constant 0 : index
    %298 = vector.load %arg23[%c3_138, %c0_139, %c0_140] : memref<4x64x128xf32, #tpu.memory_space<vmem>>, vector<1x64x128xf32>
    %299 = vector.shape_cast %298 : vector<1x64x128xf32> to vector<64x128xf32>
    %cst_141 = arith.constant dense<0.000000e+00> : vector<2x128xf32>
    %300 = tpu.matmul %297, %299, %cst_141 {dimension_numbers = #tpu.dot_dimension_numbers<[1], [0], [0], [1], [0, 0, 1, 1], [], []>} : vector<2x64xf32>, vector<64x128xf32>, vector<2x128xf32> -> vector<2x128xf32>
    %301 = arith.addf %294, %300 : vector<2x128xf32>
    %c0_142 = arith.constant 0 : index
    %c0_143 = arith.constant 0 : index
    %302 = vector.load %arg24[%c0_142, %c0_143] : memref<1x128xf32, #tpu.memory_space<vmem>>, vector<1x128xf32>
    %303 = vector.broadcast %302 : vector<1x128xf32> to vector<2x128xf32>
    %304 = arith.addf %301, %303 : vector<2x128xf32>
    %c0_144 = arith.constant 0 : index
    %c0_145 = arith.constant 0 : index
    %305 = vector.load %arg25[%c0_144, %c0_145] : memref<128x256xf32, #tpu.memory_space<vmem>>, vector<128x256xf32>
    %cst_146 = arith.constant dense<0.000000e+00> : vector<2x256xf32>
    %306 = tpu.matmul %12, %305, %cst_146 {dimension_numbers = #tpu.dot_dimension_numbers<[1], [0], [0], [1], [0, 0, 1, 1], [], []>} : vector<2x128xf32>, vector<128x256xf32>, vector<2x256xf32> -> vector<2x256xf32>
    %c0_147 = arith.constant 0 : index
    %c0_148 = arith.constant 0 : index
    %307 = vector.load %arg26[%c0_147, %c0_148] : memref<128x256xf32, #tpu.memory_space<vmem>>, vector<128x256xf32>
    %cst_149 = arith.constant dense<0.000000e+00> : vector<2x256xf32>
    %308 = tpu.matmul %202, %307, %cst_149 {dimension_numbers = #tpu.dot_dimension_numbers<[1], [0], [0], [1], [0, 0, 1, 1], [], []>} : vector<2x128xf32>, vector<128x256xf32>, vector<2x256xf32> -> vector<2x256xf32>
    %309 = arith.addf %306, %308 : vector<2x256xf32>
    %c0_150 = arith.constant 0 : index
    %c0_151 = arith.constant 0 : index
    %310 = vector.load %arg27[%c0_150, %c0_151] : memref<128x256xf32, #tpu.memory_space<vmem>>, vector<128x256xf32>
    %cst_152 = arith.constant dense<0.000000e+00> : vector<2x256xf32>
    %311 = tpu.matmul %304, %310, %cst_152 {dimension_numbers = #tpu.dot_dimension_numbers<[1], [0], [0], [1], [0, 0, 1, 1], [], []>} : vector<2x128xf32>, vector<128x256xf32>, vector<2x256xf32> -> vector<2x256xf32>
    %312 = arith.addf %309, %311 : vector<2x256xf32>
    %c0_153 = arith.constant 0 : index
    %c0_154 = arith.constant 0 : index
    %313 = vector.load %arg28[%c0_153, %c0_154] : memref<1x256xf32, #tpu.memory_space<vmem>>, vector<1x256xf32>
    %314 = vector.broadcast %313 : vector<1x256xf32> to vector<2x256xf32>
    %315 = arith.addf %312, %314 : vector<2x256xf32>
    %cst_155 = arith.constant 0.000000e+00 : f32
    %316 = vector.broadcast %cst_155 : f32 to vector<2x256xf32>
    %317 = arith.maximumf %315, %316 : vector<2x256xf32>
    %c0_156 = arith.constant 0 : index
    %c0_157 = arith.constant 0 : index
    %318 = vector.load %arg29[%c0_156, %c0_157] : memref<256x64xf32, #tpu.memory_space<vmem>>, vector<256x64xf32>
    %cst_158 = arith.constant dense<0.000000e+00> : vector<2x64xf32>
    %319 = tpu.matmul %317, %318, %cst_158 {dimension_numbers = #tpu.dot_dimension_numbers<[1], [0], [0], [1], [0, 0, 1, 1], [], []>} : vector<2x256xf32>, vector<256x64xf32>, vector<2x64xf32> -> vector<2x64xf32>
    %c0_159 = arith.constant 0 : index
    %c0_160 = arith.constant 0 : index
    %320 = vector.load %arg30[%c0_159, %c0_160] : memref<1x64xf32, #tpu.memory_space<vmem>>, vector<1x64xf32>
    %321 = vector.broadcast %320 : vector<1x64xf32> to vector<2x64xf32>
    %322 = arith.addf %319, %321 : vector<2x64xf32>
    %cst_161 = arith.constant 0.000000e+00 : f32
    %323 = vector.broadcast %cst_161 : f32 to vector<2x64xf32>
    %324 = arith.maximumf %322, %323 : vector<2x64xf32>
    %c0_162 = arith.constant 0 : index
    %c0_163 = arith.constant 0 : index
    %325 = vector.load %arg31[%c0_162, %c0_163] : memref<64x48xf32, #tpu.memory_space<vmem>>, vector<64x48xf32>
    %cst_164 = arith.constant dense<0.000000e+00> : vector<2x48xf32>
    %326 = tpu.matmul %324, %325, %cst_164 {dimension_numbers = #tpu.dot_dimension_numbers<[1], [0], [0], [1], [0, 0, 1, 1], [], []>} : vector<2x64xf32>, vector<64x48xf32>, vector<2x48xf32> -> vector<2x48xf32>
    %c0_165 = arith.constant 0 : index
    %c0_166 = arith.constant 0 : index
    %327 = vector.load %arg32[%c0_165, %c0_166] : memref<1x48xf32, #tpu.memory_space<vmem>>, vector<1x48xf32>
    %328 = vector.broadcast %327 : vector<1x48xf32> to vector<2x48xf32>
    %329 = arith.addf %326, %328 : vector<2x48xf32>
    %c0_167 = arith.constant 0 : index
    %c0_168 = arith.constant 0 : index
    %330 = vector.load %arg8[%c0_167, %c0_168] : memref<2x48xi32, #tpu.memory_space<vmem>>, vector<2x48xi32>
    %c0_i32 = arith.constant 0 : i32
    %331 = vector.broadcast %c0_i32 : i32 to vector<2x48xi32>
    %332 = arith.cmpi ne, %330, %331 : vector<2x48xi32>
    %cst_169 = arith.constant -1.000000e+06 : f32
    %333 = vector.broadcast %cst_169 : f32 to vector<2x48xf32>
    %334 = arith.select %332, %329, %333 : vector<2x48xi1>, vector<2x48xf32>
    %c0_170 = arith.constant 0 : index
    %c0_171 = arith.constant 0 : index
    %335 = vector.load %arg33[%c0_170, %c0_171] : memref<2x48xf32, #tpu.memory_space<vmem>>, vector<2x48xf32>
    tpu.vector_store %arg33[%c0_170, %c0_171], %334 {strides = array<i32>} : memref<2x48xf32, #tpu.memory_space<vmem>>, vector<2x48xf32>,
    return
  }
}

</mosaic_0001>

<llo_original>
// kernel: network_forward.1
$region0: #{network_forward.1}
  #allocation0 [shape = 'u32[]', space=smem, size = 0x4, offset = 0x4, fixed_abs, tag = 'smem constant byte address 0x4 - core index']
  #allocation1 [shape = 'u32[72,128]{1,0:T(1,128)}', space=vmem, size = 0x9000, scoped, tag = 'internal scratch']
  %s0 = inlined_call_operand.smem [shape: u32[34], index: -1, kind: input, shape index: {}]
  %s1 = sld [smem:[%s0]]
  %s2 = scalar_lea.smem %s0, 1
  %s3 = sld [smem:[%s2]]
  %s4 = scalar_lea.smem %s0, 2
  %s5 = sld [smem:[%s4]]
  %s6 = scalar_lea.smem %s0, 3
  %s7 = sld [smem:[%s6]]
  %s8 = scalar_lea.smem %s0, 4
  %s9 = sld [smem:[%s8]]
  %s10 = scalar_lea.smem %s0, 5
  %s11 = sld [smem:[%s10]]
  %s12 = scalar_lea.smem %s0, 6
  %s13 = sld [smem:[%s12]]
  %s14 = scalar_lea.smem %s0, 7
  %s15 = sld [smem:[%s14]]
  %s16 = scalar_lea.smem %s0, 8
  %s17 = sld [smem:[%s16]]
  %s18 = scalar_lea.smem %s0, 9
  %s19 = sld [smem:[%s18]]
  %s20 = scalar_lea.smem %s0, 10
  %s21 = sld [smem:[%s20]]
  %s22 = scalar_lea.smem %s0, 11
  %s23 = sld [smem:[%s22]]
  %s24 = scalar_lea.smem %s0, 12
  %s25 = sld [smem:[%s24]]
  %s26 = scalar_lea.smem %s0, 13
  %s27 = sld [smem:[%s26]]
  %s28 = scalar_lea.smem %s0, 14
  %s29 = sld [smem:[%s28]]
  %s30 = scalar_lea.smem %s0, 15
  %s31 = sld [smem:[%s30]]
  %s32 = scalar_lea.smem %s0, 16
  %s33 = sld [smem:[%s32]]
  %s34 = scalar_lea.smem %s0, 17
  %s35 = sld [smem:[%s34]]
  %s36 = scalar_lea.smem %s0, 18
  %s37 = sld [smem:[%s36]]
  %s38 = scalar_lea.smem %s0, 19
  %s39 = sld [smem:[%s38]]
  %s40 = scalar_lea.smem %s0, 20
  %s41 = sld [smem:[%s40]]
  %s42 = scalar_lea.smem %s0, 21
  %s43 = sld [smem:[%s42]]
  %s44 = scalar_lea.smem %s0, 22
  %s45 = sld [smem:[%s44]]
  %s46 = scalar_lea.smem %s0, 23
  %s47 = sld [smem:[%s46]]
  %s48 = scalar_lea.smem %s0, 24
  %s49 = sld [smem:[%s48]]
  %s50 = scalar_lea.smem %s0, 25
  %s51 = sld [smem:[%s50]]
  %s52 = scalar_lea.smem %s0, 26
  %s53 = sld [smem:[%s52]]
  %s54 = scalar_lea.smem %s0, 27
  %s55 = sld [smem:[%s54]]
  %s56 = scalar_lea.smem %s0, 28
  %s57 = sld [smem:[%s56]]
  %s58 = scalar_lea.smem %s0, 29
  %s59 = sld [smem:[%s58]]
  %s60 = scalar_lea.smem %s0, 30
  %s61 = sld [smem:[%s60]]
  %s62 = scalar_lea.smem %s0, 31
  %s63 = sld [smem:[%s62]]
  %s64 = scalar_lea.smem %s0, 32
  %s65 = sld [smem:[%s64]]
  %s66 = scalar_lea.smem %s0, 33
  %s67 = sld [smem:[%s66]]
  %s68 = sld [smem:[#allocation0]]
  $region242: #{network_forward.1} parent=0
    _
  %s70 = ssub.s32 1, %s68
  %s71 = scalar_select 0, %s70, %s68
  $region1: #{network_forward.1} parent=0
    #allocation2 [shape = 'u8[1024]{0}', space=vmem, size = 0x400, scoped, tag = 'input window, operand 0, single buffered']
    #allocation3 [shape = 's32[1]{0}', space=sflag, size = 0x4, scoped, tag = 'scoped memory for network_forward.1']
    #allocation4 [shape = 's32[1]{0}', space=sflag, size = 0x4, scoped, tag = 'scoped memory for network_forward.1']
    #allocation5 [shape = 'u8[32768]{0}', space=vmem, size = 0x8000, scoped, tag = 'input window, operand 9, single buffered']
    #allocation6 [shape = 's32[1]{0}', space=sflag, size = 0x4, scoped, tag = 'scoped memory for network_forward.1']
    #allocation7 [shape = 'u8[1024]{0}', space=vmem, size = 0x400, scoped, tag = 'input window, operand 10, single buffered']
    #allocation8 [shape = 'u8[131072]{0}', space=vmem, size = 0x20000, scoped, tag = 'input window, operand 11, single buffered']
    #allocation9 [shape = 's32[1]{0}', space=sflag, size = 0x4, scoped, tag = 'scoped memory for network_forward.1']
    #allocation10 [shape = 'u8[512]{0}', space=vmem, size = 0x400, scoped, tag = 'input window, operand 12, single buffered']
    #allocation11 [shape = 'u8[4096]{0}', space=vmem, size = 0x1000, scoped, tag = 'input window, operand 13, single buffered']
    #allocation12 [shape = 's32[1]{0}', space=sflag, size = 0x4, scoped, tag = 'scoped memory for network_forward.1']
    #allocation13 [shape = 'u8[4096]{0}', space=vmem, size = 0x1000, scoped, tag = 'input window, operand 14, single buffered']
    #allocation14 [shape = 'u8[24576]{0}', space=vmem, size = 0x6000, scoped, tag = 'input window, operand 15, single buffered']
    #allocation15 [shape = 's32[1]{0}', space=sflag, size = 0x4, scoped, tag = 'scoped memory for network_forward.1']
    #allocation16 [shape = 'u8[8192]{0}', space=vmem, size = 0x2000, scoped, tag = 'input window, operand 16, single buffered']
    #allocation17 [shape = 'u8[1114112]{0}', space=vmem, size = 0x110000, scoped, tag = 'input window, operand 17, single buffered']
    #allocation18 [shape = 's32[1]{0}', space=sflag, size = 0x4, scoped, tag = 'scoped memory for network_forward.1']
    #allocation19 [shape = 'u8[512]{0}', space=vmem, size = 0x400, scoped, tag = 'input window, operand 18, single buffered']
    #allocation20 [shape = 'u8[40960]{0}', space=vmem, size = 0xa000, scoped, tag = 'input window, operand 19, single buffered']
    #allocation21 [shape = 's32[1]{0}', space=sflag, size = 0x4, scoped, tag = 'scoped memory for network_forward.1']
    #allocation22 [shape = 'u8[1024]{0}', space=vmem, size = 0x400, scoped, tag = 'input window, operand 20, single buffered']
    #allocation23 [shape = 'u8[65536]{0}', space=vmem, size = 0x10000, scoped, tag = 'input window, operand 21, single buffered']
    #allocation24 [shape = 's32[1]{0}', space=sflag, size = 0x4, scoped, tag = 'scoped memory for network_forward.1']
    #allocation25 [shape = 'u8[1024]{0}', space=vmem, size = 0x400, scoped, tag = 'input window, operand 22, single buffered']
    #allocation26 [shape = 'u8[131072]{0}', space=vmem, size = 0x20000, scoped, tag = 'input window, operand 23, single buffered']
    #allocation27 [shape = 's32[1]{0}', space=sflag, size = 0x4, scoped, tag = 'scoped memory for network_forward.1']
    #allocation28 [shape = 'u8[512]{0}', space=vmem, size = 0x400, scoped, tag = 'input window, operand 24, single buffered']
    #allocation29 [shape = 'u8[131072]{0}', space=vmem, size = 0x20000, scoped, tag = 'input window, operand 25, single buffered']
    #allocation30 [shape = 's32[1]{0}', space=sflag, size = 0x4, scoped, tag = 'scoped memory for network_forward.1']
    #allocation31 [shape = 'u8[131072]{0}', space=vmem, size = 0x20000, scoped, tag = 'input window, operand 26, single buffered']
    #allocation32 [shape = 'u8[131072]{0}', space=vmem, size = 0x20000, scoped, tag = 'input window, operand 27, single buffered']
    #allocation33 [shape = 's32[1]{0}', space=sflag, size = 0x4, scoped, tag = 'scoped memory for network_forward.1']
    #allocation34 [shape = 'u8[1024]{0}', space=vmem, size = 0x400, scoped, tag = 'input window, operand 28, single buffered']
    #allocation35 [shape = 'u8[131072]{0}', space=vmem, size = 0x20000, scoped, tag = 'input window, operand 29, single buffered']
    #allocation36 [shape = 's32[1]{0}', space=sflag, size = 0x4, scoped, tag = 'scoped memory for network_forward.1']
    #allocation37 [shape = 'u8[512]{0}', space=vmem, size = 0x400, scoped, tag = 'input window, operand 30, single buffered']
    #allocation38 [shape = 'u8[32768]{0}', space=vmem, size = 0x8000, scoped, tag = 'input window, operand 31, single buffered']
    #allocation39 [shape = 's32[1]{0}', space=sflag, size = 0x4, scoped, tag = 'scoped memory for network_forward.1']
    #allocation40 [shape = 'u8[512]{0}', space=vmem, size = 0x400, scoped, tag = 'input window, operand 32, single buffered']
    #allocation41 [shape = 'u8[1024]{0}', space=vmem, size = 0x400, scoped, tag = 'output window, operand 0, single buffered']
    %72 = vsyncpa [#allocation3], 0
    %73 = vsyncpa [#allocation6], 0
    %74 = vsyncpa [#allocation9], 0
    %75 = vsyncpa [#allocation12], 0
    %76 = vsyncpa [#allocation15], 0
    %77 = vsyncpa [#allocation18], 0
    %78 = vsyncpa [#allocation21], 0
    %79 = vsyncpa [#allocation24], 0
    %80 = vsyncpa [#allocation27], 0
    %81 = vsyncpa [#allocation30], 0
    %82 = vsyncpa [#allocation33], 0
    %83 = vsyncpa [#allocation36], 0
    %84 = vsyncpa [#allocation39], 0
    %85 = vsyncpa [#allocation4], 0
    // Predicated region
    $region2: #{network_forward.1} parent=1 // pred_check
      _
    $region3: #{network_forward.1} parent=1 // pred_check_branch
      %87 = sbr.rel (0) target = $region5
    $region4: #{network_forward.1} parent=1 // pred_region
      %89 = vsyncadd [#allocation3], 0
      %s91 = sshll.u32 %s1, 4
      %s92 = int_to_ptr.hbm [resolvable:$true] %s91
      %s93 = sshll.u32 [#allocation2], 4
      %s94 = int_to_ptr.vmem [resolvable:$true] %s93
      %96 = dma.hbm_to_vmem [thread:$0]  %s92, 32, %s94, [#allocation3]
    $region5: #{network_forward.1} parent=1 // pred_fallthru
      _
    // Predicated region
    $region6: #{network_forward.1} parent=1 // pred_check
      _
    $region7: #{network_forward.1} parent=1 // pred_check_branch
      %98 = sbr.rel (0) target = $region9
    $region8: #{network_forward.1} parent=1 // pred_region
      _
    $region9: #{network_forward.1} parent=1 // pred_fallthru
      _
    // Predicated region
    $region10: #{network_forward.1} parent=1 // pred_check
      _
    $region11: #{network_forward.1} parent=1 // pred_check_branch
      %100 = sbr.rel (0) target = $region13
    $region12: #{network_forward.1} parent=1 // pred_region
      _
    $region13: #{network_forward.1} parent=1 // pred_fallthru
      _
    // Predicated region
    $region14: #{network_forward.1} parent=1 // pred_check
      _
    $region15: #{network_forward.1} parent=1 // pred_check_branch
      %102 = sbr.rel (0) target = $region17
    $region16: #{network_forward.1} parent=1 // pred_region
      _
    $region17: #{network_forward.1} parent=1 // pred_fallthru
      _
    // Predicated region
    $region18: #{network_forward.1} parent=1 // pred_check
      _
    $region19: #{network_forward.1} parent=1 // pred_check_branch
      %104 = sbr.rel (0) target = $region21
    $region20: #{network_forward.1} parent=1 // pred_region
      _
    $region21: #{network_forward.1} parent=1 // pred_fallthru
      _
    // Predicated region
    $region22: #{network_forward.1} parent=1 // pred_check
      _
    $region23: #{network_forward.1} parent=1 // pred_check_branch
      %106 = sbr.rel (0) target = $region25
    $region24: #{network_forward.1} parent=1 // pred_region
      _
    $region25: #{network_forward.1} parent=1 // pred_fallthru
      _
    // Predicated region
    $region26: #{network_forward.1} parent=1 // pred_check
      _
    $region27: #{network_forward.1} parent=1 // pred_check_branch
      %108 = sbr.rel (0) target = $region29
    $region28: #{network_forward.1} parent=1 // pred_region
      _
    $region29: #{network_forward.1} parent=1 // pred_fallthru
      _
    // Predicated region
    $region30: #{network_forward.1} parent=1 // pred_check
      _
    $region31: #{network_forward.1} parent=1 // pred_check_branch
      %110 = sbr.rel (0) target = $region33
    $region32: #{network_forward.1} parent=1 // pred_region
      _
    $region33: #{network_forward.1} parent=1 // pred_fallthru
      _
    // Predicated region
    $region34: #{network_forward.1} parent=1 // pred_check
      _
    $region35: #{network_forward.1} parent=1 // pred_check_branch
      %112 = sbr.rel (0) target = $region37
    $region36: #{network_forward.1} parent=1 // pred_region
      _
    $region37: #{network_forward.1} parent=1 // pred_fallthru
      _
    // Predicated region
    $region38: #{network_forward.1} parent=1 // pred_check
      _
    $region39: #{network_forward.1} parent=1 // pred_check_branch
      %114 = sbr.rel (0) target = $region41
    $region40: #{network_forward.1} parent=1 // pred_region
      %116 = vsyncadd [#allocation6], 0
      %s117 = sshll.u32 %s19, 4
      %s118 = int_to_ptr.hbm [resolvable:$true] %s117
      %s119 = sshll.u32 [#allocation5], 4
      %s120 = int_to_ptr.vmem [resolvable:$true] %s119
      %125 = dma.hbm_to_vmem [thread:$0]  %s118, 1024, %s120, [#allocation6], 256, 256, 16
    $region41: #{network_forward.1} parent=1 // pred_fallthru
      _
    // Predicated region
    $region42: #{network_forward.1} parent=1 // pred_check
      _
    $region43: #{network_forward.1} parent=1 // pred_check_branch
      %127 = sbr.rel (0) target = $region45
    $region44: #{network_forward.1} parent=1 // pred_region
      %129 = vsyncadd [#allocation6], 0
      %s131 = sshll.u32 %s21, 4
      %s132 = int_to_ptr.hbm [resolvable:$true] %s131
      %s133 = sshll.u32 [#allocation7], 4
      %s134 = int_to_ptr.vmem [resolvable:$true] %s133
      %136 = dma.hbm_to_vmem [thread:$0]  %s132, 32, %s134, [#allocation6]
    $region45: #{network_forward.1} parent=1 // pred_fallthru
      _
    // Predicated region
    $region46: #{network_forward.1} parent=1 // pred_check
      _
    $region47: #{network_forward.1} parent=1 // pred_check_branch
      %138 = sbr.rel (0) target = $region49
    $region48: #{network_forward.1} parent=1 // pred_region
      %140 = vsyncadd [#allocation9], 0
      %s141 = sshll.u32 %s23, 4
      %s142 = int_to_ptr.hbm [resolvable:$true] %s141
      %s143 = sshll.u32 [#allocation8], 4
      %s144 = int_to_ptr.vmem [resolvable:$true] %s143
      %149 = dma.hbm_to_vmem [thread:$0]  %s142, 4096, %s144, [#allocation9], 128, 128, 8
    $region49: #{network_forward.1} parent=1 // pred_fallthru
      _
    // Predicated region
    $region50: #{network_forward.1} parent=1 // pred_check
      _
    $region51: #{network_forward.1} parent=1 // pred_check_branch
      %151 = sbr.rel (0) target = $region53
    $region52: #{network_forward.1} parent=1 // pred_region
      %153 = vsyncadd [#allocation9], 0
      %s155 = sshll.u32 %s25, 4
      %s156 = int_to_ptr.hbm [resolvable:$true] %s155
      %s157 = sshll.u32 [#allocation10], 4
      %s158 = int_to_ptr.vmem [resolvable:$true] %s157
      %160 = dma.hbm_to_vmem [thread:$0]  %s156, 16, %s158, [#allocation9]
    $region53: #{network_forward.1} parent=1 // pred_fallthru
      _
    // Predicated region
    $region54: #{network_forward.1} parent=1 // pred_check
      _
    $region55: #{network_forward.1} parent=1 // pred_check_branch
      %162 = sbr.rel (0) target = $region57
    $region56: #{network_forward.1} parent=1 // pred_region
      %164 = vsyncadd [#allocation12], 0
      %s166 = sshll.u32 %s27, 4
      %s167 = int_to_ptr.hbm [resolvable:$true] %s166
      %s168 = sshll.u32 [#allocation11], 4
      %s169 = int_to_ptr.vmem [resolvable:$true] %s168
      %171 = dma.hbm_to_vmem [thread:$0]  %s167, 128, %s169, [#allocation12]
    $region57: #{network_forward.1} parent=1 // pred_fallthru
      _
    // Predicated region
    $region58: #{network_forward.1} parent=1 // pred_check
      _
    $region59: #{network_forward.1} parent=1 // pred_check_branch
      %173 = sbr.rel (0) target = $region61
    $region60: #{network_forward.1} parent=1 // pred_region
      %175 = vsyncadd [#allocation12], 0
      %s177 = sshll.u32 %s29, 4
      %s178 = int_to_ptr.hbm [resolvable:$true] %s177
      %s179 = sshll.u32 [#allocation13], 4
      %s180 = int_to_ptr.vmem [resolvable:$true] %s179
      %182 = dma.hbm_to_vmem [thread:$0]  %s178, 128, %s180, [#allocation12]
    $region61: #{network_forward.1} parent=1 // pred_fallthru
      _
    // Predicated region
    $region62: #{network_forward.1} parent=1 // pred_check
      _
    $region63: #{network_forward.1} parent=1 // pred_check_branch
      %184 = sbr.rel (0) target = $region65
    $region64: #{network_forward.1} parent=1 // pred_region
      %186 = vsyncadd [#allocation15], 0
      %s187 = sshll.u32 %s31, 4
      %s188 = int_to_ptr.hbm [resolvable:$true] %s187
      %s189 = sshll.u32 [#allocation14], 4
      %s190 = int_to_ptr.vmem [resolvable:$true] %s189
      %195 = dma.hbm_to_vmem [thread:$0]  %s188, 768, %s190, [#allocation15], 128, 128, 8
    $region65: #{network_forward.1} parent=1 // pred_fallthru
      _
    // Predicated region
    $region66: #{network_forward.1} parent=1 // pred_check
      _
    $region67: #{network_forward.1} parent=1 // pred_check_branch
      %197 = sbr.rel (0) target = $region69
    $region68: #{network_forward.1} parent=1 // pred_region
      %199 = vsyncadd [#allocation15], 0
      %s200 = sshll.u32 %s33, 4
      %s201 = int_to_ptr.hbm [resolvable:$true] %s200
      %s202 = sshll.u32 [#allocation16], 4
      %s203 = int_to_ptr.vmem [resolvable:$true] %s202
      %208 = dma.hbm_to_vmem [thread:$0]  %s201, 256, %s203, [#allocation15], 128, 128, 8
    $region69: #{network_forward.1} parent=1 // pred_fallthru
      _
    // Predicated region
    $region70: #{network_forward.1} parent=1 // pred_check
      _
    $region71: #{network_forward.1} parent=1 // pred_check_branch
      %210 = sbr.rel (0) target = $region73
    $region72: #{network_forward.1} parent=1 // pred_region
      %212 = vsyncadd [#allocation18], 0
      %s213 = sshll.u32 %s35, 4
      %s214 = int_to_ptr.hbm [resolvable:$true] %s213
      %s215 = sshll.u32 [#allocation17], 4
      %s216 = int_to_ptr.vmem [resolvable:$true] %s215
      %221 = dma.hbm_to_vmem [thread:$0]  %s214, 34816, %s216, [#allocation18], 128, 128, 8
    $region73: #{network_forward.1} parent=1 // pred_fallthru
      _
    // Predicated region
    $region74: #{network_forward.1} parent=1 // pred_check
      _
    $region75: #{network_forward.1} parent=1 // pred_check_branch
      %223 = sbr.rel (0) target = $region77
    $region76: #{network_forward.1} parent=1 // pred_region
      %225 = vsyncadd [#allocation18], 0
      %s227 = sshll.u32 %s37, 4
      %s228 = int_to_ptr.hbm [resolvable:$true] %s227
      %s229 = sshll.u32 [#allocation19], 4
      %s230 = int_to_ptr.vmem [resolvable:$true] %s229
      %232 = dma.hbm_to_vmem [thread:$0]  %s228, 16, %s230, [#allocation18]
    $region77: #{network_forward.1} parent=1 // pred_fallthru
      _
    // Predicated region
    $region78: #{network_forward.1} parent=1 // pred_check
      _
    $region79: #{network_forward.1} parent=1 // pred_check_branch
      %234 = sbr.rel (0) target = $region81
    $region80: #{network_forward.1} parent=1 // pred_region
      %236 = vsyncadd [#allocation21], 0
      %s237 = sshll.u32 %s39, 4
      %s238 = int_to_ptr.hbm [resolvable:$true] %s237
      %s239 = sshll.u32 [#allocation20], 4
      %s240 = int_to_ptr.vmem [resolvable:$true] %s239
      %245 = dma.hbm_to_vmem [thread:$0]  %s238, 1280, %s240, [#allocation21], 256, 256, 16
    $region81: #{network_forward.1} parent=1 // pred_fallthru
      _
    // Predicated region
    $region82: #{network_forward.1} parent=1 // pred_check
      _
    $region83: #{network_forward.1} parent=1 // pred_check_branch
      %247 = sbr.rel (0) target = $region85
    $region84: #{network_forward.1} parent=1 // pred_region
      %249 = vsyncadd [#allocation21], 0
      %s251 = sshll.u32 %s41, 4
      %s252 = int_to_ptr.hbm [resolvable:$true] %s251
      %s253 = sshll.u32 [#allocation22], 4
      %s254 = int_to_ptr.vmem [resolvable:$true] %s253
      %256 = dma.hbm_to_vmem [thread:$0]  %s252, 32, %s254, [#allocation21]
    $region85: #{network_forward.1} parent=1 // pred_fallthru
      _
    // Predicated region
    $region86: #{network_forward.1} parent=1 // pred_check
      _
    $region87: #{network_forward.1} parent=1 // pred_check_branch
      %258 = sbr.rel (0) target = $region89
    $region88: #{network_forward.1} parent=1 // pred_region
      %260 = vsyncadd [#allocation24], 0
      %s261 = sshll.u32 %s43, 4
      %s262 = int_to_ptr.hbm [resolvable:$true] %s261
      %s263 = sshll.u32 [#allocation23], 4
      %s264 = int_to_ptr.vmem [resolvable:$true] %s263
      %269 = dma.hbm_to_vmem [thread:$0]  %s262, 2048, %s264, [#allocation24], 256, 256, 16
    $region89: #{network_forward.1} parent=1 // pred_fallthru
      _
    // Predicated region
    $region90: #{network_forward.1} parent=1 // pred_check
      _
    $region91: #{network_forward.1} parent=1 // pred_check_branch
      %271 = sbr.rel (0) target = $region93
    $region92: #{network_forward.1} parent=1 // pred_region
      %273 = vsyncadd [#allocation24], 0
      %s275 = sshll.u32 %s45, 4
      %s276 = int_to_ptr.hbm [resolvable:$true] %s275
      %s277 = sshll.u32 [#allocation25], 4
      %s278 = int_to_ptr.vmem [resolvable:$true] %s277
      %280 = dma.hbm_to_vmem [thread:$0]  %s276, 32, %s278, [#allocation24]
    $region93: #{network_forward.1} parent=1 // pred_fallthru
      _
    // Predicated region
    $region94: #{network_forward.1} parent=1 // pred_check
      _
    $region95: #{network_forward.1} parent=1 // pred_check_branch
      %282 = sbr.rel (0) target = $region97
    $region96: #{network_forward.1} parent=1 // pred_region
      %284 = vsyncadd [#allocation27], 0
      %s285 = sshll.u32 %s47, 4
      %s286 = int_to_ptr.hbm [resolvable:$true] %s285
      %s287 = sshll.u32 [#allocation26], 4
      %s288 = int_to_ptr.vmem [resolvable:$true] %s287
      %293 = dma.hbm_to_vmem [thread:$0]  %s286, 4096, %s288, [#allocation27], 128, 128, 8
    $region97: #{network_forward.1} parent=1 // pred_fallthru
      _
    // Predicated region
    $region98: #{network_forward.1} parent=1 // pred_check
      _
    $region99: #{network_forward.1} parent=1 // pred_check_branch
      %295 = sbr.rel (0) target = $region101
    $region100: #{network_forward.1} parent=1 // pred_region
      %297 = vsyncadd [#allocation27], 0
      %s299 = sshll.u32 %s49, 4
      %s300 = int_to_ptr.hbm [resolvable:$true] %s299
      %s301 = sshll.u32 [#allocation28], 4
      %s302 = int_to_ptr.vmem [resolvable:$true] %s301
      %304 = dma.hbm_to_vmem [thread:$0]  %s300, 16, %s302, [#allocation27]
    $region101: #{network_forward.1} parent=1 // pred_fallthru
      _
    // Predicated region
    $region102: #{network_forward.1} parent=1 // pred_check
      _
    $region103: #{network_forward.1} parent=1 // pred_check_branch
      %306 = sbr.rel (0) target = $region105
    $region104: #{network_forward.1} parent=1 // pred_region
      %308 = vsyncadd [#allocation30], 0
      %s309 = sshll.u32 %s51, 4
      %s310 = int_to_ptr.hbm [resolvable:$true] %s309
      %s311 = sshll.u32 [#allocation29], 4
      %s312 = int_to_ptr.vmem [resolvable:$true] %s311
      %317 = dma.hbm_to_vmem [thread:$0]  %s310, 4096, %s312, [#allocation30], 256, 256, 16
    $region105: #{network_forward.1} parent=1 // pred_fallthru
      _
    // Predicated region
    $region106: #{network_forward.1} parent=1 // pred_check
      _
    $region107: #{network_forward.1} parent=1 // pred_check_branch
      %319 = sbr.rel (0) target = $region109
    $region108: #{network_forward.1} parent=1 // pred_region
      %321 = vsyncadd [#allocation30], 0
      %s322 = sshll.u32 %s53, 4
      %s323 = int_to_ptr.hbm [resolvable:$true] %s322
      %s324 = sshll.u32 [#allocation31], 4
      %s325 = int_to_ptr.vmem [resolvable:$true] %s324
      %330 = dma.hbm_to_vmem [thread:$0]  %s323, 4096, %s325, [#allocation30], 256, 256, 16
    $region109: #{network_forward.1} parent=1 // pred_fallthru
      _
    // Predicated region
    $region110: #{network_forward.1} parent=1 // pred_check
      _
    $region111: #{network_forward.1} parent=1 // pred_check_branch
      %332 = sbr.rel (0) target = $region113
    $region112: #{network_forward.1} parent=1 // pred_region
      %334 = vsyncadd [#allocation33], 0
      %s335 = sshll.u32 %s55, 4
      %s336 = int_to_ptr.hbm [resolvable:$true] %s335
      %s337 = sshll.u32 [#allocation32], 4
      %s338 = int_to_ptr.vmem [resolvable:$true] %s337
      %343 = dma.hbm_to_vmem [thread:$0]  %s336, 4096, %s338, [#allocation33], 256, 256, 16
    $region113: #{network_forward.1} parent=1 // pred_fallthru
      _
    // Predicated region
    $region114: #{network_forward.1} parent=1 // pred_check
      _
    $region115: #{network_forward.1} parent=1 // pred_check_branch
      %345 = sbr.rel (0) target = $region117
    $region116: #{network_forward.1} parent=1 // pred_region
      %347 = vsyncadd [#allocation33], 0
      %s349 = sshll.u32 %s57, 4
      %s350 = int_to_ptr.hbm [resolvable:$true] %s349
      %s351 = sshll.u32 [#allocation34], 4
      %s352 = int_to_ptr.vmem [resolvable:$true] %s351
      %354 = dma.hbm_to_vmem [thread:$0]  %s350, 32, %s352, [#allocation33]
    $region117: #{network_forward.1} parent=1 // pred_fallthru
      _
    // Predicated region
    $region118: #{network_forward.1} parent=1 // pred_check
      _
    $region119: #{network_forward.1} parent=1 // pred_check_branch
      %356 = sbr.rel (0) target = $region121
    $region120: #{network_forward.1} parent=1 // pred_region
      %358 = vsyncadd [#allocation36], 0
      %s359 = sshll.u32 %s59, 4
      %s360 = int_to_ptr.hbm [resolvable:$true] %s359
      %s361 = sshll.u32 [#allocation35], 4
      %s362 = int_to_ptr.vmem [resolvable:$true] %s361
      %367 = dma.hbm_to_vmem [thread:$0]  %s360, 4096, %s362, [#allocation36], 128, 128, 8
    $region121: #{network_forward.1} parent=1 // pred_fallthru
      _
    // Predicated region
    $region122: #{network_forward.1} parent=1 // pred_check
      _
    $region123: #{network_forward.1} parent=1 // pred_check_branch
      %369 = sbr.rel (0) target = $region125
    $region124: #{network_forward.1} parent=1 // pred_region
      %371 = vsyncadd [#allocation36], 0
      %s373 = sshll.u32 %s61, 4
      %s374 = int_to_ptr.hbm [resolvable:$true] %s373
      %s375 = sshll.u32 [#allocation37], 4
      %s376 = int_to_ptr.vmem [resolvable:$true] %s375
      %378 = dma.hbm_to_vmem [thread:$0]  %s374, 16, %s376, [#allocation36]
    $region125: #{network_forward.1} parent=1 // pred_fallthru
      _
    // Predicated region
    $region126: #{network_forward.1} parent=1 // pred_check
      _
    $region127: #{network_forward.1} parent=1 // pred_check_branch
      %380 = sbr.rel (0) target = $region129
    $region128: #{network_forward.1} parent=1 // pred_region
      %382 = vsyncadd [#allocation39], 0
      %s383 = sshll.u32 %s63, 4
      %s384 = int_to_ptr.hbm [resolvable:$true] %s383
      %s385 = sshll.u32 [#allocation38], 4
      %s386 = int_to_ptr.vmem [resolvable:$true] %s385
      %391 = dma.hbm_to_vmem [thread:$0]  %s384, 1024, %s386, [#allocation39], 128, 128, 8
    $region129: #{network_forward.1} parent=1 // pred_fallthru
      _
    // Predicated region
    $region130: #{network_forward.1} parent=1 // pred_check
      _
    $region131: #{network_forward.1} parent=1 // pred_check_branch
      %393 = sbr.rel (0) target = $region133
    $region132: #{network_forward.1} parent=1 // pred_region
      %395 = vsyncadd [#allocation39], 0
      %s397 = sshll.u32 %s65, 4
      %s398 = int_to_ptr.hbm [resolvable:$true] %s397
      %s399 = sshll.u32 [#allocation40], 4
      %s400 = int_to_ptr.vmem [resolvable:$true] %s399
      %402 = dma.hbm_to_vmem [thread:$0]  %s398, 16, %s400, [#allocation39]
    $region133: #{network_forward.1} parent=1 // pred_fallthru
      _
    // Predicated region
    $region134: #{network_forward.1} parent=1 // pred_check
      _
    $region135: #{network_forward.1} parent=1 // pred_check_branch
      %404 = sbr.rel (0) target = $region137
    $region136: #{network_forward.1} parent=1 // pred_region
      %406 = dma.done [#allocation3], 32
    $region137: #{network_forward.1} parent=1 // pred_fallthru
      _
    // Predicated region
    $region138: #{network_forward.1} parent=1 // pred_check
      _
    $region139: #{network_forward.1} parent=1 // pred_check_branch
      %408 = sbr.rel (0) target = $region141
    $region140: #{network_forward.1} parent=1 // pred_region
      %410 = dma.done [#allocation6], 1024
    $region141: #{network_forward.1} parent=1 // pred_fallthru
      _
    // Predicated region
    $region142: #{network_forward.1} parent=1 // pred_check
      _
    $region143: #{network_forward.1} parent=1 // pred_check_branch
      %412 = sbr.rel (0) target = $region145
    $region144: #{network_forward.1} parent=1 // pred_region
      %414 = dma.done [#allocation6], 32
    $region145: #{network_forward.1} parent=1 // pred_fallthru
      _
    // Predicated region
    $region146: #{network_forward.1} parent=1 // pred_check
      _
    $region147: #{network_forward.1} parent=1 // pred_check_branch
      %416 = sbr.rel (0) target = $region149
    $region148: #{network_forward.1} parent=1 // pred_region
      %418 = dma.done [#allocation9], 4096
    $region149: #{network_forward.1} parent=1 // pred_fallthru
      _
    // Predicated region
    $region150: #{network_forward.1} parent=1 // pred_check
      _
    $region151: #{network_forward.1} parent=1 // pred_check_branch
      %420 = sbr.rel (0) target = $region153
    $region152: #{network_forward.1} parent=1 // pred_region
      %422 = dma.done [#allocation9], 16
    $region153: #{network_forward.1} parent=1 // pred_fallthru
      _
    // Predicated region
    $region154: #{network_forward.1} parent=1 // pred_check
      _
    $region155: #{network_forward.1} parent=1 // pred_check_branch
      %424 = sbr.rel (0) target = $region157
    $region156: #{network_forward.1} parent=1 // pred_region
      %426 = dma.done [#allocation12], 128
    $region157: #{network_forward.1} parent=1 // pred_fallthru
      _
    // Predicated region
    $region158: #{network_forward.1} parent=1 // pred_check
      _
    $region159: #{network_forward.1} parent=1 // pred_check_branch
      %428 = sbr.rel (0) target = $region161
    $region160: #{network_forward.1} parent=1 // pred_region
      %430 = dma.done [#allocation12], 128
    $region161: #{network_forward.1} parent=1 // pred_fallthru
      _
    // Predicated region
    $region162: #{network_forward.1} parent=1 // pred_check
      _
    $region163: #{network_forward.1} parent=1 // pred_check_branch
      %432 = sbr.rel (0) target = $region165
    $region164: #{network_forward.1} parent=1 // pred_region
      %434 = dma.done [#allocation15], 768
    $region165: #{network_forward.1} parent=1 // pred_fallthru
      _
    // Predicated region
    $region166: #{network_forward.1} parent=1 // pred_check
      _
    $region167: #{network_forward.1} parent=1 // pred_check_branch
      %436 = sbr.rel (0) target = $region169
    $region168: #{network_forward.1} parent=1 // pred_region
      %438 = dma.done [#allocation15], 256
    $region169: #{network_forward.1} parent=1 // pred_fallthru
      _
    // Predicated region
    $region170: #{network_forward.1} parent=1 // pred_check
      _
    $region171: #{network_forward.1} parent=1 // pred_check_branch
      %440 = sbr.rel (0) target = $region173
    $region172: #{network_forward.1} parent=1 // pred_region
      %442 = dma.done [#allocation18], 34816
    $region173: #{network_forward.1} parent=1 // pred_fallthru
      _
    // Predicated region
    $region174: #{network_forward.1} parent=1 // pred_check
      _
    $region175: #{network_forward.1} parent=1 // pred_check_branch
      %444 = sbr.rel (0) target = $region177
    $region176: #{network_forward.1} parent=1 // pred_region
      %446 = dma.done [#allocation18], 16
    $region177: #{network_forward.1} parent=1 // pred_fallthru
      _
    // Predicated region
    $region178: #{network_forward.1} parent=1 // pred_check
      _
    $region179: #{network_forward.1} parent=1 // pred_check_branch
      %448 = sbr.rel (0) target = $region181
    $region180: #{network_forward.1} parent=1 // pred_region
      %450 = dma.done [#allocation21], 1280
    $region181: #{network_forward.1} parent=1 // pred_fallthru
      _
    // Predicated region
    $region182: #{network_forward.1} parent=1 // pred_check
      _
    $region183: #{network_forward.1} parent=1 // pred_check_branch
      %452 = sbr.rel (0) target = $region185
    $region184: #{network_forward.1} parent=1 // pred_region
      %454 = dma.done [#allocation21], 32
    $region185: #{network_forward.1} parent=1 // pred_fallthru
      _
    // Predicated region
    $region186: #{network_forward.1} parent=1 // pred_check
      _
    $region187: #{network_forward.1} parent=1 // pred_check_branch
      %456 = sbr.rel (0) target = $region189
    $region188: #{network_forward.1} parent=1 // pred_region
      %458 = dma.done [#allocation24], 2048
    $region189: #{network_forward.1} parent=1 // pred_fallthru
      _
    // Predicated region
    $region190: #{network_forward.1} parent=1 // pred_check
      _
    $region191: #{network_forward.1} parent=1 // pred_check_branch
      %460 = sbr.rel (0) target = $region193
    $region192: #{network_forward.1} parent=1 // pred_region
      %462 = dma.done [#allocation24], 32
    $region193: #{network_forward.1} parent=1 // pred_fallthru
      _
    // Predicated region
    $region194: #{network_forward.1} parent=1 // pred_check
      _
    $region195: #{network_forward.1} parent=1 // pred_check_branch
      %464 = sbr.rel (0) target = $region197
    $region196: #{network_forward.1} parent=1 // pred_region
      %466 = dma.done [#allocation27], 4096
    $region197: #{network_forward.1} parent=1 // pred_fallthru
      _
    // Predicated region
    $region198: #{network_forward.1} parent=1 // pred_check
      _
    $region199: #{network_forward.1} parent=1 // pred_check_branch
      %468 = sbr.rel (0) target = $region201
    $region200: #{network_forward.1} parent=1 // pred_region
      %470 = dma.done [#allocation27], 16
    $region201: #{network_forward.1} parent=1 // pred_fallthru
      _
    // Predicated region
    $region202: #{network_forward.1} parent=1 // pred_check
      _
    $region203: #{network_forward.1} parent=1 // pred_check_branch
      %472 = sbr.rel (0) target = $region205
    $region204: #{network_forward.1} parent=1 // pred_region
      %474 = dma.done [#allocation30], 4096
    $region205: #{network_forward.1} parent=1 // pred_fallthru
      _
    // Predicated region
    $region206: #{network_forward.1} parent=1 // pred_check
      _
    $region207: #{network_forward.1} parent=1 // pred_check_branch
      %476 = sbr.rel (0) target = $region209
    $region208: #{network_forward.1} parent=1 // pred_region
      %478 = dma.done [#allocation30], 4096
    $region209: #{network_forward.1} parent=1 // pred_fallthru
      _
    // Predicated region
    $region210: #{network_forward.1} parent=1 // pred_check
      _
    $region211: #{network_forward.1} parent=1 // pred_check_branch
      %480 = sbr.rel (0) target = $region213
    $region212: #{network_forward.1} parent=1 // pred_region
      %482 = dma.done [#allocation33], 4096
    $region213: #{network_forward.1} parent=1 // pred_fallthru
      _
    // Predicated region
    $region214: #{network_forward.1} parent=1 // pred_check
      _
    $region215: #{network_forward.1} parent=1 // pred_check_branch
      %484 = sbr.rel (0) target = $region217
    $region216: #{network_forward.1} parent=1 // pred_region
      %486 = dma.done [#allocation33], 32
    $region217: #{network_forward.1} parent=1 // pred_fallthru
      _
    // Predicated region
    $region218: #{network_forward.1} parent=1 // pred_check
      _
    $region219: #{network_forward.1} parent=1 // pred_check_branch
      %488 = sbr.rel (0) target = $region221
    $region220: #{network_forward.1} parent=1 // pred_region
      %490 = dma.done [#allocation36], 4096
    $region221: #{network_forward.1} parent=1 // pred_fallthru
      _
    // Predicated region
    $region222: #{network_forward.1} parent=1 // pred_check
      _
    $region223: #{network_forward.1} parent=1 // pred_check_branch
      %492 = sbr.rel (0) target = $region225
    $region224: #{network_forward.1} parent=1 // pred_region
      %494 = dma.done [#allocation36], 16
    $region225: #{network_forward.1} parent=1 // pred_fallthru
      _
    // Predicated region
    $region226: #{network_forward.1} parent=1 // pred_check
      _
    $region227: #{network_forward.1} parent=1 // pred_check_branch
      %496 = sbr.rel (0) target = $region229
    $region228: #{network_forward.1} parent=1 // pred_region
      %498 = dma.done [#allocation39], 1024
    $region229: #{network_forward.1} parent=1 // pred_fallthru
      _
    // Predicated region
    $region230: #{network_forward.1} parent=1 // pred_check
      _
    $region231: #{network_forward.1} parent=1 // pred_check_branch
      %500 = sbr.rel (0) target = $region233
    $region232: #{network_forward.1} parent=1 // pred_region
      %502 = dma.done [#allocation39], 16
    $region233: #{network_forward.1} parent=1 // pred_fallthru
      _
    %v503 = vld [vmem:[#allocation2] sm:$0x3]
    %v504 = vld [vmem:[#allocation5] sm:$0xff]
    %v505 = vld [vmem:[#allocation5 + $0x8] sm:$0xff]
    %v506 = vld [vmem:[#allocation5 + $0x10] sm:$0xff]
    %v507 = vld [vmem:[#allocation5 + $0x18] sm:$0xff]
    %v508 = vld [vmem:[#allocation5 + $0x20] sm:$0xff]
    %v509 = vld [vmem:[#allocation5 + $0x28] sm:$0xff]
    %v510 = vld [vmem:[#allocation5 + $0x30] sm:$0xff]
    %v511 = vld [vmem:[#allocation5 + $0x38] sm:$0xff]
    %v512 = vld [vmem:[#allocation7] sm:$0x3]
    %v514 = vperm.slane %v512, 0
    %v515 = vperm.slane %v512, 1
    %vm518 = vcmask 261120
    %v520 = vsel %vm518, %v503, 0
    %522 = vmatpush.msra.mxu0 0.0
    %523 = vmatpush.msra.mxu0 0.0
    %524 = vmatpush.msra.mxu0 0.0
    %525 = vmatpush.msra.mxu0 0.0
    %526 = vmatpush.msra.mxu0 0.0
    %527 = vmatpush.msra.mxu0 0.0
    %528 = vmatpush.msra.mxu0 0.0
    %529 = vmatpush.msra.mxu0 0.0
    %530 = vmatpush.msra.mxu0 0.0
    %531 = vmatpush.msra.mxu0 0.0
    %532 = vmatpush.msra.mxu0 0.0
    %533 = vmatpush.msra.mxu0 0.0
    %534 = vmatpush.msra.mxu0 %v510
    %535 = vmatpush.msra.mxu0 %v508
    %536 = vmatpush.msra.mxu0 %v506
    %537 = vmatpush.msra.mxu0 %v504
    %538 = vmatmul.f32.gmra.mxu0 %v520
    %v539 = vpop.f32.mrf.mxu0
    %v540 = vadd.f32 %v514, %v539
    %541 = vdwg.mxu0
    %542 = vmatpush.msra.mxu0 0.0
    %543 = vmatpush.msra.mxu0 0.0
    %544 = vmatpush.msra.mxu0 0.0
    %545 = vmatpush.msra.mxu0 0.0
    %546 = vmatpush.msra.mxu0 0.0
    %547 = vmatpush.msra.mxu0 0.0
    %548 = vmatpush.msra.mxu0 0.0
    %549 = vmatpush.msra.mxu0 0.0
    %550 = vmatpush.msra.mxu0 0.0
    %551 = vmatpush.msra.mxu0 0.0
    %552 = vmatpush.msra.mxu0 0.0
    %553 = vmatpush.msra.mxu0 0.0
    %554 = vmatpush.msra.mxu0 %v511
    %555 = vmatpush.msra.mxu0 %v509
    %556 = vmatpush.msra.mxu0 %v507
    %557 = vmatpush.msra.mxu0 %v505
    %558 = vmatmul.f32.gmra.mxu0 %v520
    %v559 = vpop.f32.mrf.mxu0
    %v560 = vadd.f32 %v515, %v559
    %561 = vdwg.mxu0
    %v562 = vmax.f32 %v540, 0.0
    %v563 = vmax.f32 %v560, 0.0
    %v564 = vld [vmem:[#allocation8] sm:$0xff]
    %v565 = vld [vmem:[#allocation8 + $0x8] sm:$0xff]
    %v566 = vld [vmem:[#allocation8 + $0x10] sm:$0xff]
    %v567 = vld [vmem:[#allocation8 + $0x18] sm:$0xff]
    %v568 = vld [vmem:[#allocation8 + $0x20] sm:$0xff]
    %v569 = vld [vmem:[#allocation8 + $0x28] sm:$0xff]
    %v570 = vld [vmem:[#allocation8 + $0x30] sm:$0xff]
    %v571 = vld [vmem:[#allocation8 + $0x38] sm:$0xff]
    %v572 = vld [vmem:[#allocation8 + $0x40] sm:$0xff]
    %v573 = vld [vmem:[#allocation8 + $0x48] sm:$0xff]
    %v574 = vld [vmem:[#allocation8 + $0x50] sm:$0xff]
    %v575 = vld [vmem:[#allocation8 + $0x58] sm:$0xff]
    %v576 = vld [vmem:[#allocation8 + $0x60] sm:$0xff]
    %v577 = vld [vmem:[#allocation8 + $0x68] sm:$0xff]
    %v578 = vld [vmem:[#allocation8 + $0x70] sm:$0xff]
    %v579 = vld [vmem:[#allocation8 + $0x78] sm:$0xff]
    %v580 = vld [vmem:[#allocation8 + $0x80] sm:$0xff]
    %v581 = vld [vmem:[#allocation8 + $0x88] sm:$0xff]
    %v582 = vld [vmem:[#allocation8 + $0x90] sm:$0xff]
    %v583 = vld [vmem:[#allocation8 + $0x98] sm:$0xff]
    %v584 = vld [vmem:[#allocation8 + $0xa0] sm:$0xff]
    %v585 = vld [vmem:[#allocation8 + $0xa8] sm:$0xff]
    %v586 = vld [vmem:[#allocation8 + $0xb0] sm:$0xff]
    %v587 = vld [vmem:[#allocation8 + $0xb8] sm:$0xff]
    %v588 = vld [vmem:[#allocation8 + $0xc0] sm:$0xff]
    %v589 = vld [vmem:[#allocation8 + $0xc8] sm:$0xff]
    %v590 = vld [vmem:[#allocation8 + $0xd0] sm:$0xff]
    %v591 = vld [vmem:[#allocation8 + $0xd8] sm:$0xff]
    %v592 = vld [vmem:[#allocation8 + $0xe0] sm:$0xff]
    %v593 = vld [vmem:[#allocation8 + $0xe8] sm:$0xff]
    %v594 = vld [vmem:[#allocation8 + $0xf0] sm:$0xff]
    %v595 = vld [vmem:[#allocation8 + $0xf8] sm:$0xff]
    %v596 = vld [vmem:[#allocation10] sm:$0x1]
    %v598 = vperm.slane %v596, 0
    %600 = vmatpush.msra.mxu0 %v579
    %601 = vmatpush.msra.mxu0 %v578
    %602 = vmatpush.msra.mxu0 %v577
    %603 = vmatpush.msra.mxu0 %v576
    %604 = vmatpush.msra.mxu0 %v575
    %605 = vmatpush.msra.mxu0 %v574
    %606 = vmatpush.msra.mxu0 %v573
    %607 = vmatpush.msra.mxu0 %v572
    %608 = vmatpush.msra.mxu0 %v571
    %609 = vmatpush.msra.mxu0 %v570
    %610 = vmatpush.msra.mxu0 %v569
    %611 = vmatpush.msra.mxu0 %v568
    %612 = vmatpush.msra.mxu0 %v567
    %613 = vmatpush.msra.mxu0 %v566
    %614 = vmatpush.msra.mxu0 %v565
    %615 = vmatpush.msra.mxu0 %v564
    %616 = vmatmul.f32.gmra.mxu0 %v562
    %v617 = vpop.f32.mrf.mxu0
    %v618 = vadd.f32 %v598, %v617
    %619 = vdwg.mxu0
    %620 = vmatpush.msra.mxu0 %v595
    %621 = vmatpush.msra.mxu0 %v594
    %622 = vmatpush.msra.mxu0 %v593
    %623 = vmatpush.msra.mxu0 %v592
    %624 = vmatpush.msra.mxu0 %v591
    %625 = vmatpush.msra.mxu0 %v590
    %626 = vmatpush.msra.mxu0 %v589
    %627 = vmatpush.msra.mxu0 %v588
    %628 = vmatpush.msra.mxu0 %v587
    %629 = vmatpush.msra.mxu0 %v586
    %630 = vmatpush.msra.mxu0 %v585
    %631 = vmatpush.msra.mxu0 %v584
    %632 = vmatpush.msra.mxu0 %v583
    %633 = vmatpush.msra.mxu0 %v582
    %634 = vmatpush.msra.mxu0 %v581
    %635 = vmatpush.msra.mxu0 %v580
    %636 = vmatmul.f32.gmra.mxu0 %v563
    %v637 = vpop.f32.mrf.mxu0
    %v638 = vadd.f32 %v618, %v637
    %639 = vdwg.mxu0
    %v640 = vld [vmem:[#allocation11] sm:$0xff]
    %v641 = vld [vmem:[#allocation13] sm:$0xff]
    %v642 = vld [vmem:[%s3] sm:$0x77]
    %v643 = vld [vmem:[%s3 + $0x8] sm:$0x77]
    %645 = vset.pattern.permute.xlu0 0
    %646 = vperm.xlu0 %645, %v641
    %v647 = vpop.permute.xlu0 %646
    %651 = vst [vmem:[#allocation1] ss:$2 sm:$0xff] %v642
    %s652 = scalar_lea.vmem [#allocation1], 16
    %653 = vst [vmem:[%s652] ss:$2 sm:$0xff] %v643
    %v654 = vld.sshfl [vmem:[#allocation1] sm:$0xff pattern:$0x75316420]
    %v655 = vld.sshfl [vmem:[#allocation1 + $0x8] sm:$0xff pattern:$0x75316420]
    %v656 = vld.sshfl [vmem:[#allocation1 + $0x10] sm:$0xff pattern:$0x75316420]
    %v657 = vld.sshfl [vmem:[#allocation1 + $0x18] sm:$0xff pattern:$0x75316420]
    %vm658 = vcmask 23552
    %v660 = vsel %vm658, %v640, 0
    %vm662 = vcmask 1042432
    %v663 = vsel %vm662, %v654, 0
    %v665 = vsel %vm662, %v655, 0
    %v667 = vsel %vm662, %v656, 0
    %v669 = vsel %vm662, %v657, 0
    %671 = vmatpush.msra.mxu0 0.0
    %672 = vmatpush.msra.mxu0 0.0
    %673 = vmatpush.msra.mxu0 0.0
    %674 = vmatpush.msra.mxu0 0.0
    %675 = vmatpush.msra.mxu0 0.0
    %676 = vmatpush.msra.mxu0 0.0
    %677 = vmatpush.msra.mxu0 0.0
    %678 = vmatpush.msra.mxu0 0.0
    %679 = vmatpush.msra.mxu0 0.0
    %680 = vmatpush.msra.mxu0 0.0
    %681 = vmatpush.msra.mxu0 0.0
    %682 = vmatpush.msra.mxu0 0.0
    %683 = vmatpush.msra.mxu0 0.0
    %684 = vmatpush.msra.mxu0 0.0
    %685 = vmatpush.msra.mxu0 0.0
    %686 = vmatpush.msra.mxu0 %v663
    %687 = vmatmul.f32.gmra.mxu0 %v660
    %v688 = vpop.f32.mrf.mxu0
    %v689 = vadd.f32 %v647, %v688
    %690 = vdwg.mxu0
    %691 = vmatpush.msra.mxu0 0.0
    %692 = vmatpush.msra.mxu0 0.0
    %693 = vmatpush.msra.mxu0 0.0
    %694 = vmatpush.msra.mxu0 0.0
    %695 = vmatpush.msra.mxu0 0.0
    %696 = vmatpush.msra.mxu0 0.0
    %697 = vmatpush.msra.mxu0 0.0
    %698 = vmatpush.msra.mxu0 0.0
    %699 = vmatpush.msra.mxu0 0.0
    %700 = vmatpush.msra.mxu0 0.0
    %701 = vmatpush.msra.mxu0 0.0
    %702 = vmatpush.msra.mxu0 0.0
    %703 = vmatpush.msra.mxu0 0.0
    %704 = vmatpush.msra.mxu0 0.0
    %705 = vmatpush.msra.mxu0 0.0
    %706 = vmatpush.msra.mxu0 %v665
    %707 = vmatmul.f32.gmra.mxu0 %v660
    %v708 = vpop.f32.mrf.mxu0
    %v709 = vadd.f32 %v647, %v708
    %710 = vdwg.mxu0
    %711 = vmatpush.msra.mxu0 0.0
    %712 = vmatpush.msra.mxu0 0.0
    %713 = vmatpush.msra.mxu0 0.0
    %714 = vmatpush.msra.mxu0 0.0
    %715 = vmatpush.msra.mxu0 0.0
    %716 = vmatpush.msra.mxu0 0.0
    %717 = vmatpush.msra.mxu0 0.0
    %718 = vmatpush.msra.mxu0 0.0
    %719 = vmatpush.msra.mxu0 0.0
    %720 = vmatpush.msra.mxu0 0.0
    %721 = vmatpush.msra.mxu0 0.0
    %722 = vmatpush.msra.mxu0 0.0
    %723 = vmatpush.msra.mxu0 0.0
    %724 = vmatpush.msra.mxu0 0.0
    %725 = vmatpush.msra.mxu0 0.0
    %726 = vmatpush.msra.mxu0 %v667
    %727 = vmatmul.f32.gmra.mxu0 %v660
    %v728 = vpop.f32.mrf.mxu0
    %v729 = vadd.f32 %v647, %v728
    %730 = vdwg.mxu0
    %731 = vmatpush.msra.mxu0 0.0
    %732 = vmatpush.msra.mxu0 0.0
    %733 = vmatpush.msra.mxu0 0.0
    %734 = vmatpush.msra.mxu0 0.0
    %735 = vmatpush.msra.mxu0 0.0
    %736 = vmatpush.msra.mxu0 0.0
    %737 = vmatpush.msra.mxu0 0.0
    %738 = vmatpush.msra.mxu0 0.0
    %739 = vmatpush.msra.mxu0 0.0
    %740 = vmatpush.msra.mxu0 0.0
    %741 = vmatpush.msra.mxu0 0.0
    %742 = vmatpush.msra.mxu0 0.0
    %743 = vmatpush.msra.mxu0 0.0
    %744 = vmatpush.msra.mxu0 0.0
    %745 = vmatpush.msra.mxu0 0.0
    %746 = vmatpush.msra.mxu0 %v669
    %747 = vmatmul.f32.gmra.mxu0 %v660
    %v748 = vpop.f32.mrf.mxu0
    %v749 = vadd.f32 %v647, %v748
    %750 = vdwg.mxu0
    %v751 = vmax.f32 %v689, 0.0
    %v752 = vmax.f32 %v709, 0.0
    %v753 = vmax.f32 %v729, 0.0
    %v754 = vmax.f32 %v749, 0.0
    %v755 = vld [vmem:[%s9] sm:$0xf]
    %v757 = vperm.slane %v755, 0
    %v758 = vperm.slane %v755, 1
    %v759 = vperm.slane %v755, 2
    %v760 = vperm.slane %v755, 3
    %v765 = vmul.f32 %v751, %v757
    %v766 = vmul.f32 %v752, %v758
    %v767 = vmul.f32 %v753, %v759
    %v768 = vmul.f32 %v754, %v760
    %v769 = vld [vmem:[%s5] sm:$0x77]
    %v770 = vld [vmem:[%s5 + $0x8] sm:$0x77]
    %773 = vst [vmem:[#allocation1] ss:$2 sm:$0xff] %v769
    %s774 = scalar_lea.vmem [#allocation1], 16
    %775 = vst [vmem:[%s774] ss:$2 sm:$0xff] %v770
    %v776 = vld.sshfl [vmem:[#allocation1] sm:$0xff pattern:$0x75316420]
    %v777 = vld.sshfl [vmem:[#allocation1 + $0x8] sm:$0xff pattern:$0x75316420]
    %v778 = vld.sshfl [vmem:[#allocation1 + $0x10] sm:$0xff pattern:$0x75316420]
    %v779 = vld.sshfl [vmem:[#allocation1 + $0x18] sm:$0xff pattern:$0x75316420]
    %v780 = vsel %vm662, %v776, 0
    %v782 = vsel %vm662, %v777, 0
    %v784 = vsel %vm662, %v778, 0
    %v786 = vsel %vm662, %v779, 0
    %788 = vmatpush.msra.mxu0 0.0
    %789 = vmatpush.msra.mxu0 0.0
    %790 = vmatpush.msra.mxu0 0.0
    %791 = vmatpush.msra.mxu0 0.0
    %792 = vmatpush.msra.mxu0 0.0
    %793 = vmatpush.msra.mxu0 0.0
    %794 = vmatpush.msra.mxu0 0.0
    %795 = vmatpush.msra.mxu0 0.0
    %796 = vmatpush.msra.mxu0 0.0
    %797 = vmatpush.msra.mxu0 0.0
    %798 = vmatpush.msra.mxu0 0.0
    %799 = vmatpush.msra.mxu0 0.0
    %800 = vmatpush.msra.mxu0 0.0
    %801 = vmatpush.msra.mxu0 0.0
    %802 = vmatpush.msra.mxu0 0.0
    %803 = vmatpush.msra.mxu0 %v780
    %804 = vmatmul.f32.gmra.mxu0 %v660
    %v805 = vpop.f32.mrf.mxu0
    %v806 = vadd.f32 %v647, %v805
    %807 = vdwg.mxu0
    %808 = vmatpush.msra.mxu0 0.0
    %809 = vmatpush.msra.mxu0 0.0
    %810 = vmatpush.msra.mxu0 0.0
    %811 = vmatpush.msra.mxu0 0.0
    %812 = vmatpush.msra.mxu0 0.0
    %813 = vmatpush.msra.mxu0 0.0
    %814 = vmatpush.msra.mxu0 0.0
    %815 = vmatpush.msra.mxu0 0.0
    %816 = vmatpush.msra.mxu0 0.0
    %817 = vmatpush.msra.mxu0 0.0
    %818 = vmatpush.msra.mxu0 0.0
    %819 = vmatpush.msra.mxu0 0.0
    %820 = vmatpush.msra.mxu0 0.0
    %821 = vmatpush.msra.mxu0 0.0
    %822 = vmatpush.msra.mxu0 0.0
    %823 = vmatpush.msra.mxu0 %v782
    %824 = vmatmul.f32.gmra.mxu0 %v660
    %v825 = vpop.f32.mrf.mxu0
    %v826 = vadd.f32 %v647, %v825
    %827 = vdwg.mxu0
    %828 = vmatpush.msra.mxu0 0.0
    %829 = vmatpush.msra.mxu0 0.0
    %830 = vmatpush.msra.mxu0 0.0
    %831 = vmatpush.msra.mxu0 0.0
    %832 = vmatpush.msra.mxu0 0.0
    %833 = vmatpush.msra.mxu0 0.0
    %834 = vmatpush.msra.mxu0 0.0
    %835 = vmatpush.msra.mxu0 0.0
    %836 = vmatpush.msra.mxu0 0.0
    %837 = vmatpush.msra.mxu0 0.0
    %838 = vmatpush.msra.mxu0 0.0
    %839 = vmatpush.msra.mxu0 0.0
    %840 = vmatpush.msra.mxu0 0.0
    %841 = vmatpush.msra.mxu0 0.0
    %842 = vmatpush.msra.mxu0 0.0
    %843 = vmatpush.msra.mxu0 %v784
    %844 = vmatmul.f32.gmra.mxu0 %v660
    %v845 = vpop.f32.mrf.mxu0
    %v846 = vadd.f32 %v647, %v845
    %847 = vdwg.mxu0
    %848 = vmatpush.msra.mxu0 0.0
    %849 = vmatpush.msra.mxu0 0.0
    %850 = vmatpush.msra.mxu0 0.0
    %851 = vmatpush.msra.mxu0 0.0
    %852 = vmatpush.msra.mxu0 0.0
    %853 = vmatpush.msra.mxu0 0.0
    %854 = vmatpush.msra.mxu0 0.0
    %855 = vmatpush.msra.mxu0 0.0
    %856 = vmatpush.msra.mxu0 0.0
    %857 = vmatpush.msra.mxu0 0.0
    %858 = vmatpush.msra.mxu0 0.0
    %859 = vmatpush.msra.mxu0 0.0
    %860 = vmatpush.msra.mxu0 0.0
    %861 = vmatpush.msra.mxu0 0.0
    %862 = vmatpush.msra.mxu0 0.0
    %863 = vmatpush.msra.mxu0 %v786
    %864 = vmatmul.f32.gmra.mxu0 %v660
    %v865 = vpop.f32.mrf.mxu0
    %v866 = vadd.f32 %v647, %v865
    %867 = vdwg.mxu0
    %v868 = vmax.f32 %v806, 0.0
    %v869 = vmax.f32 %v826, 0.0
    %v870 = vmax.f32 %v846, 0.0
    %v871 = vmax.f32 %v866, 0.0
    %v872 = vld [vmem:[%s7] sm:$0x77]
    %v873 = vld [vmem:[%s7 + $0x8] sm:$0x77]
    %876 = vst [vmem:[#allocation1] ss:$2 sm:$0xff] %v872
    %s877 = scalar_lea.vmem [#allocation1], 16
    %878 = vst [vmem:[%s877] ss:$2 sm:$0xff] %v873
    %v879 = vld.sshfl [vmem:[#allocation1] sm:$0xff pattern:$0x75316420]
    %v880 = vld.sshfl [vmem:[#allocation1 + $0x8] sm:$0xff pattern:$0x75316420]
    %v881 = vld.sshfl [vmem:[#allocation1 + $0x10] sm:$0xff pattern:$0x75316420]
    %v882 = vld.sshfl [vmem:[#allocation1 + $0x18] sm:$0xff pattern:$0x75316420]
    %v883 = vsel %vm662, %v879, 0
    %v885 = vsel %vm662, %v880, 0
    %v887 = vsel %vm662, %v881, 0
    %v889 = vsel %vm662, %v882, 0
    %891 = vmatpush.msra.mxu0 0.0
    %892 = vmatpush.msra.mxu0 0.0
    %893 = vmatpush.msra.mxu0 0.0
    %894 = vmatpush.msra.mxu0 0.0
    %895 = vmatpush.msra.mxu0 0.0
    %896 = vmatpush.msra.mxu0 0.0
    %897 = vmatpush.msra.mxu0 0.0
    %898 = vmatpush.msra.mxu0 0.0
    %899 = vmatpush.msra.mxu0 0.0
    %900 = vmatpush.msra.mxu0 0.0
    %901 = vmatpush.msra.mxu0 0.0
    %902 = vmatpush.msra.mxu0 0.0
    %903 = vmatpush.msra.mxu0 0.0
    %904 = vmatpush.msra.mxu0 0.0
    %905 = vmatpush.msra.mxu0 0.0
    %906 = vmatpush.msra.mxu0 %v883
    %907 = vmatmul.f32.gmra.mxu0 %v660
    %v908 = vpop.f32.mrf.mxu0
    %v909 = vadd.f32 %v647, %v908
    %910 = vdwg.mxu0
    %911 = vmatpush.msra.mxu0 0.0
    %912 = vmatpush.msra.mxu0 0.0
    %913 = vmatpush.msra.mxu0 0.0
    %914 = vmatpush.msra.mxu0 0.0
    %915 = vmatpush.msra.mxu0 0.0
    %916 = vmatpush.msra.mxu0 0.0
    %917 = vmatpush.msra.mxu0 0.0
    %918 = vmatpush.msra.mxu0 0.0
    %919 = vmatpush.msra.mxu0 0.0
    %920 = vmatpush.msra.mxu0 0.0
    %921 = vmatpush.msra.mxu0 0.0
    %922 = vmatpush.msra.mxu0 0.0
    %923 = vmatpush.msra.mxu0 0.0
    %924 = vmatpush.msra.mxu0 0.0
    %925 = vmatpush.msra.mxu0 0.0
    %926 = vmatpush.msra.mxu0 %v885
    %927 = vmatmul.f32.gmra.mxu0 %v660
    %v928 = vpop.f32.mrf.mxu0
    %v929 = vadd.f32 %v647, %v928
    %930 = vdwg.mxu0
    %931 = vmatpush.msra.mxu0 0.0
    %932 = vmatpush.msra.mxu0 0.0
    %933 = vmatpush.msra.mxu0 0.0
    %934 = vmatpush.msra.mxu0 0.0
    %935 = vmatpush.msra.mxu0 0.0
    %936 = vmatpush.msra.mxu0 0.0
    %937 = vmatpush.msra.mxu0 0.0
    %938 = vmatpush.msra.mxu0 0.0
    %939 = vmatpush.msra.mxu0 0.0
    %940 = vmatpush.msra.mxu0 0.0
    %941 = vmatpush.msra.mxu0 0.0
    %942 = vmatpush.msra.mxu0 0.0
    %943 = vmatpush.msra.mxu0 0.0
    %944 = vmatpush.msra.mxu0 0.0
    %945 = vmatpush.msra.mxu0 0.0
    %946 = vmatpush.msra.mxu0 %v887
    %947 = vmatmul.f32.gmra.mxu0 %v660
    %v948 = vpop.f32.mrf.mxu0
    %v949 = vadd.f32 %v647, %v948
    %950 = vdwg.mxu0
    %951 = vmatpush.msra.mxu0 0.0
    %952 = vmatpush.msra.mxu0 0.0
    %953 = vmatpush.msra.mxu0 0.0
    %954 = vmatpush.msra.mxu0 0.0
    %955 = vmatpush.msra.mxu0 0.0
    %956 = vmatpush.msra.mxu0 0.0
    %957 = vmatpush.msra.mxu0 0.0
    %958 = vmatpush.msra.mxu0 0.0
    %959 = vmatpush.msra.mxu0 0.0
    %960 = vmatpush.msra.mxu0 0.0
    %961 = vmatpush.msra.mxu0 0.0
    %962 = vmatpush.msra.mxu0 0.0
    %963 = vmatpush.msra.mxu0 0.0
    %964 = vmatpush.msra.mxu0 0.0
    %965 = vmatpush.msra.mxu0 0.0
    %966 = vmatpush.msra.mxu0 %v889
    %967 = vmatmul.f32.gmra.mxu0 %v660
    %v968 = vpop.f32.mrf.mxu0
    %v969 = vadd.f32 %v647, %v968
    %970 = vdwg.mxu0
    %v971 = vmax.f32 %v909, 0.0
    %v972 = vmax.f32 %v929, 0.0
    %v973 = vmax.f32 %v949, 0.0
    %v974 = vmax.f32 %v969, 0.0
    %v975 = vld [vmem:[%s11] sm:$0xf]
    %v977 = vperm.slane %v975, 0
    %v978 = vperm.slane %v975, 1
    %v979 = vperm.slane %v975, 2
    %v980 = vperm.slane %v975, 3
    %v985 = vmul.f32 %v971, %v977
    %v986 = vmul.f32 %v972, %v978
    %v987 = vmul.f32 %v973, %v979
    %v988 = vmul.f32 %v974, %v980
    %v989 = vld [vmem:[#allocation14] sm:$0xff]
    %v990 = vld [vmem:[#allocation14 + $0x8] sm:$0xff]
    %s991 = scalar_lea.vmem [#allocation14], 16
    %v992 = vld [vmem:[%s991] sm:$0xff]
    %v993 = vld [vmem:[%s991 + $0x8] sm:$0xff]
    %vm994 = vcmask 64512
    %v996 = vsel %vm994, %v992, 0
    %v999 = vsel %vm994, %v993, 0
    %1001 = vmatpush.msra.mxu0 0.0
    %1002 = vmatpush.msra.mxu0 0.0
    %1003 = vmatpush.msra.mxu0 0.0
    %1004 = vmatpush.msra.mxu0 0.0
    %1005 = vmatpush.msra.mxu0 0.0
    %1006 = vmatpush.msra.mxu0 0.0
    %1007 = vmatpush.msra.mxu0 0.0
    %1008 = vmatpush.msra.mxu0 0.0
    %1009 = vmatpush.msra.mxu0 0.0
    %1010 = vmatpush.msra.mxu0 0.0
    %1011 = vmatpush.msra.mxu0 0.0
    %1012 = vmatpush.msra.mxu0 0.0
    %1013 = vmatpush.msra.mxu0 0.0
    %1014 = vmatpush.msra.mxu0 0.0
    %1015 = vmatpush.msra.mxu0 0.0
    %1016 = vmatpush.msra.mxu0 %v868
    %1017 = vmatmul.f32.gmra.mxu0 %v996
    %v1018 = vpop.f32.mrf.mxu0
    %v1019 = vadd.f32 0.0, %v1018
    %1020 = vmatmul.f32.gmra.mxu0 %v999
    %v1021 = vpop.f32.mrf.mxu0
    %v1022 = vadd.f32 0.0, %v1021
    %1023 = vdwg.mxu0
    %1024 = vmatpush.msra.mxu0 0.0
    %1025 = vmatpush.msra.mxu0 0.0
    %1026 = vmatpush.msra.mxu0 0.0
    %1027 = vmatpush.msra.mxu0 0.0
    %1028 = vmatpush.msra.mxu0 0.0
    %1029 = vmatpush.msra.mxu0 0.0
    %1030 = vmatpush.msra.mxu0 0.0
    %1031 = vmatpush.msra.mxu0 0.0
    %1032 = vmatpush.msra.mxu0 0.0
    %1033 = vmatpush.msra.mxu0 0.0
    %1034 = vmatpush.msra.mxu0 0.0
    %1035 = vmatpush.msra.mxu0 0.0
    %1036 = vmatpush.msra.mxu0 0.0
    %1037 = vmatpush.msra.mxu0 0.0
    %1038 = vmatpush.msra.mxu0 0.0
    %1039 = vmatpush.msra.mxu0 %v869
    %1040 = vmatmul.f32.gmra.mxu0 %v996
    %v1041 = vpop.f32.mrf.mxu0
    %v1042 = vadd.f32 0.0, %v1041
    %1043 = vmatmul.f32.gmra.mxu0 %v999
    %v1044 = vpop.f32.mrf.mxu0
    %v1045 = vadd.f32 0.0, %v1044
    %1046 = vdwg.mxu0
    %1047 = vmatpush.msra.mxu0 0.0
    %1048 = vmatpush.msra.mxu0 0.0
    %1049 = vmatpush.msra.mxu0 0.0
    %1050 = vmatpush.msra.mxu0 0.0
    %1051 = vmatpush.msra.mxu0 0.0
    %1052 = vmatpush.msra.mxu0 0.0
    %1053 = vmatpush.msra.mxu0 0.0
    %1054 = vmatpush.msra.mxu0 0.0
    %1055 = vmatpush.msra.mxu0 0.0
    %1056 = vmatpush.msra.mxu0 0.0
    %1057 = vmatpush.msra.mxu0 0.0
    %1058 = vmatpush.msra.mxu0 0.0
    %1059 = vmatpush.msra.mxu0 0.0
    %1060 = vmatpush.msra.mxu0 0.0
    %1061 = vmatpush.msra.mxu0 0.0
    %1062 = vmatpush.msra.mxu0 %v870
    %1063 = vmatmul.f32.gmra.mxu0 %v996
    %v1064 = vpop.f32.mrf.mxu0
    %v1065 = vadd.f32 0.0, %v1064
    %1066 = vmatmul.f32.gmra.mxu0 %v999
    %v1067 = vpop.f32.mrf.mxu0
    %v1068 = vadd.f32 0.0, %v1067
    %1069 = vdwg.mxu0
    %1070 = vmatpush.msra.mxu0 0.0
    %1071 = vmatpush.msra.mxu0 0.0
    %1072 = vmatpush.msra.mxu0 0.0
    %1073 = vmatpush.msra.mxu0 0.0
    %1074 = vmatpush.msra.mxu0 0.0
    %1075 = vmatpush.msra.mxu0 0.0
    %1076 = vmatpush.msra.mxu0 0.0
    %1077 = vmatpush.msra.mxu0 0.0
    %1078 = vmatpush.msra.mxu0 0.0
    %1079 = vmatpush.msra.mxu0 0.0
    %1080 = vmatpush.msra.mxu0 0.0
    %1081 = vmatpush.msra.mxu0 0.0
    %1082 = vmatpush.msra.mxu0 0.0
    %1083 = vmatpush.msra.mxu0 0.0
    %1084 = vmatpush.msra.mxu0 0.0
    %1085 = vmatpush.msra.mxu0 %v871
    %1086 = vmatmul.f32.gmra.mxu0 %v996
    %v1087 = vpop.f32.mrf.mxu0
    %v1088 = vadd.f32 0.0, %v1087
    %1089 = vmatmul.f32.gmra.mxu0 %v999
    %v1090 = vpop.f32.mrf.mxu0
    %v1091 = vadd.f32 0.0, %v1090
    %1092 = vdwg.mxu0
    %v1094 = vsel %vm994, %v989, 0
    %v1097 = vsel %vm994, %v990, 0
    %1099 = vmatpush.msra.mxu0 0.0
    %1100 = vmatpush.msra.mxu0 0.0
    %1101 = vmatpush.msra.mxu0 0.0
    %1102 = vmatpush.msra.mxu0 0.0
    %1103 = vmatpush.msra.mxu0 0.0
    %1104 = vmatpush.msra.mxu0 0.0
    %1105 = vmatpush.msra.mxu0 0.0
    %1106 = vmatpush.msra.mxu0 0.0
    %1107 = vmatpush.msra.mxu0 0.0
    %1108 = vmatpush.msra.mxu0 0.0
    %1109 = vmatpush.msra.mxu0 0.0
    %1110 = vmatpush.msra.mxu0 0.0
    %1111 = vmatpush.msra.mxu0 0.0
    %1112 = vmatpush.msra.mxu0 0.0
    %1113 = vmatpush.msra.mxu0 0.0
    %1114 = vmatpush.msra.mxu0 %v765
    %1115 = vmatmul.f32.gmra.mxu0 %v1094
    %v1116 = vpop.f32.mrf.mxu0
    %v1117 = vadd.f32 %v1019, %v1116
    %1118 = vmatmul.f32.gmra.mxu0 %v1097
    %v1119 = vpop.f32.mrf.mxu0
    %v1120 = vadd.f32 %v1022, %v1119
    %1121 = vdwg.mxu0
    %1122 = vmatpush.msra.mxu0 0.0
    %1123 = vmatpush.msra.mxu0 0.0
    %1124 = vmatpush.msra.mxu0 0.0
    %1125 = vmatpush.msra.mxu0 0.0
    %1126 = vmatpush.msra.mxu0 0.0
    %1127 = vmatpush.msra.mxu0 0.0
    %1128 = vmatpush.msra.mxu0 0.0
    %1129 = vmatpush.msra.mxu0 0.0
    %1130 = vmatpush.msra.mxu0 0.0
    %1131 = vmatpush.msra.mxu0 0.0
    %1132 = vmatpush.msra.mxu0 0.0
    %1133 = vmatpush.msra.mxu0 0.0
    %1134 = vmatpush.msra.mxu0 0.0
    %1135 = vmatpush.msra.mxu0 0.0
    %1136 = vmatpush.msra.mxu0 0.0
    %1137 = vmatpush.msra.mxu0 %v766
    %1138 = vmatmul.f32.gmra.mxu0 %v1094
    %v1139 = vpop.f32.mrf.mxu0
    %v1140 = vadd.f32 %v1042, %v1139
    %1141 = vmatmul.f32.gmra.mxu0 %v1097
    %v1142 = vpop.f32.mrf.mxu0
    %v1143 = vadd.f32 %v1045, %v1142
    %1144 = vdwg.mxu0
    %1145 = vmatpush.msra.mxu0 0.0
    %1146 = vmatpush.msra.mxu0 0.0
    %1147 = vmatpush.msra.mxu0 0.0
    %1148 = vmatpush.msra.mxu0 0.0
    %1149 = vmatpush.msra.mxu0 0.0
    %1150 = vmatpush.msra.mxu0 0.0
    %1151 = vmatpush.msra.mxu0 0.0
    %1152 = vmatpush.msra.mxu0 0.0
    %1153 = vmatpush.msra.mxu0 0.0
    %1154 = vmatpush.msra.mxu0 0.0
    %1155 = vmatpush.msra.mxu0 0.0
    %1156 = vmatpush.msra.mxu0 0.0
    %1157 = vmatpush.msra.mxu0 0.0
    %1158 = vmatpush.msra.mxu0 0.0
    %1159 = vmatpush.msra.mxu0 0.0
    %1160 = vmatpush.msra.mxu0 %v767
    %1161 = vmatmul.f32.gmra.mxu0 %v1094
    %v1162 = vpop.f32.mrf.mxu0
    %v1163 = vadd.f32 %v1065, %v1162
    %1164 = vmatmul.f32.gmra.mxu0 %v1097
    %v1165 = vpop.f32.mrf.mxu0
    %v1166 = vadd.f32 %v1068, %v1165
    %1167 = vdwg.mxu0
    %1168 = vmatpush.msra.mxu0 0.0
    %1169 = vmatpush.msra.mxu0 0.0
    %1170 = vmatpush.msra.mxu0 0.0
    %1171 = vmatpush.msra.mxu0 0.0
    %1172 = vmatpush.msra.mxu0 0.0
    %1173 = vmatpush.msra.mxu0 0.0
    %1174 = vmatpush.msra.mxu0 0.0
    %1175 = vmatpush.msra.mxu0 0.0
    %1176 = vmatpush.msra.mxu0 0.0
    %1177 = vmatpush.msra.mxu0 0.0
    %1178 = vmatpush.msra.mxu0 0.0
    %1179 = vmatpush.msra.mxu0 0.0
    %1180 = vmatpush.msra.mxu0 0.0
    %1181 = vmatpush.msra.mxu0 0.0
    %1182 = vmatpush.msra.mxu0 0.0
    %1183 = vmatpush.msra.mxu0 %v768
    %1184 = vmatmul.f32.gmra.mxu0 %v1094
    %v1185 = vpop.f32.mrf.mxu0
    %v1186 = vadd.f32 %v1088, %v1185
    %1187 = vmatmul.f32.gmra.mxu0 %v1097
    %v1188 = vpop.f32.mrf.mxu0
    %v1189 = vadd.f32 %v1091, %v1188
    %1190 = vdwg.mxu0
    %s1191 = scalar_lea.vmem [#allocation14], 32
    %v1192 = vld [vmem:[%s1191] sm:$0xff]
    %v1193 = vld [vmem:[%s1191 + $0x8] sm:$0xff]
    %v1195 = vsel %vm994, %v1192, 0
    %v1198 = vsel %vm994, %v1193, 0
    %1200 = vmatpush.msra.mxu0 0.0
    %1201 = vmatpush.msra.mxu0 0.0
    %1202 = vmatpush.msra.mxu0 0.0
    %1203 = vmatpush.msra.mxu0 0.0
    %1204 = vmatpush.msra.mxu0 0.0
    %1205 = vmatpush.msra.mxu0 0.0
    %1206 = vmatpush.msra.mxu0 0.0
    %1207 = vmatpush.msra.mxu0 0.0
    %1208 = vmatpush.msra.mxu0 0.0
    %1209 = vmatpush.msra.mxu0 0.0
    %1210 = vmatpush.msra.mxu0 0.0
    %1211 = vmatpush.msra.mxu0 0.0
    %1212 = vmatpush.msra.mxu0 0.0
    %1213 = vmatpush.msra.mxu0 0.0
    %1214 = vmatpush.msra.mxu0 0.0
    %1215 = vmatpush.msra.mxu0 %v985
    %1216 = vmatmul.f32.gmra.mxu0 %v1195
    %v1217 = vpop.f32.mrf.mxu0
    %v1218 = vadd.f32 0.0, %v1217
    %1219 = vmatmul.f32.gmra.mxu0 %v1198
    %v1220 = vpop.f32.mrf.mxu0
    %v1221 = vadd.f32 0.0, %v1220
    %1222 = vdwg.mxu0
    %1223 = vmatpush.msra.mxu0 0.0
    %1224 = vmatpush.msra.mxu0 0.0
    %1225 = vmatpush.msra.mxu0 0.0
    %1226 = vmatpush.msra.mxu0 0.0
    %1227 = vmatpush.msra.mxu0 0.0
    %1228 = vmatpush.msra.mxu0 0.0
    %1229 = vmatpush.msra.mxu0 0.0
    %1230 = vmatpush.msra.mxu0 0.0
    %1231 = vmatpush.msra.mxu0 0.0
    %1232 = vmatpush.msra.mxu0 0.0
    %1233 = vmatpush.msra.mxu0 0.0
    %1234 = vmatpush.msra.mxu0 0.0
    %1235 = vmatpush.msra.mxu0 0.0
    %1236 = vmatpush.msra.mxu0 0.0
    %1237 = vmatpush.msra.mxu0 0.0
    %1238 = vmatpush.msra.mxu0 %v986
    %1239 = vmatmul.f32.gmra.mxu0 %v1195
    %v1240 = vpop.f32.mrf.mxu0
    %v1241 = vadd.f32 0.0, %v1240
    %1242 = vmatmul.f32.gmra.mxu0 %v1198
    %v1243 = vpop.f32.mrf.mxu0
    %v1244 = vadd.f32 0.0, %v1243
    %1245 = vdwg.mxu0
    %1246 = vmatpush.msra.mxu0 0.0
    %1247 = vmatpush.msra.mxu0 0.0
    %1248 = vmatpush.msra.mxu0 0.0
    %1249 = vmatpush.msra.mxu0 0.0
    %1250 = vmatpush.msra.mxu0 0.0
    %1251 = vmatpush.msra.mxu0 0.0
    %1252 = vmatpush.msra.mxu0 0.0
    %1253 = vmatpush.msra.mxu0 0.0
    %1254 = vmatpush.msra.mxu0 0.0
    %1255 = vmatpush.msra.mxu0 0.0
    %1256 = vmatpush.msra.mxu0 0.0
    %1257 = vmatpush.msra.mxu0 0.0
    %1258 = vmatpush.msra.mxu0 0.0
    %1259 = vmatpush.msra.mxu0 0.0
    %1260 = vmatpush.msra.mxu0 0.0
    %1261 = vmatpush.msra.mxu0 %v987
    %1262 = vmatmul.f32.gmra.mxu0 %v1195
    %v1263 = vpop.f32.mrf.mxu0
    %v1264 = vadd.f32 0.0, %v1263
    %1265 = vmatmul.f32.gmra.mxu0 %v1198
    %v1266 = vpop.f32.mrf.mxu0
    %v1267 = vadd.f32 0.0, %v1266
    %1268 = vdwg.mxu0
    %1269 = vmatpush.msra.mxu0 0.0
    %1270 = vmatpush.msra.mxu0 0.0
    %1271 = vmatpush.msra.mxu0 0.0
    %1272 = vmatpush.msra.mxu0 0.0
    %1273 = vmatpush.msra.mxu0 0.0
    %1274 = vmatpush.msra.mxu0 0.0
    %1275 = vmatpush.msra.mxu0 0.0
    %1276 = vmatpush.msra.mxu0 0.0
    %1277 = vmatpush.msra.mxu0 0.0
    %1278 = vmatpush.msra.mxu0 0.0
    %1279 = vmatpush.msra.mxu0 0.0
    %1280 = vmatpush.msra.mxu0 0.0
    %1281 = vmatpush.msra.mxu0 0.0
    %1282 = vmatpush.msra.mxu0 0.0
    %1283 = vmatpush.msra.mxu0 0.0
    %1284 = vmatpush.msra.mxu0 %v988
    %1285 = vmatmul.f32.gmra.mxu0 %v1195
    %v1286 = vpop.f32.mrf.mxu0
    %v1287 = vadd.f32 0.0, %v1286
    %1288 = vmatmul.f32.gmra.mxu0 %v1198
    %v1289 = vpop.f32.mrf.mxu0
    %v1290 = vadd.f32 0.0, %v1289
    %1291 = vdwg.mxu0
    %v1292 = vadd.f32 %v1117, %v1218
    %v1293 = vadd.f32 %v1140, %v1241
    %v1294 = vadd.f32 %v1163, %v1264
    %v1295 = vadd.f32 %v1186, %v1287
    %v1296 = vadd.f32 %v1120, %v1221
    %v1297 = vadd.f32 %v1143, %v1244
    %v1298 = vadd.f32 %v1166, %v1267
    %v1299 = vadd.f32 %v1189, %v1290
    %v1300 = vld [vmem:[#allocation16] sm:$0xff]
    %v1301 = vld [vmem:[#allocation16 + $0x8] sm:$0xff]
    %1303 = vset.pattern.permute.xlu0 0
    %1304 = vperm.xlu0 %1303, %v1300
    %v1305 = vpop.permute.xlu0 %1304
    %1308 = vset.pattern.permute.xlu0 0
    %1309 = vperm.xlu0 %1308, %v1301
    %v1310 = vpop.permute.xlu0 %1309
    %v1312 = vadd.f32 %v1292, %v1305
    %v1313 = vadd.f32 %v1293, %v1305
    %v1314 = vadd.f32 %v1294, %v1305
    %v1315 = vadd.f32 %v1295, %v1305
    %v1316 = vadd.f32 %v1296, %v1310
    %v1317 = vadd.f32 %v1297, %v1310
    %v1318 = vadd.f32 %v1298, %v1310
    %v1319 = vadd.f32 %v1299, %v1310
    %v1320 = vmax.f32 %v1312, 0.0
    %v1321 = vmax.f32 %v1313, 0.0
    %v1322 = vmax.f32 %v1314, 0.0
    %v1323 = vmax.f32 %v1315, 0.0
    %v1324 = vmax.f32 %v1316, 0.0
    %v1325 = vmax.f32 %v1317, 0.0
    %v1326 = vmax.f32 %v1318, 0.0
    %v1327 = vmax.f32 %v1319, 0.0
    %v1330 = vrot.slane %v1322, 7
    %v1331 = vrot.slane %v1323, 7
    %vm1334 = vcmask 1040384
    %v1335 = vsel %vm1334, %v1320, %v1330
    %v1336 = vsel %vm1334, %v1321, %v1331
    %v1337 = vld [vmem:[#allocation17] sm:$0xff]
    %v1338 = vld [vmem:[#allocation17 + $0x8] sm:$0xff]
    %v1339 = vld [vmem:[#allocation17 + $0x10] sm:$0xff]
    %v1340 = vld [vmem:[#allocation17 + $0x18] sm:$0xff]
    %v1341 = vld [vmem:[#allocation17 + $0x20] sm:$0xff]
    %v1342 = vld [vmem:[#allocation17 + $0x28] sm:$0xff]
    %v1343 = vld [vmem:[#allocation17 + $0x30] sm:$0xff]
    %v1344 = vld [vmem:[#allocation17 + $0x38] sm:$0xff]
    %v1345 = vld [vmem:[#allocation17 + $0x40] sm:$0xff]
    %v1346 = vld [vmem:[#allocation17 + $0x48] sm:$0xff]
    %v1347 = vld [vmem:[#allocation17 + $0x50] sm:$0xff]
    %v1348 = vld [vmem:[#allocation17 + $0x58] sm:$0xff]
    %v1349 = vld [vmem:[#allocation17 + $0x60] sm:$0xff]
    %v1350 = vld [vmem:[#allocation17 + $0x68] sm:$0xff]
    %v1351 = vld [vmem:[#allocation17 + $0x70] sm:$0xff]
    %v1352 = vld [vmem:[#allocation17 + $0x78] sm:$0xff]
    %v1353 = vld [vmem:[#allocation17 + $0x80] sm:$0xff]
    %v1356 = vrot.slane %v1320, 1
    %v1357 = vrot.slane %v1321, 1
    %v1360 = vsel %vm1334, %v1356, %v1322
    %v1361 = vsel %vm1334, %v1357, %v1323
    %s1362 = scalar_lea.vmem [#allocation17], 136
    %v1363 = vld [vmem:[%s1362] sm:$0xff]
    %v1364 = vld [vmem:[%s1362 + $0x8] sm:$0xff]
    %v1365 = vld [vmem:[%s1362 + $0x10] sm:$0xff]
    %v1366 = vld [vmem:[%s1362 + $0x18] sm:$0xff]
    %v1367 = vld [vmem:[%s1362 + $0x20] sm:$0xff]
    %v1368 = vld [vmem:[%s1362 + $0x28] sm:$0xff]
    %v1369 = vld [vmem:[%s1362 + $0x30] sm:$0xff]
    %v1370 = vld [vmem:[%s1362 + $0x38] sm:$0xff]
    %v1371 = vld [vmem:[%s1362 + $0x40] sm:$0xff]
    %v1372 = vld [vmem:[%s1362 + $0x48] sm:$0xff]
    %v1373 = vld [vmem:[%s1362 + $0x50] sm:$0xff]
    %v1374 = vld [vmem:[%s1362 + $0x58] sm:$0xff]
    %v1375 = vld [vmem:[%s1362 + $0x60] sm:$0xff]
    %v1376 = vld [vmem:[%s1362 + $0x68] sm:$0xff]
    %v1377 = vld [vmem:[%s1362 + $0x70] sm:$0xff]
    %v1378 = vld [vmem:[%s1362 + $0x78] sm:$0xff]
    %v1379 = vld [vmem:[%s1362 + $0x80] sm:$0xff]
    %v1381 = vsel %vm994, %v1361, 0
    %1383 = vmatpush.msra.mxu0 %v1378
    %1384 = vmatpush.msra.mxu0 %v1377
    %1385 = vmatpush.msra.mxu0 %v1376
    %1386 = vmatpush.msra.mxu0 %v1375
    %1387 = vmatpush.msra.mxu0 %v1374
    %1388 = vmatpush.msra.mxu0 %v1373
    %1389 = vmatpush.msra.mxu0 %v1372
    %1390 = vmatpush.msra.mxu0 %v1371
    %1391 = vmatpush.msra.mxu0 %v1370
    %1392 = vmatpush.msra.mxu0 %v1369
    %1393 = vmatpush.msra.mxu0 %v1368
    %1394 = vmatpush.msra.mxu0 %v1367
    %1395 = vmatpush.msra.mxu0 %v1366
    %1396 = vmatpush.msra.mxu0 %v1365
    %1397 = vmatpush.msra.mxu0 %v1364
    %1398 = vmatpush.msra.mxu0 %v1363
    %1399 = vmatmul.f32.gmra.mxu0 %v1360
    %v1400 = vpop.f32.mrf.mxu0
    %v1401 = vadd.f32 0.0, %v1400
    %1402 = vdwg.mxu0
    %1403 = vmatpush.msra.mxu0 0.0
    %1404 = vmatpush.msra.mxu0 0.0
    %1405 = vmatpush.msra.mxu0 0.0
    %1406 = vmatpush.msra.mxu0 0.0
    %1407 = vmatpush.msra.mxu0 0.0
    %1408 = vmatpush.msra.mxu0 0.0
    %1409 = vmatpush.msra.mxu0 0.0
    %1410 = vmatpush.msra.mxu0 0.0
    %1411 = vmatpush.msra.mxu0 0.0
    %1412 = vmatpush.msra.mxu0 0.0
    %1413 = vmatpush.msra.mxu0 0.0
    %1414 = vmatpush.msra.mxu0 0.0
    %1415 = vmatpush.msra.mxu0 0.0
    %1416 = vmatpush.msra.mxu0 0.0
    %1417 = vmatpush.msra.mxu0 0.0
    %1418 = vmatpush.msra.mxu0 %v1379
    %1419 = vmatmul.f32.gmra.mxu0 %v1381
    %v1420 = vpop.f32.mrf.mxu0
    %v1421 = vadd.f32 %v1401, %v1420
    %1422 = vdwg.mxu0
    %v1424 = vsel %vm994, %v1336, 0
    %1426 = vmatpush.msra.mxu0 %v1352
    %1427 = vmatpush.msra.mxu0 %v1351
    %1428 = vmatpush.msra.mxu0 %v1350
    %1429 = vmatpush.msra.mxu0 %v1349
    %1430 = vmatpush.msra.mxu0 %v1348
    %1431 = vmatpush.msra.mxu0 %v1347
    %1432 = vmatpush.msra.mxu0 %v1346
    %1433 = vmatpush.msra.mxu0 %v1345
    %1434 = vmatpush.msra.mxu0 %v1344
    %1435 = vmatpush.msra.mxu0 %v1343
    %1436 = vmatpush.msra.mxu0 %v1342
    %1437 = vmatpush.msra.mxu0 %v1341
    %1438 = vmatpush.msra.mxu0 %v1340
    %1439 = vmatpush.msra.mxu0 %v1339
    %1440 = vmatpush.msra.mxu0 %v1338
    %1441 = vmatpush.msra.mxu0 %v1337
    %1442 = vmatmul.f32.gmra.mxu0 %v1335
    %v1443 = vpop.f32.mrf.mxu0
    %v1444 = vadd.f32 %v1421, %v1443
    %1445 = vdwg.mxu0
    %1446 = vmatpush.msra.mxu0 0.0
    %1447 = vmatpush.msra.mxu0 0.0
    %1448 = vmatpush.msra.mxu0 0.0
    %1449 = vmatpush.msra.mxu0 0.0
    %1450 = vmatpush.msra.mxu0 0.0
    %1451 = vmatpush.msra.mxu0 0.0
    %1452 = vmatpush.msra.mxu0 0.0
    %1453 = vmatpush.msra.mxu0 0.0
    %1454 = vmatpush.msra.mxu0 0.0
    %1455 = vmatpush.msra.mxu0 0.0
    %1456 = vmatpush.msra.mxu0 0.0
    %1457 = vmatpush.msra.mxu0 0.0
    %1458 = vmatpush.msra.mxu0 0.0
    %1459 = vmatpush.msra.mxu0 0.0
    %1460 = vmatpush.msra.mxu0 0.0
    %1461 = vmatpush.msra.mxu0 %v1353
    %1462 = vmatmul.f32.gmra.mxu0 %v1424
    %v1463 = vpop.f32.mrf.mxu0
    %v1464 = vadd.f32 %v1444, %v1463
    %1465 = vdwg.mxu0
    %v1466 = vrot.slane %v1320, 2
    %v1467 = vrot.slane %v1321, 2
    %v1470 = vrot.slane %v1322, 1
    %v1471 = vrot.slane %v1323, 1
    %v1474 = vsel %vm1334, %v1466, %v1470
    %v1475 = vsel %vm1334, %v1467, %v1471
    %s1476 = scalar_lea.vmem [#allocation17], 272
    %v1477 = vld [vmem:[%s1476] sm:$0xff]
    %v1478 = vld [vmem:[%s1476 + $0x8] sm:$0xff]
    %v1479 = vld [vmem:[%s1476 + $0x10] sm:$0xff]
    %v1480 = vld [vmem:[%s1476 + $0x18] sm:$0xff]
    %v1481 = vld [vmem:[%s1476 + $0x20] sm:$0xff]
    %v1482 = vld [vmem:[%s1476 + $0x28] sm:$0xff]
    %v1483 = vld [vmem:[%s1476 + $0x30] sm:$0xff]
    %v1484 = vld [vmem:[%s1476 + $0x38] sm:$0xff]
    %v1485 = vld [vmem:[%s1476 + $0x40] sm:$0xff]
    %v1486 = vld [vmem:[%s1476 + $0x48] sm:$0xff]
    %v1487 = vld [vmem:[%s1476 + $0x50] sm:$0xff]
    %v1488 = vld [vmem:[%s1476 + $0x58] sm:$0xff]
    %v1489 = vld [vmem:[%s1476 + $0x60] sm:$0xff]
    %v1490 = vld [vmem:[%s1476 + $0x68] sm:$0xff]
    %v1491 = vld [vmem:[%s1476 + $0x70] sm:$0xff]
    %v1492 = vld [vmem:[%s1476 + $0x78] sm:$0xff]
    %v1493 = vld [vmem:[%s1476 + $0x80] sm:$0xff]
    %v1495 = vsel %vm994, %v1475, 0
    %1497 = vmatpush.msra.mxu0 %v1492
    %1498 = vmatpush.msra.mxu0 %v1491
    %1499 = vmatpush.msra.mxu0 %v1490
    %1500 = vmatpush.msra.mxu0 %v1489
    %1501 = vmatpush.msra.mxu0 %v1488
    %1502 = vmatpush.msra.mxu0 %v1487
    %1503 = vmatpush.msra.mxu0 %v1486
    %1504 = vmatpush.msra.mxu0 %v1485
    %1505 = vmatpush.msra.mxu0 %v1484
    %1506 = vmatpush.msra.mxu0 %v1483
    %1507 = vmatpush.msra.mxu0 %v1482
    %1508 = vmatpush.msra.mxu0 %v1481
    %1509 = vmatpush.msra.mxu0 %v1480
    %1510 = vmatpush.msra.mxu0 %v1479
    %1511 = vmatpush.msra.mxu0 %v1478
    %1512 = vmatpush.msra.mxu0 %v1477
    %1513 = vmatmul.f32.gmra.mxu0 %v1474
    %v1514 = vpop.f32.mrf.mxu0
    %v1515 = vadd.f32 0.0, %v1514
    %1516 = vdwg.mxu0
    %1517 = vmatpush.msra.mxu0 0.0
    %1518 = vmatpush.msra.mxu0 0.0
    %1519 = vmatpush.msra.mxu0 0.0
    %1520 = vmatpush.msra.mxu0 0.0
    %1521 = vmatpush.msra.mxu0 0.0
    %1522 = vmatpush.msra.mxu0 0.0
    %1523 = vmatpush.msra.mxu0 0.0
    %1524 = vmatpush.msra.mxu0 0.0
    %1525 = vmatpush.msra.mxu0 0.0
    %1526 = vmatpush.msra.mxu0 0.0
    %1527 = vmatpush.msra.mxu0 0.0
    %1528 = vmatpush.msra.mxu0 0.0
    %1529 = vmatpush.msra.mxu0 0.0
    %1530 = vmatpush.msra.mxu0 0.0
    %1531 = vmatpush.msra.mxu0 0.0
    %1532 = vmatpush.msra.mxu0 %v1493
    %1533 = vmatmul.f32.gmra.mxu0 %v1495
    %v1534 = vpop.f32.mrf.mxu0
    %v1535 = vadd.f32 %v1515, %v1534
    %1536 = vdwg.mxu0
    %v1537 = vadd.f32 %v1464, %v1535
    %v1538 = vrot.slane %v1320, 3
    %v1539 = vrot.slane %v1321, 3
    %v1542 = vrot.slane %v1322, 2
    %v1543 = vrot.slane %v1323, 2
    %v1546 = vsel %vm1334, %v1538, %v1542
    %v1547 = vsel %vm1334, %v1539, %v1543
    %s1548 = scalar_lea.vmem [#allocation17], 408
    %v1549 = vld [vmem:[%s1548] sm:$0xff]
    %v1550 = vld [vmem:[%s1548 + $0x8] sm:$0xff]
    %v1551 = vld [vmem:[%s1548 + $0x10] sm:$0xff]
    %v1552 = vld [vmem:[%s1548 + $0x18] sm:$0xff]
    %v1553 = vld [vmem:[%s1548 + $0x20] sm:$0xff]
    %v1554 = vld [vmem:[%s1548 + $0x28] sm:$0xff]
    %v1555 = vld [vmem:[%s1548 + $0x30] sm:$0xff]
    %v1556 = vld [vmem:[%s1548 + $0x38] sm:$0xff]
    %v1557 = vld [vmem:[%s1548 + $0x40] sm:$0xff]
    %v1558 = vld [vmem:[%s1548 + $0x48] sm:$0xff]
    %v1559 = vld [vmem:[%s1548 + $0x50] sm:$0xff]
    %v1560 = vld [vmem:[%s1548 + $0x58] sm:$0xff]
    %v1561 = vld [vmem:[%s1548 + $0x60] sm:$0xff]
    %v1562 = vld [vmem:[%s1548 + $0x68] sm:$0xff]
    %v1563 = vld [vmem:[%s1548 + $0x70] sm:$0xff]
    %v1564 = vld [vmem:[%s1548 + $0x78] sm:$0xff]
    %v1565 = vld [vmem:[%s1548 + $0x80] sm:$0xff]
    %v1567 = vsel %vm994, %v1547, 0
    %1569 = vmatpush.msra.mxu0 %v1564
    %1570 = vmatpush.msra.mxu0 %v1563
    %1571 = vmatpush.msra.mxu0 %v1562
    %1572 = vmatpush.msra.mxu0 %v1561
    %1573 = vmatpush.msra.mxu0 %v1560
    %1574 = vmatpush.msra.mxu0 %v1559
    %1575 = vmatpush.msra.mxu0 %v1558
    %1576 = vmatpush.msra.mxu0 %v1557
    %1577 = vmatpush.msra.mxu0 %v1556
    %1578 = vmatpush.msra.mxu0 %v1555
    %1579 = vmatpush.msra.mxu0 %v1554
    %1580 = vmatpush.msra.mxu0 %v1553
    %1581 = vmatpush.msra.mxu0 %v1552
    %1582 = vmatpush.msra.mxu0 %v1551
    %1583 = vmatpush.msra.mxu0 %v1550
    %1584 = vmatpush.msra.mxu0 %v1549
    %1585 = vmatmul.f32.gmra.mxu0 %v1546
    %v1586 = vpop.f32.mrf.mxu0
    %v1587 = vadd.f32 0.0, %v1586
    %1588 = vdwg.mxu0
    %1589 = vmatpush.msra.mxu0 0.0
    %1590 = vmatpush.msra.mxu0 0.0
    %1591 = vmatpush.msra.mxu0 0.0
    %1592 = vmatpush.msra.mxu0 0.0
    %1593 = vmatpush.msra.mxu0 0.0
    %1594 = vmatpush.msra.mxu0 0.0
    %1595 = vmatpush.msra.mxu0 0.0
    %1596 = vmatpush.msra.mxu0 0.0
    %1597 = vmatpush.msra.mxu0 0.0
    %1598 = vmatpush.msra.mxu0 0.0
    %1599 = vmatpush.msra.mxu0 0.0
    %1600 = vmatpush.msra.mxu0 0.0
    %1601 = vmatpush.msra.mxu0 0.0
    %1602 = vmatpush.msra.mxu0 0.0
    %1603 = vmatpush.msra.mxu0 0.0
    %1604 = vmatpush.msra.mxu0 %v1565
    %1605 = vmatmul.f32.gmra.mxu0 %v1567
    %v1606 = vpop.f32.mrf.mxu0
    %v1607 = vadd.f32 %v1587, %v1606
    %1608 = vdwg.mxu0
    %v1609 = vadd.f32 %v1537, %v1607
    %v1610 = vrot.slane %v1320, 4
    %v1611 = vrot.slane %v1321, 4
    %v1614 = vrot.slane %v1322, 3
    %v1615 = vrot.slane %v1323, 3
    %v1618 = vsel %vm1334, %v1610, %v1614
    %v1619 = vsel %vm1334, %v1611, %v1615
    %s1620 = scalar_lea.vmem [#allocation17], 544
    %v1621 = vld [vmem:[%s1620] sm:$0xff]
    %v1622 = vld [vmem:[%s1620 + $0x8] sm:$0xff]
    %v1623 = vld [vmem:[%s1620 + $0x10] sm:$0xff]
    %v1624 = vld [vmem:[%s1620 + $0x18] sm:$0xff]
    %v1625 = vld [vmem:[%s1620 + $0x20] sm:$0xff]
    %v1626 = vld [vmem:[%s1620 + $0x28] sm:$0xff]
    %v1627 = vld [vmem:[%s1620 + $0x30] sm:$0xff]
    %v1628 = vld [vmem:[%s1620 + $0x38] sm:$0xff]
    %v1629 = vld [vmem:[%s1620 + $0x40] sm:$0xff]
    %v1630 = vld [vmem:[%s1620 + $0x48] sm:$0xff]
    %v1631 = vld [vmem:[%s1620 + $0x50] sm:$0xff]
    %v1632 = vld [vmem:[%s1620 + $0x58] sm:$0xff]
    %v1633 = vld [vmem:[%s1620 + $0x60] sm:$0xff]
    %v1634 = vld [vmem:[%s1620 + $0x68] sm:$0xff]
    %v1635 = vld [vmem:[%s1620 + $0x70] sm:$0xff]
    %v1636 = vld [vmem:[%s1620 + $0x78] sm:$0xff]
    %v1637 = vld [vmem:[%s1620 + $0x80] sm:$0xff]
    %v1639 = vsel %vm994, %v1619, 0
    %1641 = vmatpush.msra.mxu0 %v1636
    %1642 = vmatpush.msra.mxu0 %v1635
    %1643 = vmatpush.msra.mxu0 %v1634
    %1644 = vmatpush.msra.mxu0 %v1633
    %1645 = vmatpush.msra.mxu0 %v1632
    %1646 = vmatpush.msra.mxu0 %v1631
    %1647 = vmatpush.msra.mxu0 %v1630
    %1648 = vmatpush.msra.mxu0 %v1629
    %1649 = vmatpush.msra.mxu0 %v1628
    %1650 = vmatpush.msra.mxu0 %v1627
    %1651 = vmatpush.msra.mxu0 %v1626
    %1652 = vmatpush.msra.mxu0 %v1625
    %1653 = vmatpush.msra.mxu0 %v1624
    %1654 = vmatpush.msra.mxu0 %v1623
    %1655 = vmatpush.msra.mxu0 %v1622
    %1656 = vmatpush.msra.mxu0 %v1621
    %1657 = vmatmul.f32.gmra.mxu0 %v1618
    %v1658 = vpop.f32.mrf.mxu0
    %v1659 = vadd.f32 0.0, %v1658
    %1660 = vdwg.mxu0
    %1661 = vmatpush.msra.mxu0 0.0
    %1662 = vmatpush.msra.mxu0 0.0
    %1663 = vmatpush.msra.mxu0 0.0
    %1664 = vmatpush.msra.mxu0 0.0
    %1665 = vmatpush.msra.mxu0 0.0
    %1666 = vmatpush.msra.mxu0 0.0
    %1667 = vmatpush.msra.mxu0 0.0
    %1668 = vmatpush.msra.mxu0 0.0
    %1669 = vmatpush.msra.mxu0 0.0
    %1670 = vmatpush.msra.mxu0 0.0
    %1671 = vmatpush.msra.mxu0 0.0
    %1672 = vmatpush.msra.mxu0 0.0
    %1673 = vmatpush.msra.mxu0 0.0
    %1674 = vmatpush.msra.mxu0 0.0
    %1675 = vmatpush.msra.mxu0 0.0
    %1676 = vmatpush.msra.mxu0 %v1637
    %1677 = vmatmul.f32.gmra.mxu0 %v1639
    %v1678 = vpop.f32.mrf.mxu0
    %v1679 = vadd.f32 %v1659, %v1678
    %1680 = vdwg.mxu0
    %v1681 = vadd.f32 %v1609, %v1679
    %v1682 = vrot.slane %v1320, 5
    %v1683 = vrot.slane %v1321, 5
    %v1686 = vrot.slane %v1322, 4
    %v1687 = vrot.slane %v1323, 4
    %v1690 = vsel %vm1334, %v1682, %v1686
    %v1691 = vsel %vm1334, %v1683, %v1687
    %s1692 = scalar_lea.vmem [#allocation17], 680
    %v1693 = vld [vmem:[%s1692] sm:$0xff]
    %v1694 = vld [vmem:[%s1692 + $0x8] sm:$0xff]
    %v1695 = vld [vmem:[%s1692 + $0x10] sm:$0xff]
    %v1696 = vld [vmem:[%s1692 + $0x18] sm:$0xff]
    %v1697 = vld [vmem:[%s1692 + $0x20] sm:$0xff]
    %v1698 = vld [vmem:[%s1692 + $0x28] sm:$0xff]
    %v1699 = vld [vmem:[%s1692 + $0x30] sm:$0xff]
    %v1700 = vld [vmem:[%s1692 + $0x38] sm:$0xff]
    %v1701 = vld [vmem:[%s1692 + $0x40] sm:$0xff]
    %v1702 = vld [vmem:[%s1692 + $0x48] sm:$0xff]
    %v1703 = vld [vmem:[%s1692 + $0x50] sm:$0xff]
    %v1704 = vld [vmem:[%s1692 + $0x58] sm:$0xff]
    %v1705 = vld [vmem:[%s1692 + $0x60] sm:$0xff]
    %v1706 = vld [vmem:[%s1692 + $0x68] sm:$0xff]
    %v1707 = vld [vmem:[%s1692 + $0x70] sm:$0xff]
    %v1708 = vld [vmem:[%s1692 + $0x78] sm:$0xff]
    %v1709 = vld [vmem:[%s1692 + $0x80] sm:$0xff]
    %v1711 = vsel %vm994, %v1691, 0
    %1713 = vmatpush.msra.mxu0 %v1708
    %1714 = vmatpush.msra.mxu0 %v1707
    %1715 = vmatpush.msra.mxu0 %v1706
    %1716 = vmatpush.msra.mxu0 %v1705
    %1717 = vmatpush.msra.mxu0 %v1704
    %1718 = vmatpush.msra.mxu0 %v1703
    %1719 = vmatpush.msra.mxu0 %v1702
    %1720 = vmatpush.msra.mxu0 %v1701
    %1721 = vmatpush.msra.mxu0 %v1700
    %1722 = vmatpush.msra.mxu0 %v1699
    %1723 = vmatpush.msra.mxu0 %v1698
    %1724 = vmatpush.msra.mxu0 %v1697
    %1725 = vmatpush.msra.mxu0 %v1696
    %1726 = vmatpush.msra.mxu0 %v1695
    %1727 = vmatpush.msra.mxu0 %v1694
    %1728 = vmatpush.msra.mxu0 %v1693
    %1729 = vmatmul.f32.gmra.mxu0 %v1690
    %v1730 = vpop.f32.mrf.mxu0
    %v1731 = vadd.f32 0.0, %v1730
    %1732 = vdwg.mxu0
    %1733 = vmatpush.msra.mxu0 0.0
    %1734 = vmatpush.msra.mxu0 0.0
    %1735 = vmatpush.msra.mxu0 0.0
    %1736 = vmatpush.msra.mxu0 0.0
    %1737 = vmatpush.msra.mxu0 0.0
    %1738 = vmatpush.msra.mxu0 0.0
    %1739 = vmatpush.msra.mxu0 0.0
    %1740 = vmatpush.msra.mxu0 0.0
    %1741 = vmatpush.msra.mxu0 0.0
    %1742 = vmatpush.msra.mxu0 0.0
    %1743 = vmatpush.msra.mxu0 0.0
    %1744 = vmatpush.msra.mxu0 0.0
    %1745 = vmatpush.msra.mxu0 0.0
    %1746 = vmatpush.msra.mxu0 0.0
    %1747 = vmatpush.msra.mxu0 0.0
    %1748 = vmatpush.msra.mxu0 %v1709
    %1749 = vmatmul.f32.gmra.mxu0 %v1711
    %v1750 = vpop.f32.mrf.mxu0
    %v1751 = vadd.f32 %v1731, %v1750
    %1752 = vdwg.mxu0
    %v1753 = vadd.f32 %v1681, %v1751
    %v1754 = vrot.slane %v1320, 6
    %v1755 = vrot.slane %v1321, 6
    %v1758 = vrot.slane %v1322, 5
    %v1759 = vrot.slane %v1323, 5
    %v1762 = vsel %vm1334, %v1754, %v1758
    %v1763 = vsel %vm1334, %v1755, %v1759
    %s1764 = scalar_lea.vmem [#allocation17], 816
    %v1765 = vld [vmem:[%s1764] sm:$0xff]
    %v1766 = vld [vmem:[%s1764 + $0x8] sm:$0xff]
    %v1767 = vld [vmem:[%s1764 + $0x10] sm:$0xff]
    %v1768 = vld [vmem:[%s1764 + $0x18] sm:$0xff]
    %v1769 = vld [vmem:[%s1764 + $0x20] sm:$0xff]
    %v1770 = vld [vmem:[%s1764 + $0x28] sm:$0xff]
    %v1771 = vld [vmem:[%s1764 + $0x30] sm:$0xff]
    %v1772 = vld [vmem:[%s1764 + $0x38] sm:$0xff]
    %v1773 = vld [vmem:[%s1764 + $0x40] sm:$0xff]
    %v1774 = vld [vmem:[%s1764 + $0x48] sm:$0xff]
    %v1775 = vld [vmem:[%s1764 + $0x50] sm:$0xff]
    %v1776 = vld [vmem:[%s1764 + $0x58] sm:$0xff]
    %v1777 = vld [vmem:[%s1764 + $0x60] sm:$0xff]
    %v1778 = vld [vmem:[%s1764 + $0x68] sm:$0xff]
    %v1779 = vld [vmem:[%s1764 + $0x70] sm:$0xff]
    %v1780 = vld [vmem:[%s1764 + $0x78] sm:$0xff]
    %v1781 = vld [vmem:[%s1764 + $0x80] sm:$0xff]
    %v1783 = vsel %vm994, %v1763, 0
    %1785 = vmatpush.msra.mxu0 %v1780
    %1786 = vmatpush.msra.mxu0 %v1779
    %1787 = vmatpush.msra.mxu0 %v1778
    %1788 = vmatpush.msra.mxu0 %v1777
    %1789 = vmatpush.msra.mxu0 %v1776
    %1790 = vmatpush.msra.mxu0 %v1775
    %1791 = vmatpush.msra.mxu0 %v1774
    %1792 = vmatpush.msra.mxu0 %v1773
    %1793 = vmatpush.msra.mxu0 %v1772
    %1794 = vmatpush.msra.mxu0 %v1771
    %1795 = vmatpush.msra.mxu0 %v1770
    %1796 = vmatpush.msra.mxu0 %v1769
    %1797 = vmatpush.msra.mxu0 %v1768
    %1798 = vmatpush.msra.mxu0 %v1767
    %1799 = vmatpush.msra.mxu0 %v1766
    %1800 = vmatpush.msra.mxu0 %v1765
    %1801 = vmatmul.f32.gmra.mxu0 %v1762
    %v1802 = vpop.f32.mrf.mxu0
    %v1803 = vadd.f32 0.0, %v1802
    %1804 = vdwg.mxu0
    %1805 = vmatpush.msra.mxu0 0.0
    %1806 = vmatpush.msra.mxu0 0.0
    %1807 = vmatpush.msra.mxu0 0.0
    %1808 = vmatpush.msra.mxu0 0.0
    %1809 = vmatpush.msra.mxu0 0.0
    %1810 = vmatpush.msra.mxu0 0.0
    %1811 = vmatpush.msra.mxu0 0.0
    %1812 = vmatpush.msra.mxu0 0.0
    %1813 = vmatpush.msra.mxu0 0.0
    %1814 = vmatpush.msra.mxu0 0.0
    %1815 = vmatpush.msra.mxu0 0.0
    %1816 = vmatpush.msra.mxu0 0.0
    %1817 = vmatpush.msra.mxu0 0.0
    %1818 = vmatpush.msra.mxu0 0.0
    %1819 = vmatpush.msra.mxu0 0.0
    %1820 = vmatpush.msra.mxu0 %v1781
    %1821 = vmatmul.f32.gmra.mxu0 %v1783
    %v1822 = vpop.f32.mrf.mxu0
    %v1823 = vadd.f32 %v1803, %v1822
    %1824 = vdwg.mxu0
    %v1825 = vadd.f32 %v1753, %v1823
    %v1826 = vrot.slane %v1320, 7
    %v1827 = vrot.slane %v1321, 7
    %v1830 = vrot.slane %v1322, 6
    %v1831 = vrot.slane %v1323, 6
    %v1834 = vsel %vm1334, %v1826, %v1830
    %v1835 = vsel %vm1334, %v1827, %v1831
    %s1836 = scalar_lea.vmem [#allocation17], 952
    %v1837 = vld [vmem:[%s1836] sm:$0xff]
    %v1838 = vld [vmem:[%s1836 + $0x8] sm:$0xff]
    %v1839 = vld [vmem:[%s1836 + $0x10] sm:$0xff]
    %v1840 = vld [vmem:[%s1836 + $0x18] sm:$0xff]
    %v1841 = vld [vmem:[%s1836 + $0x20] sm:$0xff]
    %v1842 = vld [vmem:[%s1836 + $0x28] sm:$0xff]
    %v1843 = vld [vmem:[%s1836 + $0x30] sm:$0xff]
    %v1844 = vld [vmem:[%s1836 + $0x38] sm:$0xff]
    %v1845 = vld [vmem:[%s1836 + $0x40] sm:$0xff]
    %v1846 = vld [vmem:[%s1836 + $0x48] sm:$0xff]
    %v1847 = vld [vmem:[%s1836 + $0x50] sm:$0xff]
    %v1848 = vld [vmem:[%s1836 + $0x58] sm:$0xff]
    %v1849 = vld [vmem:[%s1836 + $0x60] sm:$0xff]
    %v1850 = vld [vmem:[%s1836 + $0x68] sm:$0xff]
    %v1851 = vld [vmem:[%s1836 + $0x70] sm:$0xff]
    %v1852 = vld [vmem:[%s1836 + $0x78] sm:$0xff]
    %v1853 = vld [vmem:[%s1836 + $0x80] sm:$0xff]
    %v1855 = vsel %vm994, %v1835, 0
    %1857 = vmatpush.msra.mxu0 %v1852
    %1858 = vmatpush.msra.mxu0 %v1851
    %1859 = vmatpush.msra.mxu0 %v1850
    %1860 = vmatpush.msra.mxu0 %v1849
    %1861 = vmatpush.msra.mxu0 %v1848
    %1862 = vmatpush.msra.mxu0 %v1847
    %1863 = vmatpush.msra.mxu0 %v1846
    %1864 = vmatpush.msra.mxu0 %v1845
    %1865 = vmatpush.msra.mxu0 %v1844
    %1866 = vmatpush.msra.mxu0 %v1843
    %1867 = vmatpush.msra.mxu0 %v1842
    %1868 = vmatpush.msra.mxu0 %v1841
    %1869 = vmatpush.msra.mxu0 %v1840
    %1870 = vmatpush.msra.mxu0 %v1839
    %1871 = vmatpush.msra.mxu0 %v1838
    %1872 = vmatpush.msra.mxu0 %v1837
    %1873 = vmatmul.f32.gmra.mxu0 %v1834
    %v1874 = vpop.f32.mrf.mxu0
    %v1875 = vadd.f32 0.0, %v1874
    %1876 = vdwg.mxu0
    %1877 = vmatpush.msra.mxu0 0.0
    %1878 = vmatpush.msra.mxu0 0.0
    %1879 = vmatpush.msra.mxu0 0.0
    %1880 = vmatpush.msra.mxu0 0.0
    %1881 = vmatpush.msra.mxu0 0.0
    %1882 = vmatpush.msra.mxu0 0.0
    %1883 = vmatpush.msra.mxu0 0.0
    %1884 = vmatpush.msra.mxu0 0.0
    %1885 = vmatpush.msra.mxu0 0.0
    %1886 = vmatpush.msra.mxu0 0.0
    %1887 = vmatpush.msra.mxu0 0.0
    %1888 = vmatpush.msra.mxu0 0.0
    %1889 = vmatpush.msra.mxu0 0.0
    %1890 = vmatpush.msra.mxu0 0.0
    %1891 = vmatpush.msra.mxu0 0.0
    %1892 = vmatpush.msra.mxu0 %v1853
    %1893 = vmatmul.f32.gmra.mxu0 %v1855
    %v1894 = vpop.f32.mrf.mxu0
    %v1895 = vadd.f32 %v1875, %v1894
    %1896 = vdwg.mxu0
    %v1897 = vadd.f32 %v1825, %v1895
    %v1900 = vrot.slane %v1326, 7
    %v1901 = vrot.slane %v1327, 7
    %v1904 = vsel %vm1334, %v1324, %v1900
    %v1905 = vsel %vm1334, %v1325, %v1901
    %s1906 = scalar_lea.vmem [#allocation17], 1088
    %v1907 = vld [vmem:[%s1906] sm:$0xff]
    %v1908 = vld [vmem:[%s1906 + $0x8] sm:$0xff]
    %v1909 = vld [vmem:[%s1906 + $0x10] sm:$0xff]
    %v1910 = vld [vmem:[%s1906 + $0x18] sm:$0xff]
    %v1911 = vld [vmem:[%s1906 + $0x20] sm:$0xff]
    %v1912 = vld [vmem:[%s1906 + $0x28] sm:$0xff]
    %v1913 = vld [vmem:[%s1906 + $0x30] sm:$0xff]
    %v1914 = vld [vmem:[%s1906 + $0x38] sm:$0xff]
    %v1915 = vld [vmem:[%s1906 + $0x40] sm:$0xff]
    %v1916 = vld [vmem:[%s1906 + $0x48] sm:$0xff]
    %v1917 = vld [vmem:[%s1906 + $0x50] sm:$0xff]
    %v1918 = vld [vmem:[%s1906 + $0x58] sm:$0xff]
    %v1919 = vld [vmem:[%s1906 + $0x60] sm:$0xff]
    %v1920 = vld [vmem:[%s1906 + $0x68] sm:$0xff]
    %v1921 = vld [vmem:[%s1906 + $0x70] sm:$0xff]
    %v1922 = vld [vmem:[%s1906 + $0x78] sm:$0xff]
    %v1923 = vld [vmem:[%s1906 + $0x80] sm:$0xff]
    %v1925 = vsel %vm994, %v1905, 0
    %1927 = vmatpush.msra.mxu0 %v1922
    %1928 = vmatpush.msra.mxu0 %v1921
    %1929 = vmatpush.msra.mxu0 %v1920
    %1930 = vmatpush.msra.mxu0 %v1919
    %1931 = vmatpush.msra.mxu0 %v1918
    %1932 = vmatpush.msra.mxu0 %v1917
    %1933 = vmatpush.msra.mxu0 %v1916
    %1934 = vmatpush.msra.mxu0 %v1915
    %1935 = vmatpush.msra.mxu0 %v1914
    %1936 = vmatpush.msra.mxu0 %v1913
    %1937 = vmatpush.msra.mxu0 %v1912
    %1938 = vmatpush.msra.mxu0 %v1911
    %1939 = vmatpush.msra.mxu0 %v1910
    %1940 = vmatpush.msra.mxu0 %v1909
    %1941 = vmatpush.msra.mxu0 %v1908
    %1942 = vmatpush.msra.mxu0 %v1907
    %1943 = vmatmul.f32.gmra.mxu0 %v1904
    %v1944 = vpop.f32.mrf.mxu0
    %v1945 = vadd.f32 0.0, %v1944
    %1946 = vdwg.mxu0
    %1947 = vmatpush.msra.mxu0 0.0
    %1948 = vmatpush.msra.mxu0 0.0
    %1949 = vmatpush.msra.mxu0 0.0
    %1950 = vmatpush.msra.mxu0 0.0
    %1951 = vmatpush.msra.mxu0 0.0
    %1952 = vmatpush.msra.mxu0 0.0
    %1953 = vmatpush.msra.mxu0 0.0
    %1954 = vmatpush.msra.mxu0 0.0
    %1955 = vmatpush.msra.mxu0 0.0
    %1956 = vmatpush.msra.mxu0 0.0
    %1957 = vmatpush.msra.mxu0 0.0
    %1958 = vmatpush.msra.mxu0 0.0
    %1959 = vmatpush.msra.mxu0 0.0
    %1960 = vmatpush.msra.mxu0 0.0
    %1961 = vmatpush.msra.mxu0 0.0
    %1962 = vmatpush.msra.mxu0 %v1923
    %1963 = vmatmul.f32.gmra.mxu0 %v1925
    %v1964 = vpop.f32.mrf.mxu0
    %v1965 = vadd.f32 %v1945, %v1964
    %1966 = vdwg.mxu0
    %v1967 = vadd.f32 %v1897, %v1965
    %v1970 = vrot.slane %v1324, 1
    %v1971 = vrot.slane %v1325, 1
    %v1974 = vsel %vm1334, %v1970, %v1326
    %v1975 = vsel %vm1334, %v1971, %v1327
    %s1976 = scalar_lea.vmem [#allocation17], 1224
    %v1977 = vld [vmem:[%s1976] sm:$0xff]
    %v1978 = vld [vmem:[%s1976 + $0x8] sm:$0xff]
    %v1979 = vld [vmem:[%s1976 + $0x10] sm:$0xff]
    %v1980 = vld [vmem:[%s1976 + $0x18] sm:$0xff]
    %v1981 = vld [vmem:[%s1976 + $0x20] sm:$0xff]
    %v1982 = vld [vmem:[%s1976 + $0x28] sm:$0xff]
    %v1983 = vld [vmem:[%s1976 + $0x30] sm:$0xff]
    %v1984 = vld [vmem:[%s1976 + $0x38] sm:$0xff]
    %v1985 = vld [vmem:[%s1976 + $0x40] sm:$0xff]
    %v1986 = vld [vmem:[%s1976 + $0x48] sm:$0xff]
    %v1987 = vld [vmem:[%s1976 + $0x50] sm:$0xff]
    %v1988 = vld [vmem:[%s1976 + $0x58] sm:$0xff]
    %v1989 = vld [vmem:[%s1976 + $0x60] sm:$0xff]
    %v1990 = vld [vmem:[%s1976 + $0x68] sm:$0xff]
    %v1991 = vld [vmem:[%s1976 + $0x70] sm:$0xff]
    %v1992 = vld [vmem:[%s1976 + $0x78] sm:$0xff]
    %v1993 = vld [vmem:[%s1976 + $0x80] sm:$0xff]
    %v1995 = vsel %vm994, %v1975, 0
    %1997 = vmatpush.msra.mxu0 %v1992
    %1998 = vmatpush.msra.mxu0 %v1991
    %1999 = vmatpush.msra.mxu0 %v1990
    %2000 = vmatpush.msra.mxu0 %v1989
    %2001 = vmatpush.msra.mxu0 %v1988
    %2002 = vmatpush.msra.mxu0 %v1987
    %2003 = vmatpush.msra.mxu0 %v1986
    %2004 = vmatpush.msra.mxu0 %v1985
    %2005 = vmatpush.msra.mxu0 %v1984
    %2006 = vmatpush.msra.mxu0 %v1983
    %2007 = vmatpush.msra.mxu0 %v1982
    %2008 = vmatpush.msra.mxu0 %v1981
    %2009 = vmatpush.msra.mxu0 %v1980
    %2010 = vmatpush.msra.mxu0 %v1979
    %2011 = vmatpush.msra.mxu0 %v1978
    %2012 = vmatpush.msra.mxu0 %v1977
    %2013 = vmatmul.f32.gmra.mxu0 %v1974
    %v2014 = vpop.f32.mrf.mxu0
    %v2015 = vadd.f32 0.0, %v2014
    %2016 = vdwg.mxu0
    %2017 = vmatpush.msra.mxu0 0.0
    %2018 = vmatpush.msra.mxu0 0.0
    %2019 = vmatpush.msra.mxu0 0.0
    %2020 = vmatpush.msra.mxu0 0.0
    %2021 = vmatpush.msra.mxu0 0.0
    %2022 = vmatpush.msra.mxu0 0.0
    %2023 = vmatpush.msra.mxu0 0.0
    %2024 = vmatpush.msra.mxu0 0.0
    %2025 = vmatpush.msra.mxu0 0.0
    %2026 = vmatpush.msra.mxu0 0.0
    %2027 = vmatpush.msra.mxu0 0.0
    %2028 = vmatpush.msra.mxu0 0.0
    %2029 = vmatpush.msra.mxu0 0.0
    %2030 = vmatpush.msra.mxu0 0.0
    %2031 = vmatpush.msra.mxu0 0.0
    %2032 = vmatpush.msra.mxu0 %v1993
    %2033 = vmatmul.f32.gmra.mxu0 %v1995
    %v2034 = vpop.f32.mrf.mxu0
    %v2035 = vadd.f32 %v2015, %v2034
    %2036 = vdwg.mxu0
    %v2037 = vadd.f32 %v1967, %v2035
    %v2038 = vrot.slane %v1324, 2
    %v2039 = vrot.slane %v1325, 2
    %v2042 = vrot.slane %v1326, 1
    %v2043 = vrot.slane %v1327, 1
    %v2046 = vsel %vm1334, %v2038, %v2042
    %v2047 = vsel %vm1334, %v2039, %v2043
    %s2048 = scalar_lea.vmem [#allocation17], 1360
    %v2049 = vld [vmem:[%s2048] sm:$0xff]
    %v2050 = vld [vmem:[%s2048 + $0x8] sm:$0xff]
    %v2051 = vld [vmem:[%s2048 + $0x10] sm:$0xff]
    %v2052 = vld [vmem:[%s2048 + $0x18] sm:$0xff]
    %v2053 = vld [vmem:[%s2048 + $0x20] sm:$0xff]
    %v2054 = vld [vmem:[%s2048 + $0x28] sm:$0xff]
    %v2055 = vld [vmem:[%s2048 + $0x30] sm:$0xff]
    %v2056 = vld [vmem:[%s2048 + $0x38] sm:$0xff]
    %v2057 = vld [vmem:[%s2048 + $0x40] sm:$0xff]
    %v2058 = vld [vmem:[%s2048 + $0x48] sm:$0xff]
    %v2059 = vld [vmem:[%s2048 + $0x50] sm:$0xff]
    %v2060 = vld [vmem:[%s2048 + $0x58] sm:$0xff]
    %v2061 = vld [vmem:[%s2048 + $0x60] sm:$0xff]
    %v2062 = vld [vmem:[%s2048 + $0x68] sm:$0xff]
    %v2063 = vld [vmem:[%s2048 + $0x70] sm:$0xff]
    %v2064 = vld [vmem:[%s2048 + $0x78] sm:$0xff]
    %v2065 = vld [vmem:[%s2048 + $0x80] sm:$0xff]
    %v2067 = vsel %vm994, %v2047, 0
    %2069 = vmatpush.msra.mxu0 %v2064
    %2070 = vmatpush.msra.mxu0 %v2063
    %2071 = vmatpush.msra.mxu0 %v2062
    %2072 = vmatpush.msra.mxu0 %v2061
    %2073 = vmatpush.msra.mxu0 %v2060
    %2074 = vmatpush.msra.mxu0 %v2059
    %2075 = vmatpush.msra.mxu0 %v2058
    %2076 = vmatpush.msra.mxu0 %v2057
    %2077 = vmatpush.msra.mxu0 %v2056
    %2078 = vmatpush.msra.mxu0 %v2055
    %2079 = vmatpush.msra.mxu0 %v2054
    %2080 = vmatpush.msra.mxu0 %v2053
    %2081 = vmatpush.msra.mxu0 %v2052
    %2082 = vmatpush.msra.mxu0 %v2051
    %2083 = vmatpush.msra.mxu0 %v2050
    %2084 = vmatpush.msra.mxu0 %v2049
    %2085 = vmatmul.f32.gmra.mxu0 %v2046
    %v2086 = vpop.f32.mrf.mxu0
    %v2087 = vadd.f32 0.0, %v2086
    %2088 = vdwg.mxu0
    %2089 = vmatpush.msra.mxu0 0.0
    %2090 = vmatpush.msra.mxu0 0.0
    %2091 = vmatpush.msra.mxu0 0.0
    %2092 = vmatpush.msra.mxu0 0.0
    %2093 = vmatpush.msra.mxu0 0.0
    %2094 = vmatpush.msra.mxu0 0.0
    %2095 = vmatpush.msra.mxu0 0.0
    %2096 = vmatpush.msra.mxu0 0.0
    %2097 = vmatpush.msra.mxu0 0.0
    %2098 = vmatpush.msra.mxu0 0.0
    %2099 = vmatpush.msra.mxu0 0.0
    %2100 = vmatpush.msra.mxu0 0.0
    %2101 = vmatpush.msra.mxu0 0.0
    %2102 = vmatpush.msra.mxu0 0.0
    %2103 = vmatpush.msra.mxu0 0.0
    %2104 = vmatpush.msra.mxu0 %v2065
    %2105 = vmatmul.f32.gmra.mxu0 %v2067
    %v2106 = vpop.f32.mrf.mxu0
    %v2107 = vadd.f32 %v2087, %v2106
    %2108 = vdwg.mxu0
    %v2109 = vadd.f32 %v2037, %v2107
    %v2110 = vrot.slane %v1324, 3
    %v2111 = vrot.slane %v1325, 3
    %v2114 = vrot.slane %v1326, 2
    %v2115 = vrot.slane %v1327, 2
    %v2118 = vsel %vm1334, %v2110, %v2114
    %v2119 = vsel %vm1334, %v2111, %v2115
    %s2120 = scalar_lea.vmem [#allocation17], 1496
    %v2121 = vld [vmem:[%s2120] sm:$0xff]
    %v2122 = vld [vmem:[%s2120 + $0x8] sm:$0xff]
    %v2123 = vld [vmem:[%s2120 + $0x10] sm:$0xff]
    %v2124 = vld [vmem:[%s2120 + $0x18] sm:$0xff]
    %v2125 = vld [vmem:[%s2120 + $0x20] sm:$0xff]
    %v2126 = vld [vmem:[%s2120 + $0x28] sm:$0xff]
    %v2127 = vld [vmem:[%s2120 + $0x30] sm:$0xff]
    %v2128 = vld [vmem:[%s2120 + $0x38] sm:$0xff]
    %v2129 = vld [vmem:[%s2120 + $0x40] sm:$0xff]
    %v2130 = vld [vmem:[%s2120 + $0x48] sm:$0xff]
    %v2131 = vld [vmem:[%s2120 + $0x50] sm:$0xff]
    %v2132 = vld [vmem:[%s2120 + $0x58] sm:$0xff]
    %v2133 = vld [vmem:[%s2120 + $0x60] sm:$0xff]
    %v2134 = vld [vmem:[%s2120 + $0x68] sm:$0xff]
    %v2135 = vld [vmem:[%s2120 + $0x70] sm:$0xff]
    %v2136 = vld [vmem:[%s2120 + $0x78] sm:$0xff]
    %v2137 = vld [vmem:[%s2120 + $0x80] sm:$0xff]
    %v2139 = vsel %vm994, %v2119, 0
    %2141 = vmatpush.msra.mxu0 %v2136
    %2142 = vmatpush.msra.mxu0 %v2135
    %2143 = vmatpush.msra.mxu0 %v2134
    %2144 = vmatpush.msra.mxu0 %v2133
    %2145 = vmatpush.msra.mxu0 %v2132
    %2146 = vmatpush.msra.mxu0 %v2131
    %2147 = vmatpush.msra.mxu0 %v2130
    %2148 = vmatpush.msra.mxu0 %v2129
    %2149 = vmatpush.msra.mxu0 %v2128
    %2150 = vmatpush.msra.mxu0 %v2127
    %2151 = vmatpush.msra.mxu0 %v2126
    %2152 = vmatpush.msra.mxu0 %v2125
    %2153 = vmatpush.msra.mxu0 %v2124
    %2154 = vmatpush.msra.mxu0 %v2123
    %2155 = vmatpush.msra.mxu0 %v2122
    %2156 = vmatpush.msra.mxu0 %v2121
    %2157 = vmatmul.f32.gmra.mxu0 %v2118
    %v2158 = vpop.f32.mrf.mxu0
    %v2159 = vadd.f32 0.0, %v2158
    %2160 = vdwg.mxu0
    %2161 = vmatpush.msra.mxu0 0.0
    %2162 = vmatpush.msra.mxu0 0.0
    %2163 = vmatpush.msra.mxu0 0.0
    %2164 = vmatpush.msra.mxu0 0.0
    %2165 = vmatpush.msra.mxu0 0.0
    %2166 = vmatpush.msra.mxu0 0.0
    %2167 = vmatpush.msra.mxu0 0.0
    %2168 = vmatpush.msra.mxu0 0.0
    %2169 = vmatpush.msra.mxu0 0.0
    %2170 = vmatpush.msra.mxu0 0.0
    %2171 = vmatpush.msra.mxu0 0.0
    %2172 = vmatpush.msra.mxu0 0.0
    %2173 = vmatpush.msra.mxu0 0.0
    %2174 = vmatpush.msra.mxu0 0.0
    %2175 = vmatpush.msra.mxu0 0.0
    %2176 = vmatpush.msra.mxu0 %v2137
    %2177 = vmatmul.f32.gmra.mxu0 %v2139
    %v2178 = vpop.f32.mrf.mxu0
    %v2179 = vadd.f32 %v2159, %v2178
    %2180 = vdwg.mxu0
    %v2181 = vadd.f32 %v2109, %v2179
    %v2182 = vrot.slane %v1324, 4
    %v2183 = vrot.slane %v1325, 4
    %v2186 = vrot.slane %v1326, 3
    %v2187 = vrot.slane %v1327, 3
    %v2190 = vsel %vm1334, %v2182, %v2186
    %v2191 = vsel %vm1334, %v2183, %v2187
    %s2192 = scalar_lea.vmem [#allocation17], 1632
    %v2193 = vld [vmem:[%s2192] sm:$0xff]
    %v2194 = vld [vmem:[%s2192 + $0x8] sm:$0xff]
    %v2195 = vld [vmem:[%s2192 + $0x10] sm:$0xff]
    %v2196 = vld [vmem:[%s2192 + $0x18] sm:$0xff]
    %v2197 = vld [vmem:[%s2192 + $0x20] sm:$0xff]
    %v2198 = vld [vmem:[%s2192 + $0x28] sm:$0xff]
    %v2199 = vld [vmem:[%s2192 + $0x30] sm:$0xff]
    %v2200 = vld [vmem:[%s2192 + $0x38] sm:$0xff]
    %v2201 = vld [vmem:[%s2192 + $0x40] sm:$0xff]
    %v2202 = vld [vmem:[%s2192 + $0x48] sm:$0xff]
    %v2203 = vld [vmem:[%s2192 + $0x50] sm:$0xff]
    %v2204 = vld [vmem:[%s2192 + $0x58] sm:$0xff]
    %v2205 = vld [vmem:[%s2192 + $0x60] sm:$0xff]
    %v2206 = vld [vmem:[%s2192 + $0x68] sm:$0xff]
    %v2207 = vld [vmem:[%s2192 + $0x70] sm:$0xff]
    %v2208 = vld [vmem:[%s2192 + $0x78] sm:$0xff]
    %v2209 = vld [vmem:[%s2192 + $0x80] sm:$0xff]
    %v2211 = vsel %vm994, %v2191, 0
    %2213 = vmatpush.msra.mxu0 %v2208
    %2214 = vmatpush.msra.mxu0 %v2207
    %2215 = vmatpush.msra.mxu0 %v2206
    %2216 = vmatpush.msra.mxu0 %v2205
    %2217 = vmatpush.msra.mxu0 %v2204
    %2218 = vmatpush.msra.mxu0 %v2203
    %2219 = vmatpush.msra.mxu0 %v2202
    %2220 = vmatpush.msra.mxu0 %v2201
    %2221 = vmatpush.msra.mxu0 %v2200
    %2222 = vmatpush.msra.mxu0 %v2199
    %2223 = vmatpush.msra.mxu0 %v2198
    %2224 = vmatpush.msra.mxu0 %v2197
    %2225 = vmatpush.msra.mxu0 %v2196
    %2226 = vmatpush.msra.mxu0 %v2195
    %2227 = vmatpush.msra.mxu0 %v2194
    %2228 = vmatpush.msra.mxu0 %v2193
    %2229 = vmatmul.f32.gmra.mxu0 %v2190
    %v2230 = vpop.f32.mrf.mxu0
    %v2231 = vadd.f32 0.0, %v2230
    %2232 = vdwg.mxu0
    %2233 = vmatpush.msra.mxu0 0.0
    %2234 = vmatpush.msra.mxu0 0.0
    %2235 = vmatpush.msra.mxu0 0.0
    %2236 = vmatpush.msra.mxu0 0.0
    %2237 = vmatpush.msra.mxu0 0.0
    %2238 = vmatpush.msra.mxu0 0.0
    %2239 = vmatpush.msra.mxu0 0.0
    %2240 = vmatpush.msra.mxu0 0.0
    %2241 = vmatpush.msra.mxu0 0.0
    %2242 = vmatpush.msra.mxu0 0.0
    %2243 = vmatpush.msra.mxu0 0.0
    %2244 = vmatpush.msra.mxu0 0.0
    %2245 = vmatpush.msra.mxu0 0.0
    %2246 = vmatpush.msra.mxu0 0.0
    %2247 = vmatpush.msra.mxu0 0.0
    %2248 = vmatpush.msra.mxu0 %v2209
    %2249 = vmatmul.f32.gmra.mxu0 %v2211
    %v2250 = vpop.f32.mrf.mxu0
    %v2251 = vadd.f32 %v2231, %v2250
    %2252 = vdwg.mxu0
    %v2253 = vadd.f32 %v2181, %v2251
    %v2254 = vrot.slane %v1324, 5
    %v2255 = vrot.slane %v1325, 5
    %v2258 = vrot.slane %v1326, 4
    %v2259 = vrot.slane %v1327, 4
    %v2262 = vsel %vm1334, %v2254, %v2258
    %v2263 = vsel %vm1334, %v2255, %v2259
    %s2264 = scalar_lea.vmem [#allocation17], 1768
    %v2265 = vld [vmem:[%s2264] sm:$0xff]
    %v2266 = vld [vmem:[%s2264 + $0x8] sm:$0xff]
    %v2267 = vld [vmem:[%s2264 + $0x10] sm:$0xff]
    %v2268 = vld [vmem:[%s2264 + $0x18] sm:$0xff]
    %v2269 = vld [vmem:[%s2264 + $0x20] sm:$0xff]
    %v2270 = vld [vmem:[%s2264 + $0x28] sm:$0xff]
    %v2271 = vld [vmem:[%s2264 + $0x30] sm:$0xff]
    %v2272 = vld [vmem:[%s2264 + $0x38] sm:$0xff]
    %v2273 = vld [vmem:[%s2264 + $0x40] sm:$0xff]
    %v2274 = vld [vmem:[%s2264 + $0x48] sm:$0xff]
    %v2275 = vld [vmem:[%s2264 + $0x50] sm:$0xff]
    %v2276 = vld [vmem:[%s2264 + $0x58] sm:$0xff]
    %v2277 = vld [vmem:[%s2264 + $0x60] sm:$0xff]
    %v2278 = vld [vmem:[%s2264 + $0x68] sm:$0xff]
    %v2279 = vld [vmem:[%s2264 + $0x70] sm:$0xff]
    %v2280 = vld [vmem:[%s2264 + $0x78] sm:$0xff]
    %v2281 = vld [vmem:[%s2264 + $0x80] sm:$0xff]
    %v2283 = vsel %vm994, %v2263, 0
    %2285 = vmatpush.msra.mxu0 %v2280
    %2286 = vmatpush.msra.mxu0 %v2279
    %2287 = vmatpush.msra.mxu0 %v2278
    %2288 = vmatpush.msra.mxu0 %v2277
    %2289 = vmatpush.msra.mxu0 %v2276
    %2290 = vmatpush.msra.mxu0 %v2275
    %2291 = vmatpush.msra.mxu0 %v2274
    %2292 = vmatpush.msra.mxu0 %v2273
    %2293 = vmatpush.msra.mxu0 %v2272
    %2294 = vmatpush.msra.mxu0 %v2271
    %2295 = vmatpush.msra.mxu0 %v2270
    %2296 = vmatpush.msra.mxu0 %v2269
    %2297 = vmatpush.msra.mxu0 %v2268
    %2298 = vmatpush.msra.mxu0 %v2267
    %2299 = vmatpush.msra.mxu0 %v2266
    %2300 = vmatpush.msra.mxu0 %v2265
    %2301 = vmatmul.f32.gmra.mxu0 %v2262
    %v2302 = vpop.f32.mrf.mxu0
    %v2303 = vadd.f32 0.0, %v2302
    %2304 = vdwg.mxu0
    %2305 = vmatpush.msra.mxu0 0.0
    %2306 = vmatpush.msra.mxu0 0.0
    %2307 = vmatpush.msra.mxu0 0.0
    %2308 = vmatpush.msra.mxu0 0.0
    %2309 = vmatpush.msra.mxu0 0.0
    %2310 = vmatpush.msra.mxu0 0.0
    %2311 = vmatpush.msra.mxu0 0.0
    %2312 = vmatpush.msra.mxu0 0.0
    %2313 = vmatpush.msra.mxu0 0.0
    %2314 = vmatpush.msra.mxu0 0.0
    %2315 = vmatpush.msra.mxu0 0.0
    %2316 = vmatpush.msra.mxu0 0.0
    %2317 = vmatpush.msra.mxu0 0.0
    %2318 = vmatpush.msra.mxu0 0.0
    %2319 = vmatpush.msra.mxu0 0.0
    %2320 = vmatpush.msra.mxu0 %v2281
    %2321 = vmatmul.f32.gmra.mxu0 %v2283
    %v2322 = vpop.f32.mrf.mxu0
    %v2323 = vadd.f32 %v2303, %v2322
    %2324 = vdwg.mxu0
    %v2325 = vadd.f32 %v2253, %v2323
    %v2326 = vrot.slane %v1324, 6
    %v2327 = vrot.slane %v1325, 6
    %v2330 = vrot.slane %v1326, 5
    %v2331 = vrot.slane %v1327, 5
    %v2334 = vsel %vm1334, %v2326, %v2330
    %v2335 = vsel %vm1334, %v2327, %v2331
    %s2336 = scalar_lea.vmem [#allocation17], 1904
    %v2337 = vld [vmem:[%s2336] sm:$0xff]
    %v2338 = vld [vmem:[%s2336 + $0x8] sm:$0xff]
    %v2339 = vld [vmem:[%s2336 + $0x10] sm:$0xff]
    %v2340 = vld [vmem:[%s2336 + $0x18] sm:$0xff]
    %v2341 = vld [vmem:[%s2336 + $0x20] sm:$0xff]
    %v2342 = vld [vmem:[%s2336 + $0x28] sm:$0xff]
    %v2343 = vld [vmem:[%s2336 + $0x30] sm:$0xff]
    %v2344 = vld [vmem:[%s2336 + $0x38] sm:$0xff]
    %v2345 = vld [vmem:[%s2336 + $0x40] sm:$0xff]
    %v2346 = vld [vmem:[%s2336 + $0x48] sm:$0xff]
    %v2347 = vld [vmem:[%s2336 + $0x50] sm:$0xff]
    %v2348 = vld [vmem:[%s2336 + $0x58] sm:$0xff]
    %v2349 = vld [vmem:[%s2336 + $0x60] sm:$0xff]
    %v2350 = vld [vmem:[%s2336 + $0x68] sm:$0xff]
    %v2351 = vld [vmem:[%s2336 + $0x70] sm:$0xff]
    %v2352 = vld [vmem:[%s2336 + $0x78] sm:$0xff]
    %v2353 = vld [vmem:[%s2336 + $0x80] sm:$0xff]
    %v2355 = vsel %vm994, %v2335, 0
    %2357 = vmatpush.msra.mxu0 %v2352
    %2358 = vmatpush.msra.mxu0 %v2351
    %2359 = vmatpush.msra.mxu0 %v2350
    %2360 = vmatpush.msra.mxu0 %v2349
    %2361 = vmatpush.msra.mxu0 %v2348
    %2362 = vmatpush.msra.mxu0 %v2347
    %2363 = vmatpush.msra.mxu0 %v2346
    %2364 = vmatpush.msra.mxu0 %v2345
    %2365 = vmatpush.msra.mxu0 %v2344
    %2366 = vmatpush.msra.mxu0 %v2343
    %2367 = vmatpush.msra.mxu0 %v2342
    %2368 = vmatpush.msra.mxu0 %v2341
    %2369 = vmatpush.msra.mxu0 %v2340
    %2370 = vmatpush.msra.mxu0 %v2339
    %2371 = vmatpush.msra.mxu0 %v2338
    %2372 = vmatpush.msra.mxu0 %v2337
    %2373 = vmatmul.f32.gmra.mxu0 %v2334
    %v2374 = vpop.f32.mrf.mxu0
    %v2375 = vadd.f32 0.0, %v2374
    %2376 = vdwg.mxu0
    %2377 = vmatpush.msra.mxu0 0.0
    %2378 = vmatpush.msra.mxu0 0.0
    %2379 = vmatpush.msra.mxu0 0.0
    %2380 = vmatpush.msra.mxu0 0.0
    %2381 = vmatpush.msra.mxu0 0.0
    %2382 = vmatpush.msra.mxu0 0.0
    %2383 = vmatpush.msra.mxu0 0.0
    %2384 = vmatpush.msra.mxu0 0.0
    %2385 = vmatpush.msra.mxu0 0.0
    %2386 = vmatpush.msra.mxu0 0.0
    %2387 = vmatpush.msra.mxu0 0.0
    %2388 = vmatpush.msra.mxu0 0.0
    %2389 = vmatpush.msra.mxu0 0.0
    %2390 = vmatpush.msra.mxu0 0.0
    %2391 = vmatpush.msra.mxu0 0.0
    %2392 = vmatpush.msra.mxu0 %v2353
    %2393 = vmatmul.f32.gmra.mxu0 %v2355
    %v2394 = vpop.f32.mrf.mxu0
    %v2395 = vadd.f32 %v2375, %v2394
    %2396 = vdwg.mxu0
    %v2397 = vadd.f32 %v2325, %v2395
    %v2398 = vrot.slane %v1324, 7
    %v2399 = vrot.slane %v1325, 7
    %v2402 = vrot.slane %v1326, 6
    %v2403 = vrot.slane %v1327, 6
    %v2406 = vsel %vm1334, %v2398, %v2402
    %v2407 = vsel %vm1334, %v2399, %v2403
    %s2408 = scalar_lea.vmem [#allocation17], 2040
    %v2409 = vld [vmem:[%s2408] sm:$0xff]
    %v2410 = vld [vmem:[%s2408 + $0x8] sm:$0xff]
    %v2411 = vld [vmem:[%s2408 + $0x10] sm:$0xff]
    %v2412 = vld [vmem:[%s2408 + $0x18] sm:$0xff]
    %v2413 = vld [vmem:[%s2408 + $0x20] sm:$0xff]
    %v2414 = vld [vmem:[%s2408 + $0x28] sm:$0xff]
    %v2415 = vld [vmem:[%s2408 + $0x30] sm:$0xff]
    %v2416 = vld [vmem:[%s2408 + $0x38] sm:$0xff]
    %v2417 = vld [vmem:[%s2408 + $0x40] sm:$0xff]
    %v2418 = vld [vmem:[%s2408 + $0x48] sm:$0xff]
    %v2419 = vld [vmem:[%s2408 + $0x50] sm:$0xff]
    %v2420 = vld [vmem:[%s2408 + $0x58] sm:$0xff]
    %v2421 = vld [vmem:[%s2408 + $0x60] sm:$0xff]
    %v2422 = vld [vmem:[%s2408 + $0x68] sm:$0xff]
    %v2423 = vld [vmem:[%s2408 + $0x70] sm:$0xff]
    %v2424 = vld [vmem:[%s2408 + $0x78] sm:$0xff]
    %v2425 = vld [vmem:[%s2408 + $0x80] sm:$0xff]
    %v2427 = vsel %vm994, %v2407, 0
    %2429 = vmatpush.msra.mxu0 %v2424
    %2430 = vmatpush.msra.mxu0 %v2423
    %2431 = vmatpush.msra.mxu0 %v2422
    %2432 = vmatpush.msra.mxu0 %v2421
    %2433 = vmatpush.msra.mxu0 %v2420
    %2434 = vmatpush.msra.mxu0 %v2419
    %2435 = vmatpush.msra.mxu0 %v2418
    %2436 = vmatpush.msra.mxu0 %v2417
    %2437 = vmatpush.msra.mxu0 %v2416
    %2438 = vmatpush.msra.mxu0 %v2415
    %2439 = vmatpush.msra.mxu0 %v2414
    %2440 = vmatpush.msra.mxu0 %v2413
    %2441 = vmatpush.msra.mxu0 %v2412
    %2442 = vmatpush.msra.mxu0 %v2411
    %2443 = vmatpush.msra.mxu0 %v2410
    %2444 = vmatpush.msra.mxu0 %v2409
    %2445 = vmatmul.f32.gmra.mxu0 %v2406
    %v2446 = vpop.f32.mrf.mxu0
    %v2447 = vadd.f32 0.0, %v2446
    %2448 = vdwg.mxu0
    %2449 = vmatpush.msra.mxu0 0.0
    %2450 = vmatpush.msra.mxu0 0.0
    %2451 = vmatpush.msra.mxu0 0.0
    %2452 = vmatpush.msra.mxu0 0.0
    %2453 = vmatpush.msra.mxu0 0.0
    %2454 = vmatpush.msra.mxu0 0.0
    %2455 = vmatpush.msra.mxu0 0.0
    %2456 = vmatpush.msra.mxu0 0.0
    %2457 = vmatpush.msra.mxu0 0.0
    %2458 = vmatpush.msra.mxu0 0.0
    %2459 = vmatpush.msra.mxu0 0.0
    %2460 = vmatpush.msra.mxu0 0.0
    %2461 = vmatpush.msra.mxu0 0.0
    %2462 = vmatpush.msra.mxu0 0.0
    %2463 = vmatpush.msra.mxu0 0.0
    %2464 = vmatpush.msra.mxu0 %v2425
    %2465 = vmatmul.f32.gmra.mxu0 %v2427
    %v2466 = vpop.f32.mrf.mxu0
    %v2467 = vadd.f32 %v2447, %v2466
    %2468 = vdwg.mxu0
    %v2469 = vadd.f32 %v2397, %v2467
    %v2470 = vld [vmem:[#allocation19] sm:$0x1]
    %v2472 = vperm.slane %v2470, 0
    %v2474 = vadd.f32 %v2469, %v2472
    %v2475 = vld [vmem:[%s13] sm:$0xff]
    %v2476 = vld [vmem:[%s13 + $0x8] sm:$0xff]
    %v2477 = vld [vmem:[%s13 + $0x10] sm:$0xff]
    %v2478 = vld [vmem:[%s13 + $0x18] sm:$0xff]
    %v2479 = vld [vmem:[%s13 + $0x20] sm:$0xff]
    %v2480 = vld [vmem:[%s13 + $0x28] sm:$0xff]
    %v2481 = vld [vmem:[%s13 + $0x30] sm:$0xff]
    %v2482 = vld [vmem:[%s13 + $0x38] sm:$0xff]
    %v2483 = vlaneseq
    %v2484 = vand.u32 %v2483, 127
    %2485 = vset.pattern.permute.xlu0 0
    %2486 = vperm.xlu0 %2485, %v2475
    %v2487 = vpop.permute.xlu0 %2486
    %2488 = vset.pattern.permute.xlu0 0
    %2489 = vperm.xlu0 %2488, %v2476
    %v2490 = vpop.permute.xlu0 %2489
    %2491 = vset.pattern.permute.xlu0 0
    %2492 = vperm.xlu0 %2491, %v2477
    %v2493 = vpop.permute.xlu0 %2492
    %2494 = vset.pattern.permute.xlu0 0
    %2495 = vperm.xlu0 %2494, %v2478
    %v2496 = vpop.permute.xlu0 %2495
    %2497 = vset.pattern.permute.xlu0 0
    %2498 = vperm.xlu0 %2497, %v2479
    %v2499 = vpop.permute.xlu0 %2498
    %2500 = vset.pattern.permute.xlu0 0
    %2501 = vperm.xlu0 %2500, %v2480
    %v2502 = vpop.permute.xlu0 %2501
    %2503 = vset.pattern.permute.xlu0 0
    %2504 = vperm.xlu0 %2503, %v2481
    %v2505 = vpop.permute.xlu0 %2504
    %2506 = vset.pattern.permute.xlu0 0
    %2507 = vperm.xlu0 %2506, %v2482
    %v2508 = vpop.permute.xlu0 %2507
    %vm2509 = vcmp.eq.s32.totalorder %v2484, %v2487
    %vm2510 = vcmp.eq.s32.totalorder %v2484, %v2490
    %vm2511 = vcmp.eq.s32.totalorder %v2484, %v2493
    %vm2512 = vcmp.eq.s32.totalorder %v2484, %v2496
    %vm2513 = vcmp.eq.s32.totalorder %v2484, %v2499
    %vm2514 = vcmp.eq.s32.totalorder %v2484, %v2502
    %vm2515 = vcmp.eq.s32.totalorder %v2484, %v2505
    %vm2516 = vcmp.eq.s32.totalorder %v2484, %v2508
    %v2517 = vsel %vm2509, 1, 0
    %v2518 = vsel %vm2510, 1, 0
    %v2519 = vsel %vm2511, 1, 0
    %v2520 = vsel %vm2512, 1, 0
    %v2521 = vsel %vm2513, 1, 0
    %v2522 = vsel %vm2514, 1, 0
    %v2523 = vsel %vm2515, 1, 0
    %v2524 = vsel %vm2516, 1, 0
    %v2525 = vcvt.s32.f32 %v2517
    %v2526 = vcvt.s32.f32 %v2518
    %v2527 = vcvt.s32.f32 %v2519
    %v2528 = vcvt.s32.f32 %v2520
    %v2529 = vcvt.s32.f32 %v2521
    %v2530 = vcvt.s32.f32 %v2522
    %v2531 = vcvt.s32.f32 %v2523
    %v2532 = vcvt.s32.f32 %v2524
    %v2533 = vld [vmem:[#allocation20] sm:$0xff]
    %v2534 = vld [vmem:[#allocation20 + $0x8] sm:$0xff]
    %v2535 = vld [vmem:[#allocation20 + $0x10] sm:$0xff]
    %v2536 = vld [vmem:[#allocation20 + $0x18] sm:$0xff]
    %v2537 = vld [vmem:[#allocation20 + $0x20] sm:$0xff]
    %v2538 = vld [vmem:[#allocation20 + $0x28] sm:$0xff]
    %v2539 = vld [vmem:[#allocation20 + $0x30] sm:$0xff]
    %v2540 = vld [vmem:[#allocation20 + $0x38] sm:$0xff]
    %v2541 = vld [vmem:[#allocation20 + $0x40] sm:$0x7]
    %v2542 = vld [vmem:[#allocation20 + $0x48] sm:$0x7]
    %v2543 = vld [vmem:[#allocation22] sm:$0x3]
    %v2545 = vperm.slane %v2543, 0
    %v2546 = vperm.slane %v2543, 1
    %vm2549 = vcmask 285696
    %v2551 = vsel %vm2549, %v2525, 0
    %v2554 = vsel %vm2549, %v2526, 0
    %v2557 = vsel %vm2549, %v2527, 0
    %v2560 = vsel %vm2549, %v2528, 0
    %v2563 = vsel %vm2549, %v2529, 0
    %v2566 = vsel %vm2549, %v2530, 0
    %v2569 = vsel %vm2549, %v2531, 0
    %v2572 = vsel %vm2549, %v2532, 0
    %v2575 = vsel %vm662, %v2541, 0
    %v2578 = vsel %vm662, %v2542, 0
    %2580 = vmatpush.msra.mxu0 0.0
    %2581 = vmatpush.msra.mxu0 0.0
    %2582 = vmatpush.msra.mxu0 0.0
    %2583 = vmatpush.msra.mxu0 0.0
    %2584 = vmatpush.msra.mxu0 0.0
    %2585 = vmatpush.msra.mxu0 0.0
    %2586 = vmatpush.msra.mxu0 0.0
    %2587 = vmatpush.msra.mxu0 0.0
    %2588 = vmatpush.msra.mxu0 0.0
    %2589 = vmatpush.msra.mxu0 0.0
    %2590 = vmatpush.msra.mxu0 0.0
    %2591 = vmatpush.msra.mxu0 %v2575
    %2592 = vmatpush.msra.mxu0 %v2539
    %2593 = vmatpush.msra.mxu0 %v2537
    %2594 = vmatpush.msra.mxu0 %v2535
    %2595 = vmatpush.msra.mxu0 %v2533
    %2596 = vmatmul.f32.gmra.mxu0 %v2551
    %v2597 = vpop.f32.mrf.mxu0
    %v2598 = vadd.f32 %v2545, %v2597
    %2599 = vmatmul.f32.gmra.mxu0 %v2554
    %v2600 = vpop.f32.mrf.mxu0
    %v2601 = vadd.f32 %v2545, %v2600
    %2602 = vmatmul.f32.gmra.mxu0 %v2557
    %v2603 = vpop.f32.mrf.mxu0
    %v2604 = vadd.f32 %v2545, %v2603
    %2605 = vmatmul.f32.gmra.mxu0 %v2560
    %v2606 = vpop.f32.mrf.mxu0
    %v2607 = vadd.f32 %v2545, %v2606
    %2608 = vmatmul.f32.gmra.mxu0 %v2563
    %v2609 = vpop.f32.mrf.mxu0
    %v2610 = vadd.f32 %v2545, %v2609
    %2611 = vmatmul.f32.gmra.mxu0 %v2566
    %v2612 = vpop.f32.mrf.mxu0
    %v2613 = vadd.f32 %v2545, %v2612
    %2614 = vmatmul.f32.gmra.mxu0 %v2569
    %v2615 = vpop.f32.mrf.mxu0
    %v2616 = vadd.f32 %v2545, %v2615
    %2617 = vmatmul.f32.gmra.mxu0 %v2572
    %v2618 = vpop.f32.mrf.mxu0
    %v2619 = vadd.f32 %v2545, %v2618
    %2620 = vdwg.mxu0
    %2621 = vmatpush.msra.mxu0 0.0
    %2622 = vmatpush.msra.mxu0 0.0
    %2623 = vmatpush.msra.mxu0 0.0
    %2624 = vmatpush.msra.mxu0 0.0
    %2625 = vmatpush.msra.mxu0 0.0
    %2626 = vmatpush.msra.mxu0 0.0
    %2627 = vmatpush.msra.mxu0 0.0
    %2628 = vmatpush.msra.mxu0 0.0
    %2629 = vmatpush.msra.mxu0 0.0
    %2630 = vmatpush.msra.mxu0 0.0
    %2631 = vmatpush.msra.mxu0 0.0
    %2632 = vmatpush.msra.mxu0 %v2578
    %2633 = vmatpush.msra.mxu0 %v2540
    %2634 = vmatpush.msra.mxu0 %v2538
    %2635 = vmatpush.msra.mxu0 %v2536
    %2636 = vmatpush.msra.mxu0 %v2534
    %2637 = vmatmul.f32.gmra.mxu0 %v2551
    %v2638 = vpop.f32.mrf.mxu0
    %v2639 = vadd.f32 %v2546, %v2638
    %2640 = vmatmul.f32.gmra.mxu0 %v2554
    %v2641 = vpop.f32.mrf.mxu0
    %v2642 = vadd.f32 %v2546, %v2641
    %2643 = vmatmul.f32.gmra.mxu0 %v2557
    %v2644 = vpop.f32.mrf.mxu0
    %v2645 = vadd.f32 %v2546, %v2644
    %2646 = vmatmul.f32.gmra.mxu0 %v2560
    %v2647 = vpop.f32.mrf.mxu0
    %v2648 = vadd.f32 %v2546, %v2647
    %2649 = vmatmul.f32.gmra.mxu0 %v2563
    %v2650 = vpop.f32.mrf.mxu0
    %v2651 = vadd.f32 %v2546, %v2650
    %2652 = vmatmul.f32.gmra.mxu0 %v2566
    %v2653 = vpop.f32.mrf.mxu0
    %v2654 = vadd.f32 %v2546, %v2653
    %2655 = vmatmul.f32.gmra.mxu0 %v2569
    %v2656 = vpop.f32.mrf.mxu0
    %v2657 = vadd.f32 %v2546, %v2656
    %2658 = vmatmul.f32.gmra.mxu0 %v2572
    %v2659 = vpop.f32.mrf.mxu0
    %v2660 = vadd.f32 %v2546, %v2659
    %2661 = vdwg.mxu0
    %v2662 = vld [vmem:[#allocation23] sm:$0xff]
    %v2663 = vld [vmem:[#allocation23 + $0x8] sm:$0xff]
    %v2664 = vld [vmem:[#allocation23 + $0x10] sm:$0xff]
    %v2665 = vld [vmem:[#allocation23 + $0x18] sm:$0xff]
    %v2666 = vld [vmem:[#allocation23 + $0x20] sm:$0xff]
    %v2667 = vld [vmem:[#allocation23 + $0x28] sm:$0xff]
    %v2668 = vld [vmem:[#allocation23 + $0x30] sm:$0xff]
    %v2669 = vld [vmem:[#allocation23 + $0x38] sm:$0xff]
    %v2670 = vld [vmem:[#allocation23 + $0x40] sm:$0xff]
    %v2671 = vld [vmem:[#allocation23 + $0x48] sm:$0xff]
    %v2672 = vld [vmem:[#allocation23 + $0x50] sm:$0xff]
    %v2673 = vld [vmem:[#allocation23 + $0x58] sm:$0xff]
    %v2674 = vld [vmem:[#allocation23 + $0x60] sm:$0xff]
    %v2675 = vld [vmem:[#allocation23 + $0x68] sm:$0xff]
    %v2676 = vld [vmem:[#allocation23 + $0x70] sm:$0xff]
    %v2677 = vld [vmem:[#allocation23 + $0x78] sm:$0xff]
    %v2678 = vld [vmem:[#allocation25] sm:$0x3]
    %v2680 = vperm.slane %v2678, 0
    %v2681 = vperm.slane %v2678, 1
    %vm2684 = vcmask 523264
    %v2686 = vsel %vm2684, 0.0, 0
    %2688 = vmatpush.msra.mxu0 0.0
    %2689 = vmatpush.msra.mxu0 0.0
    %2690 = vmatpush.msra.mxu0 0.0
    %2691 = vmatpush.msra.mxu0 0.0
    %2692 = vmatpush.msra.mxu0 0.0
    %2693 = vmatpush.msra.mxu0 0.0
    %2694 = vmatpush.msra.mxu0 0.0
    %2695 = vmatpush.msra.mxu0 0.0
    %2696 = vmatpush.msra.mxu0 %v2676
    %2697 = vmatpush.msra.mxu0 %v2674
    %2698 = vmatpush.msra.mxu0 %v2672
    %2699 = vmatpush.msra.mxu0 %v2670
    %2700 = vmatpush.msra.mxu0 %v2668
    %2701 = vmatpush.msra.mxu0 %v2666
    %2702 = vmatpush.msra.mxu0 %v2664
    %2703 = vmatpush.msra.mxu0 %v2662
    %2704 = vmatmul.f32.gmra.mxu0 %v2686
    %v2705 = vpop.f32.mrf.mxu0
    %v2706 = vadd.f32 %v2680, %v2705
    %2707 = vmatmul.f32.gmra.mxu0 %v2686
    %v2708 = vpop.f32.mrf.mxu0
    %v2709 = vadd.f32 %v2680, %v2708
    %2710 = vmatmul.f32.gmra.mxu0 %v2686
    %v2711 = vpop.f32.mrf.mxu0
    %v2712 = vadd.f32 %v2680, %v2711
    %2713 = vmatmul.f32.gmra.mxu0 %v2686
    %v2714 = vpop.f32.mrf.mxu0
    %v2715 = vadd.f32 %v2680, %v2714
    %2716 = vdwg.mxu0
    %2717 = vmatpush.msra.mxu0 0.0
    %2718 = vmatpush.msra.mxu0 0.0
    %2719 = vmatpush.msra.mxu0 0.0
    %2720 = vmatpush.msra.mxu0 0.0
    %2721 = vmatpush.msra.mxu0 0.0
    %2722 = vmatpush.msra.mxu0 0.0
    %2723 = vmatpush.msra.mxu0 0.0
    %2724 = vmatpush.msra.mxu0 0.0
    %2725 = vmatpush.msra.mxu0 %v2677
    %2726 = vmatpush.msra.mxu0 %v2675
    %2727 = vmatpush.msra.mxu0 %v2673
    %2728 = vmatpush.msra.mxu0 %v2671
    %2729 = vmatpush.msra.mxu0 %v2669
    %2730 = vmatpush.msra.mxu0 %v2667
    %2731 = vmatpush.msra.mxu0 %v2665
    %2732 = vmatpush.msra.mxu0 %v2663
    %2733 = vmatmul.f32.gmra.mxu0 %v2686
    %v2734 = vpop.f32.mrf.mxu0
    %v2735 = vadd.f32 %v2681, %v2734
    %2736 = vmatmul.f32.gmra.mxu0 %v2686
    %v2737 = vpop.f32.mrf.mxu0
    %v2738 = vadd.f32 %v2681, %v2737
    %2739 = vmatmul.f32.gmra.mxu0 %v2686
    %v2740 = vpop.f32.mrf.mxu0
    %v2741 = vadd.f32 %v2681, %v2740
    %2742 = vmatmul.f32.gmra.mxu0 %v2686
    %v2743 = vpop.f32.mrf.mxu0
    %v2744 = vadd.f32 %v2681, %v2743
    %2745 = vdwg.mxu0
    %v2746 = vadd.f32 %v2598, %v2706
    %v2747 = vadd.f32 %v2601, %v2709
    %v2748 = vadd.f32 %v2604, %v2712
    %v2749 = vadd.f32 %v2607, %v2715
    %v2750 = vxor.u32 %v2746, 2147483648
    %v2751 = vxor.u32 %v2747, 2147483648
    %v2752 = vxor.u32 %v2748, 2147483648
    %v2753 = vxor.u32 %v2749, 2147483648
    %v2754 = vmul.f32 %v2750, 1.442695
    %v2755 = vpow.pop %v2754
    %v2756 = vmul.f32 %v2751, 1.442695
    %v2757 = vpow.pop %v2756
    %v2758 = vmul.f32 %v2752, 1.442695
    %v2759 = vpow.pop %v2758
    %v2760 = vmul.f32 %v2753, 1.442695
    %v2761 = vpow.pop %v2760
    %v2762 = vadd.f32 %v2755, 1.0
    %v2763 = vadd.f32 %v2757, 1.0
    %v2764 = vadd.f32 %v2759, 1.0
    %v2765 = vadd.f32 %v2761, 1.0
    %v2766 = vrcp.pop %v2762
    %v2767 = vmul.f32 %v2762, %v2766
    %v2768 = vsub.f32 1.0, %v2767
    %v2769 = vmul.f32 %v2766, %v2768
    %v2770 = vadd.f32 %v2766, %v2769
    %vm2771 = vweird.f32 %v2762
    %vm2772 = vweird.f32 %v2766
    %vm2773 = vmor %vm2771, %vm2772
    %v2774 = vsel %vm2773, %v2766, %v2770
    %v2775 = vand.u32 2147483647, %v2762
    %vm2776 = vcmp.eq.f32.partialorder %v2775, 8.507059e+37
    %v2777 = vand.u32 %v2762, 2147483648
    %v2778 = vor.u32 1.1754944e-38, %v2777
    %v2779 = vsel %vm2776, %v2778, %v2774
    %v2780 = vmul.f32 1.0, %v2779
    %v2781 = vrcp.pop %v2763
    %v2782 = vmul.f32 %v2763, %v2781
    %v2783 = vsub.f32 1.0, %v2782
    %v2784 = vmul.f32 %v2781, %v2783
    %v2785 = vadd.f32 %v2781, %v2784
    %vm2786 = vweird.f32 %v2763
    %vm2787 = vweird.f32 %v2781
    %vm2788 = vmor %vm2786, %vm2787
    %v2789 = vsel %vm2788, %v2781, %v2785
    %v2790 = vand.u32 2147483647, %v2763
    %vm2791 = vcmp.eq.f32.partialorder %v2790, 8.507059e+37
    %v2792 = vand.u32 %v2763, 2147483648
    %v2793 = vor.u32 1.1754944e-38, %v2792
    %v2794 = vsel %vm2791, %v2793, %v2789
    %v2795 = vmul.f32 1.0, %v2794
    %v2796 = vrcp.pop %v2764
    %v2797 = vmul.f32 %v2764, %v2796
    %v2798 = vsub.f32 1.0, %v2797
    %v2799 = vmul.f32 %v2796, %v2798
    %v2800 = vadd.f32 %v2796, %v2799
    %vm2801 = vweird.f32 %v2764
    %vm2802 = vweird.f32 %v2796
    %vm2803 = vmor %vm2801, %vm2802
    %v2804 = vsel %vm2803, %v2796, %v2800
    %v2805 = vand.u32 2147483647, %v2764
    %vm2806 = vcmp.eq.f32.partialorder %v2805, 8.507059e+37
    %v2807 = vand.u32 %v2764, 2147483648
    %v2808 = vor.u32 1.1754944e-38, %v2807
    %v2809 = vsel %vm2806, %v2808, %v2804
    %v2810 = vmul.f32 1.0, %v2809
    %v2811 = vrcp.pop %v2765
    %v2812 = vmul.f32 %v2765, %v2811
    %v2813 = vsub.f32 1.0, %v2812
    %v2814 = vmul.f32 %v2811, %v2813
    %v2815 = vadd.f32 %v2811, %v2814
    %vm2816 = vweird.f32 %v2765
    %vm2817 = vweird.f32 %v2811
    %vm2818 = vmor %vm2816, %vm2817
    %v2819 = vsel %vm2818, %v2811, %v2815
    %v2820 = vand.u32 2147483647, %v2765
    %vm2821 = vcmp.eq.f32.partialorder %v2820, 8.507059e+37
    %v2822 = vand.u32 %v2765, 2147483648
    %v2823 = vor.u32 1.1754944e-38, %v2822
    %v2824 = vsel %vm2821, %v2823, %v2819
    %v2825 = vmul.f32 1.0, %v2824
    %2826 = vrot.lane.b32.xlu0 %v2780, 64
    %v2827 = vpop.permute.xlu0 %2826
    %2828 = vrot.lane.b32.xlu0 %v2795, 64
    %v2829 = vpop.permute.xlu0 %2828
    %2830 = vrot.lane.b32.xlu0 %v2810, 64
    %v2831 = vpop.permute.xlu0 %2830
    %2832 = vrot.lane.b32.xlu0 %v2825, 64
    %v2833 = vpop.permute.xlu0 %2832
    %v2834 = vmul.f32 %v2780, %v2735
    %v2835 = vmul.f32 %v2795, %v2738
    %v2836 = vmul.f32 %v2810, %v2741
    %v2837 = vmul.f32 %v2825, %v2744
    %v2838 = vadd.f32 %v2639, %v2834
    %v2839 = vadd.f32 %v2642, %v2835
    %v2840 = vadd.f32 %v2645, %v2836
    %v2841 = vadd.f32 %v2648, %v2837
    %v2842 = vtanh.pop %v2838
    %v2843 = vtanh.pop %v2839
    %v2844 = vtanh.pop %v2840
    %v2845 = vtanh.pop %v2841
    %v2846 = vsub.f32 1.0, %v2827
    %v2847 = vsub.f32 1.0, %v2829
    %v2848 = vsub.f32 1.0, %v2831
    %v2849 = vsub.f32 1.0, %v2833
    %v2850 = vmul.f32 %v2846, %v2842
    %v2851 = vmul.f32 %v2847, %v2843
    %v2852 = vmul.f32 %v2848, %v2844
    %v2853 = vmul.f32 %v2849, %v2845
    %v2854 = vmul.f32 %v2827, 0.0
    %v2855 = vmul.f32 %v2829, 0.0
    %v2856 = vmul.f32 %v2831, 0.0
    %v2857 = vmul.f32 %v2833, 0.0
    %v2858 = vadd.f32 %v2850, %v2854
    %v2859 = vadd.f32 %v2851, %v2855
    %v2860 = vadd.f32 %v2852, %v2856
    %v2861 = vadd.f32 %v2853, %v2857
    %v2862 = vld [vmem:[%s15] sm:$0xf]
    %v2864 = vsel %vm518, %v2862, 0
    %2866 = vmatpush.msra.mxu0 0.0
    %2867 = vmatpush.msra.mxu0 0.0
    %2868 = vmatpush.msra.mxu0 0.0
    %2869 = vmatpush.msra.mxu0 0.0
    %2870 = vmatpush.msra.mxu0 0.0
    %2871 = vmatpush.msra.mxu0 0.0
    %2872 = vmatpush.msra.mxu0 0.0
    %2873 = vmatpush.msra.mxu0 0.0
    %2874 = vmatpush.msra.mxu0 0.0
    %2875 = vmatpush.msra.mxu0 0.0
    %2876 = vmatpush.msra.mxu0 0.0
    %2877 = vmatpush.msra.mxu0 0.0
    %2878 = vmatpush.msra.mxu0 %v2861
    %2879 = vmatpush.msra.mxu0 %v2860
    %2880 = vmatpush.msra.mxu0 %v2859
    %2881 = vmatpush.msra.mxu0 %v2858
    %2882 = vmatmul.f32.gmra.mxu0 %v2864
    %v2883 = vpop.f32.mrf.mxu0
    %v2884 = vadd.f32 0.0, %v2883
    %2885 = vdwg.mxu0
    %v2887 = vsel %vm2684, %v2858, 0
    %v2890 = vsel %vm2684, %v2859, 0
    %v2893 = vsel %vm2684, %v2860, 0
    %v2896 = vsel %vm2684, %v2861, 0
    %2898 = vmatpush.msra.mxu0 0.0
    %2899 = vmatpush.msra.mxu0 0.0
    %2900 = vmatpush.msra.mxu0 0.0
    %2901 = vmatpush.msra.mxu0 0.0
    %2902 = vmatpush.msra.mxu0 0.0
    %2903 = vmatpush.msra.mxu0 0.0
    %2904 = vmatpush.msra.mxu0 0.0
    %2905 = vmatpush.msra.mxu0 0.0
    %2906 = vmatpush.msra.mxu0 %v2676
    %2907 = vmatpush.msra.mxu0 %v2674
    %2908 = vmatpush.msra.mxu0 %v2672
    %2909 = vmatpush.msra.mxu0 %v2670
    %2910 = vmatpush.msra.mxu0 %v2668
    %2911 = vmatpush.msra.mxu0 %v2666
    %2912 = vmatpush.msra.mxu0 %v2664
    %2913 = vmatpush.msra.mxu0 %v2662
    %2914 = vmatmul.f32.gmra.mxu0 %v2887
    %v2915 = vpop.f32.mrf.mxu0
    %v2916 = vadd.f32 %v2680, %v2915
    %2917 = vmatmul.f32.gmra.mxu0 %v2890
    %v2918 = vpop.f32.mrf.mxu0
    %v2919 = vadd.f32 %v2680, %v2918
    %2920 = vmatmul.f32.gmra.mxu0 %v2893
    %v2921 = vpop.f32.mrf.mxu0
    %v2922 = vadd.f32 %v2680, %v2921
    %2923 = vmatmul.f32.gmra.mxu0 %v2896
    %v2924 = vpop.f32.mrf.mxu0
    %v2925 = vadd.f32 %v2680, %v2924
    %2926 = vdwg.mxu0
    %2927 = vmatpush.msra.mxu0 0.0
    %2928 = vmatpush.msra.mxu0 0.0
    %2929 = vmatpush.msra.mxu0 0.0
    %2930 = vmatpush.msra.mxu0 0.0
    %2931 = vmatpush.msra.mxu0 0.0
    %2932 = vmatpush.msra.mxu0 0.0
    %2933 = vmatpush.msra.mxu0 0.0
    %2934 = vmatpush.msra.mxu0 0.0
    %2935 = vmatpush.msra.mxu0 %v2677
    %2936 = vmatpush.msra.mxu0 %v2675
    %2937 = vmatpush.msra.mxu0 %v2673
    %2938 = vmatpush.msra.mxu0 %v2671
    %2939 = vmatpush.msra.mxu0 %v2669
    %2940 = vmatpush.msra.mxu0 %v2667
    %2941 = vmatpush.msra.mxu0 %v2665
    %2942 = vmatpush.msra.mxu0 %v2663
    %2943 = vmatmul.f32.gmra.mxu0 %v2887
    %v2944 = vpop.f32.mrf.mxu0
    %v2945 = vadd.f32 %v2681, %v2944
    %2946 = vmatmul.f32.gmra.mxu0 %v2890
    %v2947 = vpop.f32.mrf.mxu0
    %v2948 = vadd.f32 %v2681, %v2947
    %2949 = vmatmul.f32.gmra.mxu0 %v2893
    %v2950 = vpop.f32.mrf.mxu0
    %v2951 = vadd.f32 %v2681, %v2950
    %2952 = vmatmul.f32.gmra.mxu0 %v2896
    %v2953 = vpop.f32.mrf.mxu0
    %v2954 = vadd.f32 %v2681, %v2953
    %2955 = vdwg.mxu0
    %v2956 = vadd.f32 %v2610, %v2916
    %v2957 = vadd.f32 %v2613, %v2919
    %v2958 = vadd.f32 %v2616, %v2922
    %v2959 = vadd.f32 %v2619, %v2925
    %v2960 = vxor.u32 %v2956, 2147483648
    %v2961 = vxor.u32 %v2957, 2147483648
    %v2962 = vxor.u32 %v2958, 2147483648
    %v2963 = vxor.u32 %v2959, 2147483648
    %v2964 = vmul.f32 %v2960, 1.442695
    %v2965 = vpow.pop %v2964
    %v2966 = vmul.f32 %v2961, 1.442695
    %v2967 = vpow.pop %v2966
    %v2968 = vmul.f32 %v2962, 1.442695
    %v2969 = vpow.pop %v2968
    %v2970 = vmul.f32 %v2963, 1.442695
    %v2971 = vpow.pop %v2970
    %v2972 = vadd.f32 %v2965, 1.0
    %v2973 = vadd.f32 %v2967, 1.0
    %v2974 = vadd.f32 %v2969, 1.0
    %v2975 = vadd.f32 %v2971, 1.0
    %v2976 = vrcp.pop %v2972
    %v2977 = vmul.f32 %v2972, %v2976
    %v2978 = vsub.f32 1.0, %v2977
    %v2979 = vmul.f32 %v2976, %v2978
    %v2980 = vadd.f32 %v2976, %v2979
    %vm2981 = vweird.f32 %v2972
    %vm2982 = vweird.f32 %v2976
    %vm2983 = vmor %vm2981, %vm2982
    %v2984 = vsel %vm2983, %v2976, %v2980
    %v2985 = vand.u32 2147483647, %v2972
    %vm2986 = vcmp.eq.f32.partialorder %v2985, 8.507059e+37
    %v2987 = vand.u32 %v2972, 2147483648
    %v2988 = vor.u32 1.1754944e-38, %v2987
    %v2989 = vsel %vm2986, %v2988, %v2984
    %v2990 = vmul.f32 1.0, %v2989
    %v2991 = vrcp.pop %v2973
    %v2992 = vmul.f32 %v2973, %v2991
    %v2993 = vsub.f32 1.0, %v2992
    %v2994 = vmul.f32 %v2991, %v2993
    %v2995 = vadd.f32 %v2991, %v2994
    %vm2996 = vweird.f32 %v2973
    %vm2997 = vweird.f32 %v2991
    %vm2998 = vmor %vm2996, %vm2997
    %v2999 = vsel %vm2998, %v2991, %v2995
    %v3000 = vand.u32 2147483647, %v2973
    %vm3001 = vcmp.eq.f32.partialorder %v3000, 8.507059e+37
    %v3002 = vand.u32 %v2973, 2147483648
    %v3003 = vor.u32 1.1754944e-38, %v3002
    %v3004 = vsel %vm3001, %v3003, %v2999
    %v3005 = vmul.f32 1.0, %v3004
    %v3006 = vrcp.pop %v2974
    %v3007 = vmul.f32 %v2974, %v3006
    %v3008 = vsub.f32 1.0, %v3007
    %v3009 = vmul.f32 %v3006, %v3008
    %v3010 = vadd.f32 %v3006, %v3009
    %vm3011 = vweird.f32 %v2974
    %vm3012 = vweird.f32 %v3006
    %vm3013 = vmor %vm3011, %vm3012
    %v3014 = vsel %vm3013, %v3006, %v3010
    %v3015 = vand.u32 2147483647, %v2974
    %vm3016 = vcmp.eq.f32.partialorder %v3015, 8.507059e+37
    %v3017 = vand.u32 %v2974, 2147483648
    %v3018 = vor.u32 1.1754944e-38, %v3017
    %v3019 = vsel %vm3016, %v3018, %v3014
    %v3020 = vmul.f32 1.0, %v3019
    %v3021 = vrcp.pop %v2975
    %v3022 = vmul.f32 %v2975, %v3021
    %v3023 = vsub.f32 1.0, %v3022
    %v3024 = vmul.f32 %v3021, %v3023
    %v3025 = vadd.f32 %v3021, %v3024
    %vm3026 = vweird.f32 %v2975
    %vm3027 = vweird.f32 %v3021
    %vm3028 = vmor %vm3026, %vm3027
    %v3029 = vsel %vm3028, %v3021, %v3025
    %v3030 = vand.u32 2147483647, %v2975
    %vm3031 = vcmp.eq.f32.partialorder %v3030, 8.507059e+37
    %v3032 = vand.u32 %v2975, 2147483648
    %v3033 = vor.u32 1.1754944e-38, %v3032
    %v3034 = vsel %vm3031, %v3033, %v3029
    %v3035 = vmul.f32 1.0, %v3034
    %3036 = vrot.lane.b32.xlu0 %v2990, 64
    %v3037 = vpop.permute.xlu0 %3036
    %3038 = vrot.lane.b32.xlu0 %v3005, 64
    %v3039 = vpop.permute.xlu0 %3038
    %3040 = vrot.lane.b32.xlu0 %v3020, 64
    %v3041 = vpop.permute.xlu0 %3040
    %3042 = vrot.lane.b32.xlu0 %v3035, 64
    %v3043 = vpop.permute.xlu0 %3042
    %v3044 = vmul.f32 %v2990, %v2945
    %v3045 = vmul.f32 %v3005, %v2948
    %v3046 = vmul.f32 %v3020, %v2951
    %v3047 = vmul.f32 %v3035, %v2954
    %v3048 = vadd.f32 %v2651, %v3044
    %v3049 = vadd.f32 %v2654, %v3045
    %v3050 = vadd.f32 %v2657, %v3046
    %v3051 = vadd.f32 %v2660, %v3047
    %v3052 = vtanh.pop %v3048
    %v3053 = vtanh.pop %v3049
    %v3054 = vtanh.pop %v3050
    %v3055 = vtanh.pop %v3051
    %v3056 = vsub.f32 1.0, %v3037
    %v3057 = vsub.f32 1.0, %v3039
    %v3058 = vsub.f32 1.0, %v3041
    %v3059 = vsub.f32 1.0, %v3043
    %v3060 = vmul.f32 %v3056, %v3052
    %v3061 = vmul.f32 %v3057, %v3053
    %v3062 = vmul.f32 %v3058, %v3054
    %v3063 = vmul.f32 %v3059, %v3055
    %v3064 = vmul.f32 %v3037, %v2858
    %v3065 = vmul.f32 %v3039, %v2859
    %v3066 = vmul.f32 %v3041, %v2860
    %v3067 = vmul.f32 %v3043, %v2861
    %v3068 = vadd.f32 %v3060, %v3064
    %v3069 = vadd.f32 %v3061, %v3065
    %v3070 = vadd.f32 %v3062, %v3066
    %v3071 = vadd.f32 %v3063, %v3067
    %s3072 = scalar_lea.vmem %s15, 4
    %v3073 = vld [vmem:[%s3072] sm:$0xf]
    %v3075 = vsel %vm518, %v3073, 0
    %3077 = vmatpush.msra.mxu0 0.0
    %3078 = vmatpush.msra.mxu0 0.0
    %3079 = vmatpush.msra.mxu0 0.0
    %3080 = vmatpush.msra.mxu0 0.0
    %3081 = vmatpush.msra.mxu0 0.0
    %3082 = vmatpush.msra.mxu0 0.0
    %3083 = vmatpush.msra.mxu0 0.0
    %3084 = vmatpush.msra.mxu0 0.0
    %3085 = vmatpush.msra.mxu0 0.0
    %3086 = vmatpush.msra.mxu0 0.0
    %3087 = vmatpush.msra.mxu0 0.0
    %3088 = vmatpush.msra.mxu0 0.0
    %3089 = vmatpush.msra.mxu0 %v3071
    %3090 = vmatpush.msra.mxu0 %v3070
    %3091 = vmatpush.msra.mxu0 %v3069
    %3092 = vmatpush.msra.mxu0 %v3068
    %3093 = vmatmul.f32.gmra.mxu0 %v3075
    %v3094 = vpop.f32.mrf.mxu0
    %v3095 = vadd.f32 0.0, %v3094
    %3096 = vdwg.mxu0
    %v3098 = vrot.slane %v3095, 7
    %v3100 = vsel %vm1334, %v2884, %v3098
    %v3101 = vld [vmem:[#allocation26] sm:$0xff]
    %v3102 = vld [vmem:[#allocation26 + $0x8] sm:$0xff]
    %v3103 = vld [vmem:[#allocation26 + $0x10] sm:$0xff]
    %v3104 = vld [vmem:[#allocation26 + $0x18] sm:$0xff]
    %v3105 = vld [vmem:[#allocation26 + $0x20] sm:$0xff]
    %v3106 = vld [vmem:[#allocation26 + $0x28] sm:$0xff]
    %v3107 = vld [vmem:[#allocation26 + $0x30] sm:$0xff]
    %v3108 = vld [vmem:[#allocation26 + $0x38] sm:$0xff]
    %v3110 = vrot.slane %v2884, 1
    %v3112 = vsel %vm1334, %v3110, %v3095
    %s3113 = scalar_lea.vmem [#allocation26], 64
    %v3114 = vld [vmem:[%s3113] sm:$0xff]
    %v3115 = vld [vmem:[%s3113 + $0x8] sm:$0xff]
    %v3116 = vld [vmem:[%s3113 + $0x10] sm:$0xff]
    %v3117 = vld [vmem:[%s3113 + $0x18] sm:$0xff]
    %v3118 = vld [vmem:[%s3113 + $0x20] sm:$0xff]
    %v3119 = vld [vmem:[%s3113 + $0x28] sm:$0xff]
    %v3120 = vld [vmem:[%s3113 + $0x30] sm:$0xff]
    %v3121 = vld [vmem:[%s3113 + $0x38] sm:$0xff]
    %v3123 = vsel %vm2684, %v3112, 0
    %3125 = vmatpush.msra.mxu0 0.0
    %3126 = vmatpush.msra.mxu0 0.0
    %3127 = vmatpush.msra.mxu0 0.0
    %3128 = vmatpush.msra.mxu0 0.0
    %3129 = vmatpush.msra.mxu0 0.0
    %3130 = vmatpush.msra.mxu0 0.0
    %3131 = vmatpush.msra.mxu0 0.0
    %3132 = vmatpush.msra.mxu0 0.0
    %3133 = vmatpush.msra.mxu0 %v3121
    %3134 = vmatpush.msra.mxu0 %v3120
    %3135 = vmatpush.msra.mxu0 %v3119
    %3136 = vmatpush.msra.mxu0 %v3118
    %3137 = vmatpush.msra.mxu0 %v3117
    %3138 = vmatpush.msra.mxu0 %v3116
    %3139 = vmatpush.msra.mxu0 %v3115
    %3140 = vmatpush.msra.mxu0 %v3114
    %3141 = vmatmul.f32.gmra.mxu0 %v3123
    %v3142 = vpop.f32.mrf.mxu0
    %v3143 = vadd.f32 0.0, %v3142
    %3144 = vdwg.mxu0
    %v3146 = vsel %vm2684, %v3100, 0
    %3148 = vmatpush.msra.mxu0 0.0
    %3149 = vmatpush.msra.mxu0 0.0
    %3150 = vmatpush.msra.mxu0 0.0
    %3151 = vmatpush.msra.mxu0 0.0
    %3152 = vmatpush.msra.mxu0 0.0
    %3153 = vmatpush.msra.mxu0 0.0
    %3154 = vmatpush.msra.mxu0 0.0
    %3155 = vmatpush.msra.mxu0 0.0
    %3156 = vmatpush.msra.mxu0 %v3108
    %3157 = vmatpush.msra.mxu0 %v3107
    %3158 = vmatpush.msra.mxu0 %v3106
    %3159 = vmatpush.msra.mxu0 %v3105
    %3160 = vmatpush.msra.mxu0 %v3104
    %3161 = vmatpush.msra.mxu0 %v3103
    %3162 = vmatpush.msra.mxu0 %v3102
    %3163 = vmatpush.msra.mxu0 %v3101
    %3164 = vmatmul.f32.gmra.mxu0 %v3146
    %v3165 = vpop.f32.mrf.mxu0
    %v3166 = vadd.f32 %v3143, %v3165
    %3167 = vdwg.mxu0
    %v3168 = vrot.slane %v2884, 2
    %v3170 = vrot.slane %v3095, 1
    %v3172 = vsel %vm1334, %v3168, %v3170
    %s3173 = scalar_lea.vmem [#allocation26], 128
    %v3174 = vld [vmem:[%s3173] sm:$0xff]
    %v3175 = vld [vmem:[%s3173 + $0x8] sm:$0xff]
    %v3176 = vld [vmem:[%s3173 + $0x10] sm:$0xff]
    %v3177 = vld [vmem:[%s3173 + $0x18] sm:$0xff]
    %v3178 = vld [vmem:[%s3173 + $0x20] sm:$0xff]
    %v3179 = vld [vmem:[%s3173 + $0x28] sm:$0xff]
    %v3180 = vld [vmem:[%s3173 + $0x30] sm:$0xff]
    %v3181 = vld [vmem:[%s3173 + $0x38] sm:$0xff]
    %v3183 = vsel %vm2684, %v3172, 0
    %3185 = vmatpush.msra.mxu0 0.0
    %3186 = vmatpush.msra.mxu0 0.0
    %3187 = vmatpush.msra.mxu0 0.0
    %3188 = vmatpush.msra.mxu0 0.0
    %3189 = vmatpush.msra.mxu0 0.0
    %3190 = vmatpush.msra.mxu0 0.0
    %3191 = vmatpush.msra.mxu0 0.0
    %3192 = vmatpush.msra.mxu0 0.0
    %3193 = vmatpush.msra.mxu0 %v3181
    %3194 = vmatpush.msra.mxu0 %v3180
    %3195 = vmatpush.msra.mxu0 %v3179
    %3196 = vmatpush.msra.mxu0 %v3178
    %3197 = vmatpush.msra.mxu0 %v3177
    %3198 = vmatpush.msra.mxu0 %v3176
    %3199 = vmatpush.msra.mxu0 %v3175
    %3200 = vmatpush.msra.mxu0 %v3174
    %3201 = vmatmul.f32.gmra.mxu0 %v3183
    %v3202 = vpop.f32.mrf.mxu0
    %v3203 = vadd.f32 0.0, %v3202
    %3204 = vdwg.mxu0
    %v3205 = vadd.f32 %v3166, %v3203
    %v3206 = vrot.slane %v2884, 3
    %v3208 = vrot.slane %v3095, 2
    %v3210 = vsel %vm1334, %v3206, %v3208
    %s3211 = scalar_lea.vmem [#allocation26], 192
    %v3212 = vld [vmem:[%s3211] sm:$0xff]
    %v3213 = vld [vmem:[%s3211 + $0x8] sm:$0xff]
    %v3214 = vld [vmem:[%s3211 + $0x10] sm:$0xff]
    %v3215 = vld [vmem:[%s3211 + $0x18] sm:$0xff]
    %v3216 = vld [vmem:[%s3211 + $0x20] sm:$0xff]
    %v3217 = vld [vmem:[%s3211 + $0x28] sm:$0xff]
    %v3218 = vld [vmem:[%s3211 + $0x30] sm:$0xff]
    %v3219 = vld [vmem:[%s3211 + $0x38] sm:$0xff]
    %v3221 = vsel %vm2684, %v3210, 0
    %3223 = vmatpush.msra.mxu0 0.0
    %3224 = vmatpush.msra.mxu0 0.0
    %3225 = vmatpush.msra.mxu0 0.0
    %3226 = vmatpush.msra.mxu0 0.0
    %3227 = vmatpush.msra.mxu0 0.0
    %3228 = vmatpush.msra.mxu0 0.0
    %3229 = vmatpush.msra.mxu0 0.0
    %3230 = vmatpush.msra.mxu0 0.0
    %3231 = vmatpush.msra.mxu0 %v3219
    %3232 = vmatpush.msra.mxu0 %v3218
    %3233 = vmatpush.msra.mxu0 %v3217
    %3234 = vmatpush.msra.mxu0 %v3216
    %3235 = vmatpush.msra.mxu0 %v3215
    %3236 = vmatpush.msra.mxu0 %v3214
    %3237 = vmatpush.msra.mxu0 %v3213
    %3238 = vmatpush.msra.mxu0 %v3212
    %3239 = vmatmul.f32.gmra.mxu0 %v3221
    %v3240 = vpop.f32.mrf.mxu0
    %v3241 = vadd.f32 0.0, %v3240
    %3242 = vdwg.mxu0
    %v3243 = vadd.f32 %v3205, %v3241
    %v3244 = vld [vmem:[#allocation28] sm:$0x1]
    %v3246 = vperm.slane %v3244, 0
    %v3248 = vadd.f32 %v3243, %v3246
    %v3249 = vld [vmem:[#allocation29] sm:$0xff]
    %v3250 = vld [vmem:[#allocation29 + $0x8] sm:$0xff]
    %v3251 = vld [vmem:[#allocation29 + $0x10] sm:$0xff]
    %v3252 = vld [vmem:[#allocation29 + $0x18] sm:$0xff]
    %v3253 = vld [vmem:[#allocation29 + $0x20] sm:$0xff]
    %v3254 = vld [vmem:[#allocation29 + $0x28] sm:$0xff]
    %v3255 = vld [vmem:[#allocation29 + $0x30] sm:$0xff]
    %v3256 = vld [vmem:[#allocation29 + $0x38] sm:$0xff]
    %v3257 = vld [vmem:[#allocation29 + $0x40] sm:$0xff]
    %v3258 = vld [vmem:[#allocation29 + $0x48] sm:$0xff]
    %v3259 = vld [vmem:[#allocation29 + $0x50] sm:$0xff]
    %v3260 = vld [vmem:[#allocation29 + $0x58] sm:$0xff]
    %v3261 = vld [vmem:[#allocation29 + $0x60] sm:$0xff]
    %v3262 = vld [vmem:[#allocation29 + $0x68] sm:$0xff]
    %v3263 = vld [vmem:[#allocation29 + $0x70] sm:$0xff]
    %v3264 = vld [vmem:[#allocation29 + $0x78] sm:$0xff]
    %v3265 = vld [vmem:[#allocation29 + $0x80] sm:$0xff]
    %v3266 = vld [vmem:[#allocation29 + $0x88] sm:$0xff]
    %v3267 = vld [vmem:[#allocation29 + $0x90] sm:$0xff]
    %v3268 = vld [vmem:[#allocation29 + $0x98] sm:$0xff]
    %v3269 = vld [vmem:[#allocation29 + $0xa0] sm:$0xff]
    %v3270 = vld [vmem:[#allocation29 + $0xa8] sm:$0xff]
    %v3271 = vld [vmem:[#allocation29 + $0xb0] sm:$0xff]
    %v3272 = vld [vmem:[#allocation29 + $0xb8] sm:$0xff]
    %v3273 = vld [vmem:[#allocation29 + $0xc0] sm:$0xff]
    %v3274 = vld [vmem:[#allocation29 + $0xc8] sm:$0xff]
    %v3275 = vld [vmem:[#allocation29 + $0xd0] sm:$0xff]
    %v3276 = vld [vmem:[#allocation29 + $0xd8] sm:$0xff]
    %v3277 = vld [vmem:[#allocation29 + $0xe0] sm:$0xff]
    %v3278 = vld [vmem:[#allocation29 + $0xe8] sm:$0xff]
    %v3279 = vld [vmem:[#allocation29 + $0xf0] sm:$0xff]
    %v3280 = vld [vmem:[#allocation29 + $0xf8] sm:$0xff]
    %v3281 = vld [vmem:[#allocation31] sm:$0xff]
    %v3282 = vld [vmem:[#allocation31 + $0x8] sm:$0xff]
    %v3283 = vld [vmem:[#allocation31 + $0x10] sm:$0xff]
    %v3284 = vld [vmem:[#allocation31 + $0x18] sm:$0xff]
    %v3285 = vld [vmem:[#allocation31 + $0x20] sm:$0xff]
    %v3286 = vld [vmem:[#allocation31 + $0x28] sm:$0xff]
    %v3287 = vld [vmem:[#allocation31 + $0x30] sm:$0xff]
    %v3288 = vld [vmem:[#allocation31 + $0x38] sm:$0xff]
    %v3289 = vld [vmem:[#allocation31 + $0x40] sm:$0xff]
    %v3290 = vld [vmem:[#allocation31 + $0x48] sm:$0xff]
    %v3291 = vld [vmem:[#allocation31 + $0x50] sm:$0xff]
    %v3292 = vld [vmem:[#allocation31 + $0x58] sm:$0xff]
    %v3293 = vld [vmem:[#allocation31 + $0x60] sm:$0xff]
    %v3294 = vld [vmem:[#allocation31 + $0x68] sm:$0xff]
    %v3295 = vld [vmem:[#allocation31 + $0x70] sm:$0xff]
    %v3296 = vld [vmem:[#allocation31 + $0x78] sm:$0xff]
    %v3297 = vld [vmem:[#allocation31 + $0x80] sm:$0xff]
    %v3298 = vld [vmem:[#allocation31 + $0x88] sm:$0xff]
    %v3299 = vld [vmem:[#allocation31 + $0x90] sm:$0xff]
    %v3300 = vld [vmem:[#allocation31 + $0x98] sm:$0xff]
    %v3301 = vld [vmem:[#allocation31 + $0xa0] sm:$0xff]
    %v3302 = vld [vmem:[#allocation31 + $0xa8] sm:$0xff]
    %v3303 = vld [vmem:[#allocation31 + $0xb0] sm:$0xff]
    %v3304 = vld [vmem:[#allocation31 + $0xb8] sm:$0xff]
    %v3305 = vld [vmem:[#allocation31 + $0xc0] sm:$0xff]
    %v3306 = vld [vmem:[#allocation31 + $0xc8] sm:$0xff]
    %v3307 = vld [vmem:[#allocation31 + $0xd0] sm:$0xff]
    %v3308 = vld [vmem:[#allocation31 + $0xd8] sm:$0xff]
    %v3309 = vld [vmem:[#allocation31 + $0xe0] sm:$0xff]
    %v3310 = vld [vmem:[#allocation31 + $0xe8] sm:$0xff]
    %v3311 = vld [vmem:[#allocation31 + $0xf0] sm:$0xff]
    %v3312 = vld [vmem:[#allocation31 + $0xf8] sm:$0xff]
    %3313 = vmatpush.msra.mxu0 %v3311
    %3314 = vmatpush.msra.mxu0 %v3309
    %3315 = vmatpush.msra.mxu0 %v3307
    %3316 = vmatpush.msra.mxu0 %v3305
    %3317 = vmatpush.msra.mxu0 %v3303
    %3318 = vmatpush.msra.mxu0 %v3301
    %3319 = vmatpush.msra.mxu0 %v3299
    %3320 = vmatpush.msra.mxu0 %v3297
    %3321 = vmatpush.msra.mxu0 %v3295
    %3322 = vmatpush.msra.mxu0 %v3293
    %3323 = vmatpush.msra.mxu0 %v3291
    %3324 = vmatpush.msra.mxu0 %v3289
    %3325 = vmatpush.msra.mxu0 %v3287
    %3326 = vmatpush.msra.mxu0 %v3285
    %3327 = vmatpush.msra.mxu0 %v3283
    %3328 = vmatpush.msra.mxu0 %v3281
    %3329 = vmatmul.f32.gmra.mxu0 %v2474
    %v3330 = vpop.f32.mrf.mxu0
    %v3331 = vadd.f32 0.0, %v3330
    %3332 = vdwg.mxu0
    %3333 = vmatpush.msra.mxu0 %v3312
    %3334 = vmatpush.msra.mxu0 %v3310
    %3335 = vmatpush.msra.mxu0 %v3308
    %3336 = vmatpush.msra.mxu0 %v3306
    %3337 = vmatpush.msra.mxu0 %v3304
    %3338 = vmatpush.msra.mxu0 %v3302
    %3339 = vmatpush.msra.mxu0 %v3300
    %3340 = vmatpush.msra.mxu0 %v3298
    %3341 = vmatpush.msra.mxu0 %v3296
    %3342 = vmatpush.msra.mxu0 %v3294
    %3343 = vmatpush.msra.mxu0 %v3292
    %3344 = vmatpush.msra.mxu0 %v3290
    %3345 = vmatpush.msra.mxu0 %v3288
    %3346 = vmatpush.msra.mxu0 %v3286
    %3347 = vmatpush.msra.mxu0 %v3284
    %3348 = vmatpush.msra.mxu0 %v3282
    %3349 = vmatmul.f32.gmra.mxu0 %v2474
    %v3350 = vpop.f32.mrf.mxu0
    %v3351 = vadd.f32 0.0, %v3350
    %3352 = vdwg.mxu0
    %3353 = vmatpush.msra.mxu0 %v3279
    %3354 = vmatpush.msra.mxu0 %v3277
    %3355 = vmatpush.msra.mxu0 %v3275
    %3356 = vmatpush.msra.mxu0 %v3273
    %3357 = vmatpush.msra.mxu0 %v3271
    %3358 = vmatpush.msra.mxu0 %v3269
    %3359 = vmatpush.msra.mxu0 %v3267
    %3360 = vmatpush.msra.mxu0 %v3265
    %3361 = vmatpush.msra.mxu0 %v3263
    %3362 = vmatpush.msra.mxu0 %v3261
    %3363 = vmatpush.msra.mxu0 %v3259
    %3364 = vmatpush.msra.mxu0 %v3257
    %3365 = vmatpush.msra.mxu0 %v3255
    %3366 = vmatpush.msra.mxu0 %v3253
    %3367 = vmatpush.msra.mxu0 %v3251
    %3368 = vmatpush.msra.mxu0 %v3249
    %3369 = vmatmul.f32.gmra.mxu0 %v638
    %v3370 = vpop.f32.mrf.mxu0
    %v3371 = vadd.f32 %v3331, %v3370
    %3372 = vdwg.mxu0
    %3373 = vmatpush.msra.mxu0 %v3280
    %3374 = vmatpush.msra.mxu0 %v3278
    %3375 = vmatpush.msra.mxu0 %v3276
    %3376 = vmatpush.msra.mxu0 %v3274
    %3377 = vmatpush.msra.mxu0 %v3272
    %3378 = vmatpush.msra.mxu0 %v3270
    %3379 = vmatpush.msra.mxu0 %v3268
    %3380 = vmatpush.msra.mxu0 %v3266
    %3381 = vmatpush.msra.mxu0 %v3264
    %3382 = vmatpush.msra.mxu0 %v3262
    %3383 = vmatpush.msra.mxu0 %v3260
    %3384 = vmatpush.msra.mxu0 %v3258
    %3385 = vmatpush.msra.mxu0 %v3256
    %3386 = vmatpush.msra.mxu0 %v3254
    %3387 = vmatpush.msra.mxu0 %v3252
    %3388 = vmatpush.msra.mxu0 %v3250
    %3389 = vmatmul.f32.gmra.mxu0 %v638
    %v3390 = vpop.f32.mrf.mxu0
    %v3391 = vadd.f32 %v3351, %v3390
    %3392 = vdwg.mxu0
    %v3393 = vld [vmem:[#allocation32] sm:$0xff]
    %v3394 = vld [vmem:[#allocation32 + $0x8] sm:$0xff]
    %v3395 = vld [vmem:[#allocation32 + $0x10] sm:$0xff]
    %v3396 = vld [vmem:[#allocation32 + $0x18] sm:$0xff]
    %v3397 = vld [vmem:[#allocation32 + $0x20] sm:$0xff]
    %v3398 = vld [vmem:[#allocation32 + $0x28] sm:$0xff]
    %v3399 = vld [vmem:[#allocation32 + $0x30] sm:$0xff]
    %v3400 = vld [vmem:[#allocation32 + $0x38] sm:$0xff]
    %v3401 = vld [vmem:[#allocation32 + $0x40] sm:$0xff]
    %v3402 = vld [vmem:[#allocation32 + $0x48] sm:$0xff]
    %v3403 = vld [vmem:[#allocation32 + $0x50] sm:$0xff]
    %v3404 = vld [vmem:[#allocation32 + $0x58] sm:$0xff]
    %v3405 = vld [vmem:[#allocation32 + $0x60] sm:$0xff]
    %v3406 = vld [vmem:[#allocation32 + $0x68] sm:$0xff]
    %v3407 = vld [vmem:[#allocation32 + $0x70] sm:$0xff]
    %v3408 = vld [vmem:[#allocation32 + $0x78] sm:$0xff]
    %v3409 = vld [vmem:[#allocation32 + $0x80] sm:$0xff]
    %v3410 = vld [vmem:[#allocation32 + $0x88] sm:$0xff]
    %v3411 = vld [vmem:[#allocation32 + $0x90] sm:$0xff]
    %v3412 = vld [vmem:[#allocation32 + $0x98] sm:$0xff]
    %v3413 = vld [vmem:[#allocation32 + $0xa0] sm:$0xff]
    %v3414 = vld [vmem:[#allocation32 + $0xa8] sm:$0xff]
    %v3415 = vld [vmem:[#allocation32 + $0xb0] sm:$0xff]
    %v3416 = vld [vmem:[#allocation32 + $0xb8] sm:$0xff]
    %v3417 = vld [vmem:[#allocation32 + $0xc0] sm:$0xff]
    %v3418 = vld [vmem:[#allocation32 + $0xc8] sm:$0xff]
    %v3419 = vld [vmem:[#allocation32 + $0xd0] sm:$0xff]
    %v3420 = vld [vmem:[#allocation32 + $0xd8] sm:$0xff]
    %v3421 = vld [vmem:[#allocation32 + $0xe0] sm:$0xff]
    %v3422 = vld [vmem:[#allocation32 + $0xe8] sm:$0xff]
    %v3423 = vld [vmem:[#allocation32 + $0xf0] sm:$0xff]
    %v3424 = vld [vmem:[#allocation32 + $0xf8] sm:$0xff]
    %3425 = vmatpush.msra.mxu0 %v3423
    %3426 = vmatpush.msra.mxu0 %v3421
    %3427 = vmatpush.msra.mxu0 %v3419
    %3428 = vmatpush.msra.mxu0 %v3417
    %3429 = vmatpush.msra.mxu0 %v3415
    %3430 = vmatpush.msra.mxu0 %v3413
    %3431 = vmatpush.msra.mxu0 %v3411
    %3432 = vmatpush.msra.mxu0 %v3409
    %3433 = vmatpush.msra.mxu0 %v3407
    %3434 = vmatpush.msra.mxu0 %v3405
    %3435 = vmatpush.msra.mxu0 %v3403
    %3436 = vmatpush.msra.mxu0 %v3401
    %3437 = vmatpush.msra.mxu0 %v3399
    %3438 = vmatpush.msra.mxu0 %v3397
    %3439 = vmatpush.msra.mxu0 %v3395
    %3440 = vmatpush.msra.mxu0 %v3393
    %3441 = vmatmul.f32.gmra.mxu0 %v3248
    %v3442 = vpop.f32.mrf.mxu0
    %v3443 = vadd.f32 0.0, %v3442
    %3444 = vdwg.mxu0
    %3445 = vmatpush.msra.mxu0 %v3424
    %3446 = vmatpush.msra.mxu0 %v3422
    %3447 = vmatpush.msra.mxu0 %v3420
    %3448 = vmatpush.msra.mxu0 %v3418
    %3449 = vmatpush.msra.mxu0 %v3416
    %3450 = vmatpush.msra.mxu0 %v3414
    %3451 = vmatpush.msra.mxu0 %v3412
    %3452 = vmatpush.msra.mxu0 %v3410
    %3453 = vmatpush.msra.mxu0 %v3408
    %3454 = vmatpush.msra.mxu0 %v3406
    %3455 = vmatpush.msra.mxu0 %v3404
    %3456 = vmatpush.msra.mxu0 %v3402
    %3457 = vmatpush.msra.mxu0 %v3400
    %3458 = vmatpush.msra.mxu0 %v3398
    %3459 = vmatpush.msra.mxu0 %v3396
    %3460 = vmatpush.msra.mxu0 %v3394
    %3461 = vmatmul.f32.gmra.mxu0 %v3248
    %v3462 = vpop.f32.mrf.mxu0
    %v3463 = vadd.f32 0.0, %v3462
    %3464 = vdwg.mxu0
    %v3465 = vadd.f32 %v3371, %v3443
    %v3466 = vadd.f32 %v3391, %v3463
    %v3467 = vld [vmem:[#allocation34] sm:$0x3]
    %v3469 = vperm.slane %v3467, 0
    %v3470 = vperm.slane %v3467, 1
    %v3473 = vadd.f32 %v3465, %v3469
    %v3474 = vadd.f32 %v3466, %v3470
    %v3475 = vmax.f32 %v3473, 0.0
    %v3476 = vmax.f32 %v3474, 0.0
    %v3477 = vld [vmem:[#allocation35] sm:$0xff]
    %v3478 = vld [vmem:[#allocation35 + $0x8] sm:$0xff]
    %v3479 = vld [vmem:[#allocation35 + $0x10] sm:$0xff]
    %v3480 = vld [vmem:[#allocation35 + $0x18] sm:$0xff]
    %v3481 = vld [vmem:[#allocation35 + $0x20] sm:$0xff]
    %v3482 = vld [vmem:[#allocation35 + $0x28] sm:$0xff]
    %v3483 = vld [vmem:[#allocation35 + $0x30] sm:$0xff]
    %v3484 = vld [vmem:[#allocation35 + $0x38] sm:$0xff]
    %v3485 = vld [vmem:[#allocation35 + $0x40] sm:$0xff]
    %v3486 = vld [vmem:[#allocation35 + $0x48] sm:$0xff]
    %v3487 = vld [vmem:[#allocation35 + $0x50] sm:$0xff]
    %v3488 = vld [vmem:[#allocation35 + $0x58] sm:$0xff]
    %v3489 = vld [vmem:[#allocation35 + $0x60] sm:$0xff]
    %v3490 = vld [vmem:[#allocation35 + $0x68] sm:$0xff]
    %v3491 = vld [vmem:[#allocation35 + $0x70] sm:$0xff]
    %v3492 = vld [vmem:[#allocation35 + $0x78] sm:$0xff]
    %v3493 = vld [vmem:[#allocation35 + $0x80] sm:$0xff]
    %v3494 = vld [vmem:[#allocation35 + $0x88] sm:$0xff]
    %v3495 = vld [vmem:[#allocation35 + $0x90] sm:$0xff]
    %v3496 = vld [vmem:[#allocation35 + $0x98] sm:$0xff]
    %v3497 = vld [vmem:[#allocation35 + $0xa0] sm:$0xff]
    %v3498 = vld [vmem:[#allocation35 + $0xa8] sm:$0xff]
    %v3499 = vld [vmem:[#allocation35 + $0xb0] sm:$0xff]
    %v3500 = vld [vmem:[#allocation35 + $0xb8] sm:$0xff]
    %v3501 = vld [vmem:[#allocation35 + $0xc0] sm:$0xff]
    %v3502 = vld [vmem:[#allocation35 + $0xc8] sm:$0xff]
    %v3503 = vld [vmem:[#allocation35 + $0xd0] sm:$0xff]
    %v3504 = vld [vmem:[#allocation35 + $0xd8] sm:$0xff]
    %v3505 = vld [vmem:[#allocation35 + $0xe0] sm:$0xff]
    %v3506 = vld [vmem:[#allocation35 + $0xe8] sm:$0xff]
    %v3507 = vld [vmem:[#allocation35 + $0xf0] sm:$0xff]
    %v3508 = vld [vmem:[#allocation35 + $0xf8] sm:$0xff]
    %v3509 = vld [vmem:[#allocation37] sm:$0x1]
    %v3511 = vperm.slane %v3509, 0
    %3513 = vmatpush.msra.mxu0 %v3492
    %3514 = vmatpush.msra.mxu0 %v3491
    %3515 = vmatpush.msra.mxu0 %v3490
    %3516 = vmatpush.msra.mxu0 %v3489
    %3517 = vmatpush.msra.mxu0 %v3488
    %3518 = vmatpush.msra.mxu0 %v3487
    %3519 = vmatpush.msra.mxu0 %v3486
    %3520 = vmatpush.msra.mxu0 %v3485
    %3521 = vmatpush.msra.mxu0 %v3484
    %3522 = vmatpush.msra.mxu0 %v3483
    %3523 = vmatpush.msra.mxu0 %v3482
    %3524 = vmatpush.msra.mxu0 %v3481
    %3525 = vmatpush.msra.mxu0 %v3480
    %3526 = vmatpush.msra.mxu0 %v3479
    %3527 = vmatpush.msra.mxu0 %v3478
    %3528 = vmatpush.msra.mxu0 %v3477
    %3529 = vmatmul.f32.gmra.mxu0 %v3475
    %v3530 = vpop.f32.mrf.mxu0
    %v3531 = vadd.f32 %v3511, %v3530
    %3532 = vdwg.mxu0
    %3533 = vmatpush.msra.mxu0 %v3508
    %3534 = vmatpush.msra.mxu0 %v3507
    %3535 = vmatpush.msra.mxu0 %v3506
    %3536 = vmatpush.msra.mxu0 %v3505
    %3537 = vmatpush.msra.mxu0 %v3504
    %3538 = vmatpush.msra.mxu0 %v3503
    %3539 = vmatpush.msra.mxu0 %v3502
    %3540 = vmatpush.msra.mxu0 %v3501
    %3541 = vmatpush.msra.mxu0 %v3500
    %3542 = vmatpush.msra.mxu0 %v3499
    %3543 = vmatpush.msra.mxu0 %v3498
    %3544 = vmatpush.msra.mxu0 %v3497
    %3545 = vmatpush.msra.mxu0 %v3496
    %3546 = vmatpush.msra.mxu0 %v3495
    %3547 = vmatpush.msra.mxu0 %v3494
    %3548 = vmatpush.msra.mxu0 %v3493
    %3549 = vmatmul.f32.gmra.mxu0 %v3476
    %v3550 = vpop.f32.mrf.mxu0
    %v3551 = vadd.f32 %v3531, %v3550
    %3552 = vdwg.mxu0
    %v3553 = vmax.f32 %v3551, 0.0
    %v3554 = vld [vmem:[#allocation38] sm:$0xff]
    %v3555 = vld [vmem:[#allocation38 + $0x8] sm:$0xff]
    %v3556 = vld [vmem:[#allocation38 + $0x10] sm:$0xff]
    %v3557 = vld [vmem:[#allocation38 + $0x18] sm:$0xff]
    %v3558 = vld [vmem:[#allocation38 + $0x20] sm:$0xff]
    %v3559 = vld [vmem:[#allocation38 + $0x28] sm:$0xff]
    %v3560 = vld [vmem:[#allocation38 + $0x30] sm:$0xff]
    %v3561 = vld [vmem:[#allocation38 + $0x38] sm:$0xff]
    %v3562 = vld [vmem:[#allocation40] sm:$0x1]
    %v3564 = vperm.slane %v3562, 0
    %v3567 = vsel %vm2684, %v3553, 0
    %3569 = vmatpush.msra.mxu0 0.0
    %3570 = vmatpush.msra.mxu0 0.0
    %3571 = vmatpush.msra.mxu0 0.0
    %3572 = vmatpush.msra.mxu0 0.0
    %3573 = vmatpush.msra.mxu0 0.0
    %3574 = vmatpush.msra.mxu0 0.0
    %3575 = vmatpush.msra.mxu0 0.0
    %3576 = vmatpush.msra.mxu0 0.0
    %3577 = vmatpush.msra.mxu0 %v3561
    %3578 = vmatpush.msra.mxu0 %v3560
    %3579 = vmatpush.msra.mxu0 %v3559
    %3580 = vmatpush.msra.mxu0 %v3558
    %3581 = vmatpush.msra.mxu0 %v3557
    %3582 = vmatpush.msra.mxu0 %v3556
    %3583 = vmatpush.msra.mxu0 %v3555
    %3584 = vmatpush.msra.mxu0 %v3554
    %3585 = vmatmul.f32.gmra.mxu0 %v3567
    %v3586 = vpop.f32.mrf.mxu0
    %v3587 = vadd.f32 %v3564, %v3586
    %3588 = vdwg.mxu0
    %v3589 = vld [vmem:[%s17] sm:$0x3]
    %vm3590 = vcmp.ne.s32.totalorder %v3589, 0
    %v3591 = vsel %vm3590, %v3587, -1000000.0
    %vm3592 = vcmask 386048
    %3593 = vst.msk [vmem:[#allocation41] sm:$0x3] %vm3592, %v3591
    // Predicated region
    $region234: #{network_forward.1} parent=1 // pred_check
      _
    $region235: #{network_forward.1} parent=1 // pred_check_branch
      %3595 = sbr.rel (0) target = $region237
    $region236: #{network_forward.1} parent=1 // pred_region
      %3597 = vsyncadd [#allocation4], 0
      %s3599 = sshll.u32 [#allocation41], 4
      %s3600 = int_to_ptr.vmem [resolvable:$true] %s3599
      %s3601 = sshll.u32 %s67, 4
      %s3602 = int_to_ptr.hbm [resolvable:$true] %s3601
      %3604 = dma.vmem_to_hbm [thread:$0]  %s3600, 32, %s3602, [#allocation4]
    $region237: #{network_forward.1} parent=1 // pred_fallthru
      _
    // Predicated region
    $region238: #{network_forward.1} parent=1 // pred_check
      _
    $region239: #{network_forward.1} parent=1 // pred_check_branch
      %3606 = sbr.rel (0) target = $region241
    $region240: #{network_forward.1} parent=1 // pred_region
      %3608 = dma.done [#allocation4], 32
    $region241: #{network_forward.1} parent=1 // pred_fallthru
      _
    %3609 = vsyncpa [#allocation3], 1
    %3610 = vsyncpa [#allocation6], 1
    %3611 = vsyncpa [#allocation9], 1
    %3612 = vsyncpa [#allocation12], 1
    %3613 = vsyncpa [#allocation15], 1
    %3614 = vsyncpa [#allocation18], 1
    %3615 = vsyncpa [#allocation21], 1
    %3616 = vsyncpa [#allocation24], 1
    %3617 = vsyncpa [#allocation27], 1
    %3618 = vsyncpa [#allocation30], 1
    %3619 = vsyncpa [#allocation33], 1
    %3620 = vsyncpa [#allocation36], 1
    %3621 = vsyncpa [#allocation39], 1
    %3622 = vsyncpa [#allocation4], 1

</llo_original>
